<compile_context>
chip_gen: v7x
topology: tpu7x:2x2x1
jax: 0.10.0
libtpu: 0.0.40
codegen_flags: <defaults>
</compile_context>

<pallas_src>
import functools

import jax
import jax.numpy as jnp
from jax.experimental import pallas as pl
from jax.experimental.pallas import tpu as pltpu

BASE_LOD = 4
NUM_LODS = 5
LODS = [2 ** L for L in range(BASE_LOD, BASE_LOD + NUM_LODS)]   # [16, 32, 64, 128, 256]
FEAT_DIM = 4
IN_FEATS = FEAT_DIM * NUM_LODS          # 20
CORNER_ROWS = 4 * FEAT_DIM * NUM_LODS   # 80
HIDDEN = 64
OUT_DIM = 3


# ---------------------------------------------------------------------------
# Pallas kernel: bilinear weighting + per-LOD partial matmuls + ReLU + Linear
# ---------------------------------------------------------------------------
def _dense_net_kernel(pts_ref, corners_ref, wa_ref, ba_ref, wb_ref, bb_ref, out_ref):
    n = corners_ref.shape[1]                       # TILE_N
    x = pts_ref[0:1, :]                            # (1, n) f32
    y = pts_ref[1:2, :]                            # (1, n) f32

    acc = jnp.zeros((HIDDEN, n), dtype=jnp.float32)
    for i, res in enumerate(LODS):
        xr = x * (res - 1)
        yr = y * (res - 1)
        x1 = jnp.floor(jnp.clip(xr, 0.0, res - 1 - 1e-05))
        y1 = jnp.floor(jnp.clip(yr, 0.0, res - 1 - 1e-05))
        x2 = jnp.clip(x1 + 1.0, 0.0, float(res - 1))
        y2 = jnp.clip(y1 + 1.0, 0.0, float(res - 1))

        w1 = (x2 - xr) * (y2 - yr)                 # (1, n)
        w2 = (xr - x1) * (y2 - yr)
        w3 = (x2 - xr) * (yr - y1)
        w4 = (xr - x1) * (yr - y1)

        base = i * 4 * FEAT_DIM                    # static sublane offset
        c0 = corners_ref[base + 0 * FEAT_DIM: base + 1 * FEAT_DIM, :].astype(jnp.float32)
        c1 = corners_ref[base + 1 * FEAT_DIM: base + 2 * FEAT_DIM, :].astype(jnp.float32)
        c2 = corners_ref[base + 2 * FEAT_DIM: base + 3 * FEAT_DIM, :].astype(jnp.float32)
        c3 = corners_ref[base + 3 * FEAT_DIM: base + 4 * FEAT_DIM, :].astype(jnp.float32)
        f = w1 * c0 + w2 * c1 + w3 * c2 + w4 * c3  # (4, n) f32

        # Partial first-layer matmul for this LOD's 4 feature channels.
        acc = acc + jnp.dot(wa_ref[i], f, preferred_element_type=jnp.float32)

    h = jnp.maximum(acc + ba_ref[...], 0.0)                                    # (64, n)
    out_ref[...] = (jnp.dot(wb_ref[...], h, preferred_element_type=jnp.float32)
                    + bb_ref[...])                                             # (3, n)


# ---------------------------------------------------------------------------
# Plain-JAX glue: channel-major corner gather, lands directly as (80, N)
# ---------------------------------------------------------------------------
def _gather_corners(code_book_t, points):
    """Returns (80, N) gathered corners; rows = lod*16 + corner*4 + feat.

    code_book_t[i] is the pre-transposed (FEAT_DIM, res*res) grid so each
    gather produces a (4, N) channel-major block directly — no N-major
    intermediate or extra transpose materialization.
    """
    px = points[:, 0]
    py = points[:, 1]
    blocks = []
    for res, grid_t in zip(LODS, code_book_t):
        x = px * (res - 1)
        y = py * (res - 1)
        x1 = jnp.floor(jnp.clip(x, 0.0, res - 1 - 1e-05)).astype(jnp.int32)
        y1 = jnp.floor(jnp.clip(y, 0.0, res - 1 - 1e-05)).astype(jnp.int32)
        x2 = jnp.clip(x1 + 1, 0, res - 1)
        y2 = jnp.clip(y1 + 1, 0, res - 1)
        for idx in (x1 + y1 * res, y1 * res + x2, y2 * res + x1, y2 * res + x2):
            blocks.append(jnp.take(grid_t, idx, axis=1))        # (4, N)
    return jnp.concatenate(blocks, axis=0)                      # (80, N)


def _choose_tile_n(n, tile_n_max):
    """Pick a lane tile: multiple of 128, <= tile_n_max, and >=2 grid steps
    whenever N allows so both v7x TensorCores get work."""
    half = -(-n // 2)
    half_aligned = ((half + 127) // 128) * 128
    return max(128, min(tile_n_max, half_aligned))


# ---------------------------------------------------------------------------
# Wrapper
# ---------------------------------------------------------------------------
@functools.partial(jax.jit, static_argnames=("tile_n_max", "corner_dtype"))
def dense_net_forward(points, code_book, wa, ba, wb, bb, *,
                      tile_n_max=16384, corner_dtype=jnp.bfloat16):
    n = points.shape[0]
    tile_n = _choose_tile_n(n, tile_n_max)
    n_pad = ((n + tile_n - 1) // tile_n) * tile_n
    pts = points.astype(jnp.float32)
    if n_pad != n:
        pts = jnp.pad(pts, ((0, n_pad - n), (0, 0)))            # (0,0) = valid coords

    pts_t = jnp.transpose(pts, (1, 0))                          # (2, n_pad) f32

    # Pre-transpose + cast codebook once (tiny, ~1.4 MB total); gather then
    # produces the lane-dense (80, n_pad) corner slab in the kernel's dtype.
    code_book_t = [jnp.transpose(g).astype(corner_dtype) for g in code_book]
    corners = _gather_corners(code_book_t, pts)                 # (80, n_pad)

    # Pre-split W1 into per-LOD (64, 4) slabs so the kernel never lane-slices.
    wa_split = jnp.transpose(wa.reshape(HIDDEN, NUM_LODS, FEAT_DIM), (1, 0, 2))  # (5,64,4)

    out = pl.pallas_call(
        _dense_net_kernel,
        out_shape=jax.ShapeDtypeStruct((OUT_DIM, n_pad), jnp.float32),
        grid=(n_pad // tile_n,),
        in_specs=[
            pl.BlockSpec((2, tile_n), lambda i: (0, i)),                      # pts (f32)
            pl.BlockSpec((CORNER_ROWS, tile_n), lambda i: (0, i)),            # corners (bf16)
            pl.BlockSpec((NUM_LODS, HIDDEN, FEAT_DIM), lambda i: (0, 0, 0)),  # W1 (resident)
            pl.BlockSpec((HIDDEN, 1), lambda i: (0, 0)),                      # b1 (resident)
            pl.BlockSpec((OUT_DIM, HIDDEN), lambda i: (0, 0)),                # W2 (resident)
            pl.BlockSpec((OUT_DIM, 1), lambda i: (0, 0)),                     # b2 (resident)
        ],
        out_specs=pl.BlockSpec((OUT_DIM, tile_n), lambda i: (0, i)),
        compiler_params=pltpu.CompilerParams(
            dimension_semantics=("parallel",),
            # Below the 64 MiB per-TC ceiling on v7x; ample for the <~20 MB
            # working set at tile_n=16384. v5e/v6e may raise tile_n_max=32768.
            vmem_limit_bytes=48 * 1024 * 1024,
        ),
    )(pts_t, corners, wa_split,
      ba.astype(jnp.float32), wb.astype(jnp.float32), bb.astype(jnp.float32))

    return jnp.transpose(out[:, :n], (1, 0))                    # (N, 3)


# Pure-JAX reference for correctness checking (mirrors the PyTorch module).
def dense_net_reference(points, code_book, wa, ba, wb, bb):
    feats = []
    px = points[:, 0]
    py = points[:, 1]
    for res, grid in zip(LODS, code_book):
        x = px * (res - 1)
        y = py * (res - 1)
        x1 = jnp.floor(jnp.clip(x, 0.0, res - 1 - 1e-05)).astype(jnp.int32)
        y1 = jnp.floor(jnp.clip(y, 0.0, res - 1 - 1e-05)).astype(jnp.int32)
        x2 = jnp.clip(x1 + 1, 0, res - 1)
        y2 = jnp.clip(y1 + 1, 0, res - 1)
        w1 = (x2 - x) * (y2 - y)
        w2 = (x - x1) * (y2 - y)
        w3 = (x2 - x) * (y - y1)
        w4 = (x - x1) * (y - y1)
        v = (w1[:, None] * grid[x1 + y1 * res] + w2[:, None] * grid[y1 * res + x2]
             + w3[:, None] * grid[y2 * res + x1] + w4[:, None] * grid[y2 * res + x2])
        feats.append(v)
    f = jnp.concatenate(feats, axis=-1)                 # (N, 20)
    h = jnp.maximum(f @ wa.T + ba[:, 0], 0.0)
    return h @ wb.T + bb[:, 0]


if __name__ == "__main__":
    key = jax.random.PRNGKey(0)
    k_pts, k_grid, k_w1, k_w2 = jax.random.split(key, 4)

    N = 1000
    points = jax.random.uniform(k_pts, (N, 2), dtype=jnp.float32)   # points in [0,1]^2

    # DenseGrid code book: normal(0, 0.1) per LOD, shape (L*L, FEAT_DIM)
    grid_keys = jax.random.split(k_grid, NUM_LODS)
    code_book = [
        0.1 * jax.random.normal(gk, (res * res, FEAT_DIM), dtype=jnp.float32)
        for gk, res in zip(grid_keys, LODS)
    ]

    # TODO(synk): MLP class is not included in the provided source; assumed
    # standard Linear(20,64) -> ReLU -> Linear(64,3).
    wa = jax.random.normal(k_w1, (HIDDEN, IN_FEATS), dtype=jnp.float32) / jnp.sqrt(IN_FEATS)
    ba = jnp.zeros((HIDDEN, 1), dtype=jnp.float32)
    wb = jax.random.normal(k_w2, (OUT_DIM, HIDDEN), dtype=jnp.float32) / jnp.sqrt(HIDDEN)
    bb = jnp.zeros((OUT_DIM, 1), dtype=jnp.float32)

    ref = dense_net_reference(points, code_book, wa, ba, wb, bb)

    # Small tile in the demo so the multi-step grid + ragged-N padding path is
    # exercised (tile_n = 512, 2 grid steps); production uses tile_n_max=16384
    # (v7x) / 32768 (v5e, v6e).

    # 1) f32-corner path: tight check of kernel structure / layout.
    out_f32 = dense_net_forward(points, code_book, wa, ba, wb, bb,
                                tile_n_max=512, corner_dtype=jnp.float32)
    out_f32 = jax.block_until_ready(out_f32)
    assert out_f32.shape == (N, OUT_DIM), out_f32.shape
    assert jnp.allclose(out_f32, ref, rtol=1e-3, atol=1e-4), \
        float(jnp.max(jnp.abs(out_f32 - ref)))

    # 2) bf16-corner path (production default): corners are ~94% of kernel HBM
    #    bytes; tolerance loosened for the ~0.4% bf16 quantization of the
    #    sigma=0.1 codebook (accumulation stays f32).
    out_bf16 = dense_net_forward(points, code_book, wa, ba, wb, bb,
                                 tile_n_max=512, corner_dtype=jnp.bfloat16)
    out_bf16 = jax.block_until_ready(out_bf16)
    assert out_bf16.shape == (N, OUT_DIM), out_bf16.shape
    assert jnp.allclose(out_bf16, ref, rtol=2e-2, atol=1e-2), \
        float(jnp.max(jnp.abs(out_bf16 - ref)))

    print("KERNEL_OK")
</pallas_src>

<mosaic_0001>
module attributes {stable_mosaic.version = 11 : i64} {
  func.func @_dense_net_kernel(%arg0: i32, %arg1: memref<2x512xf32, #tpu.memory_space<vmem>>, %arg2: memref<80x512xf32, #tpu.memory_space<vmem>>, %arg3: memref<5x64x4xf32, #tpu.memory_space<vmem>>, %arg4: memref<64x1xf32, #tpu.memory_space<vmem>>, %arg5: memref<3x64xf32, #tpu.memory_space<vmem>>, %arg6: memref<3x1xf32, #tpu.memory_space<vmem>>, %arg7: memref<3x512xf32, #tpu.memory_space<vmem>>) attributes {dimension_semantics = [#tpu.dimension_semantics<parallel>], iteration_bounds = array<i64: 2>, scalar_prefetch = 0 : i64, scratch_operands = 0 : i64, tpu.core_type = #tpu.core_type<tc>, window_params = [{transform_indices = @transform_0, window_bounds = array<i64: 2, 512>}, {transform_indices = @transform_1, window_bounds = array<i64: 80, 512>}, {pipeline_mode = #tpu.pipeline_mode<synchronous>, transform_indices = @transform_2, window_bounds = array<i64: 5, 64, 4>}, {pipeline_mode = #tpu.pipeline_mode<synchronous>, transform_indices = @transform_3, window_bounds = array<i64: 64, 1>}, {pipeline_mode = #tpu.pipeline_mode<synchronous>, transform_indices = @transform_4, window_bounds = array<i64: 3, 64>}, {pipeline_mode = #tpu.pipeline_mode<synchronous>, transform_indices = @transform_5, window_bounds = array<i64: 3, 1>}, {transform_indices = @transform_6, window_bounds = array<i64: 3, 512>}]} {
    %c0 = arith.constant 0 : index
    %c0_0 = arith.constant 0 : index
    %0 = vector.load %arg1[%c0, %c0_0] : memref<2x512xf32, #tpu.memory_space<vmem>>, vector<1x512xf32>
    %c1 = arith.constant 1 : index
    %c0_1 = arith.constant 0 : index
    %1 = vector.load %arg1[%c1, %c0_1] : memref<2x512xf32, #tpu.memory_space<vmem>>, vector<1x512xf32>
    %cst = arith.constant 0.000000e+00 : f32
    %2 = vector.broadcast %cst : f32 to vector<64x512xf32>
    %cst_2 = arith.constant 1.500000e+01 : f32
    %3 = vector.broadcast %cst_2 : f32 to vector<1x512xf32>
    %4 = arith.mulf %0, %3 : vector<1x512xf32>
    %cst_3 = arith.constant 1.500000e+01 : f32
    %5 = vector.broadcast %cst_3 : f32 to vector<1x512xf32>
    %6 = arith.mulf %1, %5 : vector<1x512xf32>
    %cst_4 = arith.constant 0.000000e+00 : f32
    %cst_5 = arith.constant 14.9999905 : f32
    %7 = vector.broadcast %cst_4 : f32 to vector<1x512xf32>
    %8 = arith.maximumf %7, %4 : vector<1x512xf32>
    %9 = vector.broadcast %cst_5 : f32 to vector<1x512xf32>
    %10 = arith.minimumf %9, %8 : vector<1x512xf32>
    %11 = math.floor %10 : vector<1x512xf32>
    %cst_6 = arith.constant 0.000000e+00 : f32
    %cst_7 = arith.constant 14.9999905 : f32
    %12 = vector.broadcast %cst_6 : f32 to vector<1x512xf32>
    %13 = arith.maximumf %12, %6 : vector<1x512xf32>
    %14 = vector.broadcast %cst_7 : f32 to vector<1x512xf32>
    %15 = arith.minimumf %14, %13 : vector<1x512xf32>
    %16 = math.floor %15 : vector<1x512xf32>
    %cst_8 = arith.constant 1.000000e+00 : f32
    %17 = vector.broadcast %cst_8 : f32 to vector<1x512xf32>
    %18 = arith.addf %11, %17 : vector<1x512xf32>
    %cst_9 = arith.constant 0.000000e+00 : f32
    %cst_10 = arith.constant 1.500000e+01 : f32
    %19 = vector.broadcast %cst_9 : f32 to vector<1x512xf32>
    %20 = arith.maximumf %19, %18 : vector<1x512xf32>
    %21 = vector.broadcast %cst_10 : f32 to vector<1x512xf32>
    %22 = arith.minimumf %21, %20 : vector<1x512xf32>
    %cst_11 = arith.constant 1.000000e+00 : f32
    %23 = vector.broadcast %cst_11 : f32 to vector<1x512xf32>
    %24 = arith.addf %16, %23 : vector<1x512xf32>
    %cst_12 = arith.constant 0.000000e+00 : f32
    %cst_13 = arith.constant 1.500000e+01 : f32
    %25 = vector.broadcast %cst_12 : f32 to vector<1x512xf32>
    %26 = arith.maximumf %25, %24 : vector<1x512xf32>
    %27 = vector.broadcast %cst_13 : f32 to vector<1x512xf32>
    %28 = arith.minimumf %27, %26 : vector<1x512xf32>
    %29 = arith.subf %22, %4 : vector<1x512xf32>
    %30 = arith.subf %28, %6 : vector<1x512xf32>
    %31 = arith.mulf %29, %30 : vector<1x512xf32>
    %32 = arith.subf %4, %11 : vector<1x512xf32>
    %33 = arith.subf %28, %6 : vector<1x512xf32>
    %34 = arith.mulf %32, %33 : vector<1x512xf32>
    %35 = arith.subf %22, %4 : vector<1x512xf32>
    %36 = arith.subf %6, %16 : vector<1x512xf32>
    %37 = arith.mulf %35, %36 : vector<1x512xf32>
    %38 = arith.subf %4, %11 : vector<1x512xf32>
    %39 = arith.subf %6, %16 : vector<1x512xf32>
    %40 = arith.mulf %38, %39 : vector<1x512xf32>
    %c0_14 = arith.constant 0 : index
    %c0_15 = arith.constant 0 : index
    %41 = vector.load %arg2[%c0_14, %c0_15] : memref<80x512xf32, #tpu.memory_space<vmem>>, vector<4x512xf32>
    %c4 = arith.constant 4 : index
    %c0_16 = arith.constant 0 : index
    %42 = vector.load %arg2[%c4, %c0_16] : memref<80x512xf32, #tpu.memory_space<vmem>>, vector<4x512xf32>
    %c8 = arith.constant 8 : index
    %c0_17 = arith.constant 0 : index
    %43 = vector.load %arg2[%c8, %c0_17] : memref<80x512xf32, #tpu.memory_space<vmem>>, vector<4x512xf32>
    %c12 = arith.constant 12 : index
    %c0_18 = arith.constant 0 : index
    %44 = vector.load %arg2[%c12, %c0_18] : memref<80x512xf32, #tpu.memory_space<vmem>>, vector<4x512xf32>
    %45 = vector.broadcast %31 : vector<1x512xf32> to vector<4x512xf32>
    %46 = arith.mulf %45, %41 : vector<4x512xf32>
    %47 = vector.broadcast %34 : vector<1x512xf32> to vector<4x512xf32>
    %48 = arith.mulf %47, %42 : vector<4x512xf32>
    %49 = arith.addf %46, %48 : vector<4x512xf32>
    %50 = vector.broadcast %37 : vector<1x512xf32> to vector<4x512xf32>
    %51 = arith.mulf %50, %43 : vector<4x512xf32>
    %52 = arith.addf %49, %51 : vector<4x512xf32>
    %53 = vector.broadcast %40 : vector<1x512xf32> to vector<4x512xf32>
    %54 = arith.mulf %53, %44 : vector<4x512xf32>
    %55 = arith.addf %52, %54 : vector<4x512xf32>
    %c0_19 = arith.constant 0 : index
    %c0_20 = arith.constant 0 : index
    %c0_21 = arith.constant 0 : index
    %56 = vector.load %arg3[%c0_19, %c0_20, %c0_21] : memref<5x64x4xf32, #tpu.memory_space<vmem>>, vector<1x64x4xf32>
    %57 = vector.shape_cast %56 : vector<1x64x4xf32> to vector<64x4xf32>
    %cst_22 = arith.constant dense<0.000000e+00> : vector<64x512xf32>
    %58 = tpu.matmul %57, %55, %cst_22 {dimension_numbers = #tpu.dot_dimension_numbers<[1], [0], [0], [1], [0, 0, 1, 1], [], []>} : vector<64x4xf32>, vector<4x512xf32>, vector<64x512xf32> -> vector<64x512xf32>
    %59 = arith.addf %2, %58 : vector<64x512xf32>
    %cst_23 = arith.constant 3.100000e+01 : f32
    %60 = vector.broadcast %cst_23 : f32 to vector<1x512xf32>
    %61 = arith.mulf %0, %60 : vector<1x512xf32>
    %cst_24 = arith.constant 3.100000e+01 : f32
    %62 = vector.broadcast %cst_24 : f32 to vector<1x512xf32>
    %63 = arith.mulf %1, %62 : vector<1x512xf32>
    %cst_25 = arith.constant 0.000000e+00 : f32
    %cst_26 = arith.constant 30.9999905 : f32
    %64 = vector.broadcast %cst_25 : f32 to vector<1x512xf32>
    %65 = arith.maximumf %64, %61 : vector<1x512xf32>
    %66 = vector.broadcast %cst_26 : f32 to vector<1x512xf32>
    %67 = arith.minimumf %66, %65 : vector<1x512xf32>
    %68 = math.floor %67 : vector<1x512xf32>
    %cst_27 = arith.constant 0.000000e+00 : f32
    %cst_28 = arith.constant 30.9999905 : f32
    %69 = vector.broadcast %cst_27 : f32 to vector<1x512xf32>
    %70 = arith.maximumf %69, %63 : vector<1x512xf32>
    %71 = vector.broadcast %cst_28 : f32 to vector<1x512xf32>
    %72 = arith.minimumf %71, %70 : vector<1x512xf32>
    %73 = math.floor %72 : vector<1x512xf32>
    %cst_29 = arith.constant 1.000000e+00 : f32
    %74 = vector.broadcast %cst_29 : f32 to vector<1x512xf32>
    %75 = arith.addf %68, %74 : vector<1x512xf32>
    %cst_30 = arith.constant 0.000000e+00 : f32
    %cst_31 = arith.constant 3.100000e+01 : f32
    %76 = vector.broadcast %cst_30 : f32 to vector<1x512xf32>
    %77 = arith.maximumf %76, %75 : vector<1x512xf32>
    %78 = vector.broadcast %cst_31 : f32 to vector<1x512xf32>
    %79 = arith.minimumf %78, %77 : vector<1x512xf32>
    %cst_32 = arith.constant 1.000000e+00 : f32
    %80 = vector.broadcast %cst_32 : f32 to vector<1x512xf32>
    %81 = arith.addf %73, %80 : vector<1x512xf32>
    %cst_33 = arith.constant 0.000000e+00 : f32
    %cst_34 = arith.constant 3.100000e+01 : f32
    %82 = vector.broadcast %cst_33 : f32 to vector<1x512xf32>
    %83 = arith.maximumf %82, %81 : vector<1x512xf32>
    %84 = vector.broadcast %cst_34 : f32 to vector<1x512xf32>
    %85 = arith.minimumf %84, %83 : vector<1x512xf32>
    %86 = arith.subf %79, %61 : vector<1x512xf32>
    %87 = arith.subf %85, %63 : vector<1x512xf32>
    %88 = arith.mulf %86, %87 : vector<1x512xf32>
    %89 = arith.subf %61, %68 : vector<1x512xf32>
    %90 = arith.subf %85, %63 : vector<1x512xf32>
    %91 = arith.mulf %89, %90 : vector<1x512xf32>
    %92 = arith.subf %79, %61 : vector<1x512xf32>
    %93 = arith.subf %63, %73 : vector<1x512xf32>
    %94 = arith.mulf %92, %93 : vector<1x512xf32>
    %95 = arith.subf %61, %68 : vector<1x512xf32>
    %96 = arith.subf %63, %73 : vector<1x512xf32>
    %97 = arith.mulf %95, %96 : vector<1x512xf32>
    %c16 = arith.constant 16 : index
    %c0_35 = arith.constant 0 : index
    %98 = vector.load %arg2[%c16, %c0_35] : memref<80x512xf32, #tpu.memory_space<vmem>>, vector<4x512xf32>
    %c20 = arith.constant 20 : index
    %c0_36 = arith.constant 0 : index
    %99 = vector.load %arg2[%c20, %c0_36] : memref<80x512xf32, #tpu.memory_space<vmem>>, vector<4x512xf32>
    %c24 = arith.constant 24 : index
    %c0_37 = arith.constant 0 : index
    %100 = vector.load %arg2[%c24, %c0_37] : memref<80x512xf32, #tpu.memory_space<vmem>>, vector<4x512xf32>
    %c28 = arith.constant 28 : index
    %c0_38 = arith.constant 0 : index
    %101 = vector.load %arg2[%c28, %c0_38] : memref<80x512xf32, #tpu.memory_space<vmem>>, vector<4x512xf32>
    %102 = vector.broadcast %88 : vector<1x512xf32> to vector<4x512xf32>
    %103 = arith.mulf %102, %98 : vector<4x512xf32>
    %104 = vector.broadcast %91 : vector<1x512xf32> to vector<4x512xf32>
    %105 = arith.mulf %104, %99 : vector<4x512xf32>
    %106 = arith.addf %103, %105 : vector<4x512xf32>
    %107 = vector.broadcast %94 : vector<1x512xf32> to vector<4x512xf32>
    %108 = arith.mulf %107, %100 : vector<4x512xf32>
    %109 = arith.addf %106, %108 : vector<4x512xf32>
    %110 = vector.broadcast %97 : vector<1x512xf32> to vector<4x512xf32>
    %111 = arith.mulf %110, %101 : vector<4x512xf32>
    %112 = arith.addf %109, %111 : vector<4x512xf32>
    %c1_39 = arith.constant 1 : index
    %c0_40 = arith.constant 0 : index
    %c0_41 = arith.constant 0 : index
    %113 = vector.load %arg3[%c1_39, %c0_40, %c0_41] : memref<5x64x4xf32, #tpu.memory_space<vmem>>, vector<1x64x4xf32>
    %114 = vector.shape_cast %113 : vector<1x64x4xf32> to vector<64x4xf32>
    %cst_42 = arith.constant dense<0.000000e+00> : vector<64x512xf32>
    %115 = tpu.matmul %114, %112, %cst_42 {dimension_numbers = #tpu.dot_dimension_numbers<[1], [0], [0], [1], [0, 0, 1, 1], [], []>} : vector<64x4xf32>, vector<4x512xf32>, vector<64x512xf32> -> vector<64x512xf32>
    %116 = arith.addf %59, %115 : vector<64x512xf32>
    %cst_43 = arith.constant 6.300000e+01 : f32
    %117 = vector.broadcast %cst_43 : f32 to vector<1x512xf32>
    %118 = arith.mulf %0, %117 : vector<1x512xf32>
    %cst_44 = arith.constant 6.300000e+01 : f32
    %119 = vector.broadcast %cst_44 : f32 to vector<1x512xf32>
    %120 = arith.mulf %1, %119 : vector<1x512xf32>
    %cst_45 = arith.constant 0.000000e+00 : f32
    %cst_46 = arith.constant 62.9999886 : f32
    %121 = vector.broadcast %cst_45 : f32 to vector<1x512xf32>
    %122 = arith.maximumf %121, %118 : vector<1x512xf32>
    %123 = vector.broadcast %cst_46 : f32 to vector<1x512xf32>
    %124 = arith.minimumf %123, %122 : vector<1x512xf32>
    %125 = math.floor %124 : vector<1x512xf32>
    %cst_47 = arith.constant 0.000000e+00 : f32
    %cst_48 = arith.constant 62.9999886 : f32
    %126 = vector.broadcast %cst_47 : f32 to vector<1x512xf32>
    %127 = arith.maximumf %126, %120 : vector<1x512xf32>
    %128 = vector.broadcast %cst_48 : f32 to vector<1x512xf32>
    %129 = arith.minimumf %128, %127 : vector<1x512xf32>
    %130 = math.floor %129 : vector<1x512xf32>
    %cst_49 = arith.constant 1.000000e+00 : f32
    %131 = vector.broadcast %cst_49 : f32 to vector<1x512xf32>
    %132 = arith.addf %125, %131 : vector<1x512xf32>
    %cst_50 = arith.constant 0.000000e+00 : f32
    %cst_51 = arith.constant 6.300000e+01 : f32
    %133 = vector.broadcast %cst_50 : f32 to vector<1x512xf32>
    %134 = arith.maximumf %133, %132 : vector<1x512xf32>
    %135 = vector.broadcast %cst_51 : f32 to vector<1x512xf32>
    %136 = arith.minimumf %135, %134 : vector<1x512xf32>
    %cst_52 = arith.constant 1.000000e+00 : f32
    %137 = vector.broadcast %cst_52 : f32 to vector<1x512xf32>
    %138 = arith.addf %130, %137 : vector<1x512xf32>
    %cst_53 = arith.constant 0.000000e+00 : f32
    %cst_54 = arith.constant 6.300000e+01 : f32
    %139 = vector.broadcast %cst_53 : f32 to vector<1x512xf32>
    %140 = arith.maximumf %139, %138 : vector<1x512xf32>
    %141 = vector.broadcast %cst_54 : f32 to vector<1x512xf32>
    %142 = arith.minimumf %141, %140 : vector<1x512xf32>
    %143 = arith.subf %136, %118 : vector<1x512xf32>
    %144 = arith.subf %142, %120 : vector<1x512xf32>
    %145 = arith.mulf %143, %144 : vector<1x512xf32>
    %146 = arith.subf %118, %125 : vector<1x512xf32>
    %147 = arith.subf %142, %120 : vector<1x512xf32>
    %148 = arith.mulf %146, %147 : vector<1x512xf32>
    %149 = arith.subf %136, %118 : vector<1x512xf32>
    %150 = arith.subf %120, %130 : vector<1x512xf32>
    %151 = arith.mulf %149, %150 : vector<1x512xf32>
    %152 = arith.subf %118, %125 : vector<1x512xf32>
    %153 = arith.subf %120, %130 : vector<1x512xf32>
    %154 = arith.mulf %152, %153 : vector<1x512xf32>
    %c32 = arith.constant 32 : index
    %c0_55 = arith.constant 0 : index
    %155 = vector.load %arg2[%c32, %c0_55] : memref<80x512xf32, #tpu.memory_space<vmem>>, vector<4x512xf32>
    %c36 = arith.constant 36 : index
    %c0_56 = arith.constant 0 : index
    %156 = vector.load %arg2[%c36, %c0_56] : memref<80x512xf32, #tpu.memory_space<vmem>>, vector<4x512xf32>
    %c40 = arith.constant 40 : index
    %c0_57 = arith.constant 0 : index
    %157 = vector.load %arg2[%c40, %c0_57] : memref<80x512xf32, #tpu.memory_space<vmem>>, vector<4x512xf32>
    %c44 = arith.constant 44 : index
    %c0_58 = arith.constant 0 : index
    %158 = vector.load %arg2[%c44, %c0_58] : memref<80x512xf32, #tpu.memory_space<vmem>>, vector<4x512xf32>
    %159 = vector.broadcast %145 : vector<1x512xf32> to vector<4x512xf32>
    %160 = arith.mulf %159, %155 : vector<4x512xf32>
    %161 = vector.broadcast %148 : vector<1x512xf32> to vector<4x512xf32>
    %162 = arith.mulf %161, %156 : vector<4x512xf32>
    %163 = arith.addf %160, %162 : vector<4x512xf32>
    %164 = vector.broadcast %151 : vector<1x512xf32> to vector<4x512xf32>
    %165 = arith.mulf %164, %157 : vector<4x512xf32>
    %166 = arith.addf %163, %165 : vector<4x512xf32>
    %167 = vector.broadcast %154 : vector<1x512xf32> to vector<4x512xf32>
    %168 = arith.mulf %167, %158 : vector<4x512xf32>
    %169 = arith.addf %166, %168 : vector<4x512xf32>
    %c2 = arith.constant 2 : index
    %c0_59 = arith.constant 0 : index
    %c0_60 = arith.constant 0 : index
    %170 = vector.load %arg3[%c2, %c0_59, %c0_60] : memref<5x64x4xf32, #tpu.memory_space<vmem>>, vector<1x64x4xf32>
    %171 = vector.shape_cast %170 : vector<1x64x4xf32> to vector<64x4xf32>
    %cst_61 = arith.constant dense<0.000000e+00> : vector<64x512xf32>
    %172 = tpu.matmul %171, %169, %cst_61 {dimension_numbers = #tpu.dot_dimension_numbers<[1], [0], [0], [1], [0, 0, 1, 1], [], []>} : vector<64x4xf32>, vector<4x512xf32>, vector<64x512xf32> -> vector<64x512xf32>
    %173 = arith.addf %116, %172 : vector<64x512xf32>
    %cst_62 = arith.constant 1.270000e+02 : f32
    %174 = vector.broadcast %cst_62 : f32 to vector<1x512xf32>
    %175 = arith.mulf %0, %174 : vector<1x512xf32>
    %cst_63 = arith.constant 1.270000e+02 : f32
    %176 = vector.broadcast %cst_63 : f32 to vector<1x512xf32>
    %177 = arith.mulf %1, %176 : vector<1x512xf32>
    %cst_64 = arith.constant 0.000000e+00 : f32
    %cst_65 = arith.constant 126.999992 : f32
    %178 = vector.broadcast %cst_64 : f32 to vector<1x512xf32>
    %179 = arith.maximumf %178, %175 : vector<1x512xf32>
    %180 = vector.broadcast %cst_65 : f32 to vector<1x512xf32>
    %181 = arith.minimumf %180, %179 : vector<1x512xf32>
    %182 = math.floor %181 : vector<1x512xf32>
    %cst_66 = arith.constant 0.000000e+00 : f32
    %cst_67 = arith.constant 126.999992 : f32
    %183 = vector.broadcast %cst_66 : f32 to vector<1x512xf32>
    %184 = arith.maximumf %183, %177 : vector<1x512xf32>
    %185 = vector.broadcast %cst_67 : f32 to vector<1x512xf32>
    %186 = arith.minimumf %185, %184 : vector<1x512xf32>
    %187 = math.floor %186 : vector<1x512xf32>
    %cst_68 = arith.constant 1.000000e+00 : f32
    %188 = vector.broadcast %cst_68 : f32 to vector<1x512xf32>
    %189 = arith.addf %182, %188 : vector<1x512xf32>
    %cst_69 = arith.constant 0.000000e+00 : f32
    %cst_70 = arith.constant 1.270000e+02 : f32
    %190 = vector.broadcast %cst_69 : f32 to vector<1x512xf32>
    %191 = arith.maximumf %190, %189 : vector<1x512xf32>
    %192 = vector.broadcast %cst_70 : f32 to vector<1x512xf32>
    %193 = arith.minimumf %192, %191 : vector<1x512xf32>
    %cst_71 = arith.constant 1.000000e+00 : f32
    %194 = vector.broadcast %cst_71 : f32 to vector<1x512xf32>
    %195 = arith.addf %187, %194 : vector<1x512xf32>
    %cst_72 = arith.constant 0.000000e+00 : f32
    %cst_73 = arith.constant 1.270000e+02 : f32
    %196 = vector.broadcast %cst_72 : f32 to vector<1x512xf32>
    %197 = arith.maximumf %196, %195 : vector<1x512xf32>
    %198 = vector.broadcast %cst_73 : f32 to vector<1x512xf32>
    %199 = arith.minimumf %198, %197 : vector<1x512xf32>
    %200 = arith.subf %193, %175 : vector<1x512xf32>
    %201 = arith.subf %199, %177 : vector<1x512xf32>
    %202 = arith.mulf %200, %201 : vector<1x512xf32>
    %203 = arith.subf %175, %182 : vector<1x512xf32>
    %204 = arith.subf %199, %177 : vector<1x512xf32>
    %205 = arith.mulf %203, %204 : vector<1x512xf32>
    %206 = arith.subf %193, %175 : vector<1x512xf32>
    %207 = arith.subf %177, %187 : vector<1x512xf32>
    %208 = arith.mulf %206, %207 : vector<1x512xf32>
    %209 = arith.subf %175, %182 : vector<1x512xf32>
    %210 = arith.subf %177, %187 : vector<1x512xf32>
    %211 = arith.mulf %209, %210 : vector<1x512xf32>
    %c48 = arith.constant 48 : index
    %c0_74 = arith.constant 0 : index
    %212 = vector.load %arg2[%c48, %c0_74] : memref<80x512xf32, #tpu.memory_space<vmem>>, vector<4x512xf32>
    %c52 = arith.constant 52 : index
    %c0_75 = arith.constant 0 : index
    %213 = vector.load %arg2[%c52, %c0_75] : memref<80x512xf32, #tpu.memory_space<vmem>>, vector<4x512xf32>
    %c56 = arith.constant 56 : index
    %c0_76 = arith.constant 0 : index
    %214 = vector.load %arg2[%c56, %c0_76] : memref<80x512xf32, #tpu.memory_space<vmem>>, vector<4x512xf32>
    %c60 = arith.constant 60 : index
    %c0_77 = arith.constant 0 : index
    %215 = vector.load %arg2[%c60, %c0_77] : memref<80x512xf32, #tpu.memory_space<vmem>>, vector<4x512xf32>
    %216 = vector.broadcast %202 : vector<1x512xf32> to vector<4x512xf32>
    %217 = arith.mulf %216, %212 : vector<4x512xf32>
    %218 = vector.broadcast %205 : vector<1x512xf32> to vector<4x512xf32>
    %219 = arith.mulf %218, %213 : vector<4x512xf32>
    %220 = arith.addf %217, %219 : vector<4x512xf32>
    %221 = vector.broadcast %208 : vector<1x512xf32> to vector<4x512xf32>
    %222 = arith.mulf %221, %214 : vector<4x512xf32>
    %223 = arith.addf %220, %222 : vector<4x512xf32>
    %224 = vector.broadcast %211 : vector<1x512xf32> to vector<4x512xf32>
    %225 = arith.mulf %224, %215 : vector<4x512xf32>
    %226 = arith.addf %223, %225 : vector<4x512xf32>
    %c3 = arith.constant 3 : index
    %c0_78 = arith.constant 0 : index
    %c0_79 = arith.constant 0 : index
    %227 = vector.load %arg3[%c3, %c0_78, %c0_79] : memref<5x64x4xf32, #tpu.memory_space<vmem>>, vector<1x64x4xf32>
    %228 = vector.shape_cast %227 : vector<1x64x4xf32> to vector<64x4xf32>
    %cst_80 = arith.constant dense<0.000000e+00> : vector<64x512xf32>
    %229 = tpu.matmul %228, %226, %cst_80 {dimension_numbers = #tpu.dot_dimension_numbers<[1], [0], [0], [1], [0, 0, 1, 1], [], []>} : vector<64x4xf32>, vector<4x512xf32>, vector<64x512xf32> -> vector<64x512xf32>
    %230 = arith.addf %173, %229 : vector<64x512xf32>
    %cst_81 = arith.constant 2.550000e+02 : f32
    %231 = vector.broadcast %cst_81 : f32 to vector<1x512xf32>
    %232 = arith.mulf %0, %231 : vector<1x512xf32>
    %cst_82 = arith.constant 2.550000e+02 : f32
    %233 = vector.broadcast %cst_82 : f32 to vector<1x512xf32>
    %234 = arith.mulf %1, %233 : vector<1x512xf32>
    %cst_83 = arith.constant 0.000000e+00 : f32
    %cst_84 = arith.constant 254.999985 : f32
    %235 = vector.broadcast %cst_83 : f32 to vector<1x512xf32>
    %236 = arith.maximumf %235, %232 : vector<1x512xf32>
    %237 = vector.broadcast %cst_84 : f32 to vector<1x512xf32>
    %238 = arith.minimumf %237, %236 : vector<1x512xf32>
    %239 = math.floor %238 : vector<1x512xf32>
    %cst_85 = arith.constant 0.000000e+00 : f32
    %cst_86 = arith.constant 254.999985 : f32
    %240 = vector.broadcast %cst_85 : f32 to vector<1x512xf32>
    %241 = arith.maximumf %240, %234 : vector<1x512xf32>
    %242 = vector.broadcast %cst_86 : f32 to vector<1x512xf32>
    %243 = arith.minimumf %242, %241 : vector<1x512xf32>
    %244 = math.floor %243 : vector<1x512xf32>
    %cst_87 = arith.constant 1.000000e+00 : f32
    %245 = vector.broadcast %cst_87 : f32 to vector<1x512xf32>
    %246 = arith.addf %239, %245 : vector<1x512xf32>
    %cst_88 = arith.constant 0.000000e+00 : f32
    %cst_89 = arith.constant 2.550000e+02 : f32
    %247 = vector.broadcast %cst_88 : f32 to vector<1x512xf32>
    %248 = arith.maximumf %247, %246 : vector<1x512xf32>
    %249 = vector.broadcast %cst_89 : f32 to vector<1x512xf32>
    %250 = arith.minimumf %249, %248 : vector<1x512xf32>
    %cst_90 = arith.constant 1.000000e+00 : f32
    %251 = vector.broadcast %cst_90 : f32 to vector<1x512xf32>
    %252 = arith.addf %244, %251 : vector<1x512xf32>
    %cst_91 = arith.constant 0.000000e+00 : f32
    %cst_92 = arith.constant 2.550000e+02 : f32
    %253 = vector.broadcast %cst_91 : f32 to vector<1x512xf32>
    %254 = arith.maximumf %253, %252 : vector<1x512xf32>
    %255 = vector.broadcast %cst_92 : f32 to vector<1x512xf32>
    %256 = arith.minimumf %255, %254 : vector<1x512xf32>
    %257 = arith.subf %250, %232 : vector<1x512xf32>
    %258 = arith.subf %256, %234 : vector<1x512xf32>
    %259 = arith.mulf %257, %258 : vector<1x512xf32>
    %260 = arith.subf %232, %239 : vector<1x512xf32>
    %261 = arith.subf %256, %234 : vector<1x512xf32>
    %262 = arith.mulf %260, %261 : vector<1x512xf32>
    %263 = arith.subf %250, %232 : vector<1x512xf32>
    %264 = arith.subf %234, %244 : vector<1x512xf32>
    %265 = arith.mulf %263, %264 : vector<1x512xf32>
    %266 = arith.subf %232, %239 : vector<1x512xf32>
    %267 = arith.subf %234, %244 : vector<1x512xf32>
    %268 = arith.mulf %266, %267 : vector<1x512xf32>
    %c64 = arith.constant 64 : index
    %c0_93 = arith.constant 0 : index
    %269 = vector.load %arg2[%c64, %c0_93] : memref<80x512xf32, #tpu.memory_space<vmem>>, vector<4x512xf32>
    %c68 = arith.constant 68 : index
    %c0_94 = arith.constant 0 : index
    %270 = vector.load %arg2[%c68, %c0_94] : memref<80x512xf32, #tpu.memory_space<vmem>>, vector<4x512xf32>
    %c72 = arith.constant 72 : index
    %c0_95 = arith.constant 0 : index
    %271 = vector.load %arg2[%c72, %c0_95] : memref<80x512xf32, #tpu.memory_space<vmem>>, vector<4x512xf32>
    %c76 = arith.constant 76 : index
    %c0_96 = arith.constant 0 : index
    %272 = vector.load %arg2[%c76, %c0_96] : memref<80x512xf32, #tpu.memory_space<vmem>>, vector<4x512xf32>
    %273 = vector.broadcast %259 : vector<1x512xf32> to vector<4x512xf32>
    %274 = arith.mulf %273, %269 : vector<4x512xf32>
    %275 = vector.broadcast %262 : vector<1x512xf32> to vector<4x512xf32>
    %276 = arith.mulf %275, %270 : vector<4x512xf32>
    %277 = arith.addf %274, %276 : vector<4x512xf32>
    %278 = vector.broadcast %265 : vector<1x512xf32> to vector<4x512xf32>
    %279 = arith.mulf %278, %271 : vector<4x512xf32>
    %280 = arith.addf %277, %279 : vector<4x512xf32>
    %281 = vector.broadcast %268 : vector<1x512xf32> to vector<4x512xf32>
    %282 = arith.mulf %281, %272 : vector<4x512xf32>
    %283 = arith.addf %280, %282 : vector<4x512xf32>
    %c4_97 = arith.constant 4 : index
    %c0_98 = arith.constant 0 : index
    %c0_99 = arith.constant 0 : index
    %284 = vector.load %arg3[%c4_97, %c0_98, %c0_99] : memref<5x64x4xf32, #tpu.memory_space<vmem>>, vector<1x64x4xf32>
    %285 = vector.shape_cast %284 : vector<1x64x4xf32> to vector<64x4xf32>
    %cst_100 = arith.constant dense<0.000000e+00> : vector<64x512xf32>
    %286 = tpu.matmul %285, %283, %cst_100 {dimension_numbers = #tpu.dot_dimension_numbers<[1], [0], [0], [1], [0, 0, 1, 1], [], []>} : vector<64x4xf32>, vector<4x512xf32>, vector<64x512xf32> -> vector<64x512xf32>
    %287 = arith.addf %230, %286 : vector<64x512xf32>
    %c0_101 = arith.constant 0 : index
    %c0_102 = arith.constant 0 : index
    %288 = vector.load %arg4[%c0_101, %c0_102] : memref<64x1xf32, #tpu.memory_space<vmem>>, vector<64x1xf32>
    %289 = vector.broadcast %288 : vector<64x1xf32> to vector<64x512xf32>
    %290 = arith.addf %287, %289 : vector<64x512xf32>
    %cst_103 = arith.constant 0.000000e+00 : f32
    %291 = vector.broadcast %cst_103 : f32 to vector<64x512xf32>
    %292 = arith.maximumf %290, %291 : vector<64x512xf32>
    %c0_104 = arith.constant 0 : index
    %c0_105 = arith.constant 0 : index
    %293 = vector.load %arg5[%c0_104, %c0_105] : memref<3x64xf32, #tpu.memory_space<vmem>>, vector<3x64xf32>
    %cst_106 = arith.constant dense<0.000000e+00> : vector<3x512xf32>
    %294 = tpu.matmul %293, %292, %cst_106 {dimension_numbers = #tpu.dot_dimension_numbers<[1], [0], [0], [1], [0, 0, 1, 1], [], []>} : vector<3x64xf32>, vector<64x512xf32>, vector<3x512xf32> -> vector<3x512xf32>
    %c0_107 = arith.constant 0 : index
    %c0_108 = arith.constant 0 : index
    %295 = vector.load %arg6[%c0_107, %c0_108] : memref<3x1xf32, #tpu.memory_space<vmem>>, vector<3x1xf32>
    %296 = vector.broadcast %295 : vector<3x1xf32> to vector<3x512xf32>
    %297 = arith.addf %294, %296 : vector<3x512xf32>
    %c0_109 = arith.constant 0 : index
    %c0_110 = arith.constant 0 : index
    %298 = vector.load %arg7[%c0_109, %c0_110] : memref<3x512xf32, #tpu.memory_space<vmem>>, vector<3x512xf32>
    tpu.vector_store %arg7[%c0_109, %c0_110], %297 {strides = array<i32>} : memref<3x512xf32, #tpu.memory_space<vmem>>, vector<3x512xf32>,
    return
  }
  func.func @transform_0(%arg0: i32) -> (i32, i32) {
    %c0_i32 = arith.constant 0 : i32
    %c0_i32_0 = arith.constant 0 : i32
    return %c0_i32, %arg0 : i32, i32
  }
  func.func @transform_1(%arg0: i32) -> (i32, i32) {
    %c0_i32 = arith.constant 0 : i32
    %c0_i32_0 = arith.constant 0 : i32
    return %c0_i32, %arg0 : i32, i32
  }
  func.func @transform_2(%arg0: i32) -> (i32, i32, i32) {
    %c0_i32 = arith.constant 0 : i32
    %c0_i32_0 = arith.constant 0 : i32
    %c0_i32_1 = arith.constant 0 : i32
    %c0_i32_2 = arith.constant 0 : i32
    return %c0_i32, %c0_i32_0, %c0_i32_1 : i32, i32, i32
  }
  func.func @transform_3(%arg0: i32) -> (i32, i32) {
    %c0_i32 = arith.constant 0 : i32
    %c0_i32_0 = arith.constant 0 : i32
    %c0_i32_1 = arith.constant 0 : i32
    return %c0_i32, %c0_i32_0 : i32, i32
  }
  func.func @transform_4(%arg0: i32) -> (i32, i32) {
    %c0_i32 = arith.constant 0 : i32
    %c0_i32_0 = arith.constant 0 : i32
    %c0_i32_1 = arith.constant 0 : i32
    return %c0_i32, %c0_i32_0 : i32, i32
  }
  func.func @transform_5(%arg0: i32) -> (i32, i32) {
    %c0_i32 = arith.constant 0 : i32
    %c0_i32_0 = arith.constant 0 : i32
    %c0_i32_1 = arith.constant 0 : i32
    return %c0_i32, %c0_i32_0 : i32, i32
  }
  func.func @transform_6(%arg0: i32) -> (i32, i32) {
    %c0_i32 = arith.constant 0 : i32
    %c0_i32_0 = arith.constant 0 : i32
    return %c0_i32, %arg0 : i32, i32
  }
}

</mosaic_0001>

<llo_original>
// kernel: dense_net_forward.1
$region0: #{dense_net_forward.1}
  #allocation0 [shape = 'u32[]', space=smem, size = 0x4, offset = 0x4, fixed_abs, tag = 'smem constant byte address 0x4 - core index']
  #allocation1 [shape = 'u32[144,128]{1,0:T(1,128)}', space=vmem, size = 0x12000, scoped, tag = 'internal scratch']
  %s0 = inlined_call_operand.vmem [shape: f32[2,1024], index: 0, kind: input, shape index: {}]
  %s1 = inlined_call_operand.vmem [shape: f32[80,1024], index: 1, kind: input, shape index: {}]
  %s2 = inlined_call_operand.vmem [shape: f32[5,64,4], index: 2, kind: input, shape index: {}]
  %s3 = inlined_call_operand.vmem [shape: f32[64,1], index: 3, kind: input, shape index: {}]
  %s4 = inlined_call_operand.vmem [shape: f32[3,64], index: 4, kind: input, shape index: {}]
  %s5 = inlined_call_operand.vmem [shape: f32[3,1], index: 5, kind: input, shape index: {}]
  %s6 = inlined_call_operand.vmem [shape: f32[3,1024], index: 6, kind: output, shape index: {}]
  %s7 = sld [smem:[#allocation0]]
  $region80: #{dense_net_forward.1} parent=0
    _
  %s9 = ssub.s32 1, %s7
  %s10 = scalar_select 0, %s9, %s7
  $region1: #{dense_net_forward.1} parent=0
    #allocation2 [shape = 'u8[327680]{0}', space=vmem, size = 0x50000, scoped, tag = 'input window, operand 1']
    loop: start=0, step=1, limit=4
    $region2: #{dense_net_forward.1} parent=1 // loop_pre_header
      _
    $region3: #{dense_net_forward.1} parent=1 // loop_header
      %s12 = sphi 0, %s16
      %p13 = scmp.ge.s32.totalorder %s12, 4
      %s22 = sphi 0, %s24
      %s25 = sphi 0, %s22
      %s26 = sphi 0, %s25
      %s42 = sphi 0, %s26
      %s48 = sphi 0, %s50
      %s51 = sphi 0, %s48
      %s52 = sphi 0, %s51
      %s68 = sphi 0, %s52
      %s72 = sphi 0, %s72
      %s74 = sphi 0, %s72
      %s75 = sphi 0, %s74
      %s89 = sphi 0, %s75
      %s93 = sphi 0, %s93
      %s95 = sphi 0, %s93
      %s96 = sphi 0, %s95
      %s110 = sphi 0, %s96
      %s114 = sphi 0, %s114
      %s116 = sphi 0, %s114
      %s117 = sphi 0, %s116
      %s131 = sphi 0, %s117
      %s135 = sphi 0, %s135
      %s137 = sphi 0, %s135
      %s138 = sphi 0, %s137
      %s152 = sphi 0, %s138
      %s158 = sphi 0, %s160
      %s161 = sphi 0, %s158
      %s162 = sphi 0, %s161
      %s178 = sphi 0, %s162
    $region4: #{dense_net_forward.1} parent=1 // loop_header_branch
      %15 = sbr.rel (%p13) target = $region8
    $region5: #{dense_net_forward.1} parent=1 // loop_body
      %s17 = ssub.s32 %s12, 1
      %s18 = ssub.s32 %s12, 2
      %s19 = sadd.s32 %s12, 1
      %s20 = ssub.s32 %s12, %s19
      %p21 = scmp.eq.s32.totalorder %s20, 0
      %s23 = sadd.s32 %s22, 1
      %s24 = scalar_select %p21, %s22, %s23
      %p27 = pneg %p21
      %p28 = scmp.eq.s32.totalorder %s12, 1
      %p29 = por %p27, %p28
      %p30 = scmp.ne.s32.totalorder %s22, %s25
      %p31 = scmp.eq.s32.totalorder %s12, 0
      %p32 = por %p30, %p31
      %p33 = scmp.ne.s32.totalorder %s22, %s25
      %p34 = scmp.eq.s32.totalorder %s17, 1
      %p35 = por %p33, %p34
      %p36 = scmp.ne.s32.totalorder %s25, %s26
      %p37 = scmp.eq.s32.totalorder %s17, 0
      %p38 = por %p36, %p37
      %p39 = scmp.ne.s32.totalorder %s25, %s26
      %p40 = scmp.eq.s32.totalorder %s18, 1
      %p41 = por %p39, %p40
      %p43 = scmp.ne.s32.totalorder %s26, %s42
      %p44 = scmp.eq.s32.totalorder %s18, 0
      %p45 = por %p43, %p44
      %s46 = ssub.s32 %s12, %s19
      %p47 = scmp.eq.s32.totalorder %s46, 0
      %s49 = sadd.s32 %s48, 1
      %s50 = scalar_select %p47, %s48, %s49
      %p53 = pneg %p47
      %p54 = scmp.eq.s32.totalorder %s12, 1
      %p55 = por %p53, %p54
      %p56 = scmp.ne.s32.totalorder %s48, %s51
      %p57 = scmp.eq.s32.totalorder %s12, 0
      %p58 = por %p56, %p57
      %p59 = scmp.ne.s32.totalorder %s48, %s51
      %p60 = scmp.eq.s32.totalorder %s17, 1
      %p61 = por %p59, %p60
      %p62 = scmp.ne.s32.totalorder %s51, %s52
      %p63 = scmp.eq.s32.totalorder %s17, 0
      %p64 = por %p62, %p63
      %p65 = scmp.ne.s32.totalorder %s51, %s52
      %p66 = scmp.eq.s32.totalorder %s18, 1
      %p67 = por %p65, %p66
      %p69 = scmp.ne.s32.totalorder %s52, %s68
      %p70 = scmp.eq.s32.totalorder %s18, 0
      %p71 = por %p69, %p70
      %s73 = sadd.s32 %s72, 1
      %p76 = scmp.eq.s32.totalorder %s12, 1
      %p77 = scmp.ne.s32.totalorder %s72, %s74
      %p78 = scmp.eq.s32.totalorder %s12, 0
      %p79 = por %p77, %p78
      %p80 = scmp.ne.s32.totalorder %s72, %s74
      %p81 = scmp.eq.s32.totalorder %s17, 1
      %p82 = por %p80, %p81
      %p83 = scmp.ne.s32.totalorder %s74, %s75
      %p84 = scmp.eq.s32.totalorder %s17, 0
      %p85 = por %p83, %p84
      %p86 = scmp.ne.s32.totalorder %s74, %s75
      %p87 = scmp.eq.s32.totalorder %s18, 1
      %p88 = por %p86, %p87
      %p90 = scmp.ne.s32.totalorder %s75, %s89
      %p91 = scmp.eq.s32.totalorder %s18, 0
      %p92 = por %p90, %p91
      %s94 = sadd.s32 %s93, 1
      %p97 = scmp.eq.s32.totalorder %s12, 1
      %p98 = scmp.ne.s32.totalorder %s93, %s95
      %p99 = scmp.eq.s32.totalorder %s12, 0
      %p100 = por %p98, %p99
      %p101 = scmp.ne.s32.totalorder %s93, %s95
      %p102 = scmp.eq.s32.totalorder %s17, 1
      %p103 = por %p101, %p102
      %p104 = scmp.ne.s32.totalorder %s95, %s96
      %p105 = scmp.eq.s32.totalorder %s17, 0
      %p106 = por %p104, %p105
      %p107 = scmp.ne.s32.totalorder %s95, %s96
      %p108 = scmp.eq.s32.totalorder %s18, 1
      %p109 = por %p107, %p108
      %p111 = scmp.ne.s32.totalorder %s96, %s110
      %p112 = scmp.eq.s32.totalorder %s18, 0
      %p113 = por %p111, %p112
      %s115 = sadd.s32 %s114, 1
      %p118 = scmp.eq.s32.totalorder %s12, 1
      %p119 = scmp.ne.s32.totalorder %s114, %s116
      %p120 = scmp.eq.s32.totalorder %s12, 0
      %p121 = por %p119, %p120
      %p122 = scmp.ne.s32.totalorder %s114, %s116
      %p123 = scmp.eq.s32.totalorder %s17, 1
      %p124 = por %p122, %p123
      %p125 = scmp.ne.s32.totalorder %s116, %s117
      %p126 = scmp.eq.s32.totalorder %s17, 0
      %p127 = por %p125, %p126
      %p128 = scmp.ne.s32.totalorder %s116, %s117
      %p129 = scmp.eq.s32.totalorder %s18, 1
      %p130 = por %p128, %p129
      %p132 = scmp.ne.s32.totalorder %s117, %s131
      %p133 = scmp.eq.s32.totalorder %s18, 0
      %p134 = por %p132, %p133
      %s136 = sadd.s32 %s135, 1
      %p139 = scmp.eq.s32.totalorder %s12, 1
      %p140 = scmp.ne.s32.totalorder %s135, %s137
      %p141 = scmp.eq.s32.totalorder %s12, 0
      %p142 = por %p140, %p141
      %p143 = scmp.ne.s32.totalorder %s135, %s137
      %p144 = scmp.eq.s32.totalorder %s17, 1
      %p145 = por %p143, %p144
      %p146 = scmp.ne.s32.totalorder %s137, %s138
      %p147 = scmp.eq.s32.totalorder %s17, 0
      %p148 = por %p146, %p147
      %p149 = scmp.ne.s32.totalorder %s137, %s138
      %p150 = scmp.eq.s32.totalorder %s18, 1
      %p151 = por %p149, %p150
      %p153 = scmp.ne.s32.totalorder %s138, %s152
      %p154 = scmp.eq.s32.totalorder %s18, 0
      %p155 = por %p153, %p154
      %s156 = ssub.s32 %s12, %s19
      %p157 = scmp.eq.s32.totalorder %s156, 0
      %s159 = sadd.s32 %s158, 1
      %s160 = scalar_select %p157, %s158, %s159
      %p163 = pneg %p157
      %p164 = scmp.eq.s32.totalorder %s12, 1
      %p165 = por %p163, %p164
      %p166 = scmp.ne.s32.totalorder %s158, %s161
      %p167 = scmp.eq.s32.totalorder %s12, 0
      %p168 = por %p166, %p167
      %p169 = scmp.ne.s32.totalorder %s158, %s161
      %p170 = scmp.eq.s32.totalorder %s17, 1
      %p171 = por %p169, %p170
      %p172 = scmp.ne.s32.totalorder %s161, %s162
      %p173 = scmp.eq.s32.totalorder %s17, 0
      %p174 = por %p172, %p173
      %p175 = scmp.ne.s32.totalorder %s161, %s162
      %p176 = scmp.eq.s32.totalorder %s18, 1
      %p177 = por %p175, %p176
      %p179 = scmp.ne.s32.totalorder %s162, %s178
      %p180 = scmp.eq.s32.totalorder %s18, 0
      %p181 = por %p179, %p180
      %p182 = scmp.le.s32.totalorder 1, %s12
      %p183 = scmp.lt.s32.totalorder %s12, 3
      %p184 = pnand %p182, %p183
      %p185 = pneg %p184
      // Predicated region
      $region9: #{dense_net_forward.1} parent=5 // pred_check
        _
      $region10: #{dense_net_forward.1} parent=5 // pred_check_branch
        %187 = sbr.rel (%p184) target = $region12
      $region11: #{dense_net_forward.1} parent=5 // pred_region
        %s188 = ssub.s32 %s12, 1
        // Predicated region
        $region13: #{dense_net_forward.1} parent=11 // pred_check
          %p189 = pneg %p85
        $region14: #{dense_net_forward.1} parent=11 // pred_check_branch
          %191 = sbr.rel (%p189) target = $region16
        $region15: #{dense_net_forward.1} parent=11 // pred_region
          _
        $region16: #{dense_net_forward.1} parent=11 // pred_fallthru
          _
        // Predicated region
        $region17: #{dense_net_forward.1} parent=11 // pred_check
          %p192 = pneg %p106
        $region18: #{dense_net_forward.1} parent=11 // pred_check_branch
          %194 = sbr.rel (%p192) target = $region20
        $region19: #{dense_net_forward.1} parent=11 // pred_region
          _
        $region20: #{dense_net_forward.1} parent=11 // pred_fallthru
          _
        // Predicated region
        $region21: #{dense_net_forward.1} parent=11 // pred_check
          %p195 = pneg %p127
        $region22: #{dense_net_forward.1} parent=11 // pred_check_branch
          %197 = sbr.rel (%p195) target = $region24
        $region23: #{dense_net_forward.1} parent=11 // pred_region
          _
        $region24: #{dense_net_forward.1} parent=11 // pred_fallthru
          _
        // Predicated region
        $region25: #{dense_net_forward.1} parent=11 // pred_check
          %p198 = pneg %p148
        $region26: #{dense_net_forward.1} parent=11 // pred_check_branch
          %200 = sbr.rel (%p198) target = $region28
        $region27: #{dense_net_forward.1} parent=11 // pred_region
          _
        $region28: #{dense_net_forward.1} parent=11 // pred_fallthru
          _
      $region12: #{dense_net_forward.1} parent=5 // pred_fallthru
        _
      %p201 = scmp.lt.s32.totalorder %s12, 2
      // Predicated region
      $region29: #{dense_net_forward.1} parent=5 // pred_check
        %p202 = pneg %p201
      $region30: #{dense_net_forward.1} parent=5 // pred_check_branch
        %204 = sbr.rel (%p202) target = $region32
      $region31: #{dense_net_forward.1} parent=5 // pred_region
        // Predicated region
        $region33: #{dense_net_forward.1} parent=31 // pred_check
          %p205 = pneg %p32
        $region34: #{dense_net_forward.1} parent=31 // pred_check_branch
          %207 = sbr.rel (%p205) target = $region36
        $region35: #{dense_net_forward.1} parent=31 // pred_region
          %s208 = smul.u32 4, %s12
          %p209 = scmp.lt.s32.totalorder %s208, 7
          %s210 = scalar_select %p209, %s208, 7
          %s211 = smul.addr %s210, 2
          %s212 = scalar_lea.vmem %s0, %s211
          %s213 = smul.u32 4, %s12
        $region36: #{dense_net_forward.1} parent=31 // pred_fallthru
          _
        // Predicated region
        $region37: #{dense_net_forward.1} parent=31 // pred_check
          %p214 = pneg %p58
        $region38: #{dense_net_forward.1} parent=31 // pred_check_branch
          %216 = sbr.rel (%p214) target = $region40
        $region39: #{dense_net_forward.1} parent=31 // pred_region
          %s217 = sand.u32 %s48, 1
          %s218 = sand.u32 %s48, 1
          %s219 = smul.addr %s218, 320
          %s220 = scalar_lea.vmem [#allocation2], %s219
          %s221 = smul.u32 4, %s12
          %s222 = smul.addr %s221, 8
          %s223 = scalar_lea.vmem %s1, %s222
          // Predicated region
          $region41: #{dense_net_forward.1} parent=39 // pred_check
            _
          $region42: #{dense_net_forward.1} parent=39 // pred_check_branch
            %225 = sbr.rel (0) target = $region44
          $region43: #{dense_net_forward.1} parent=39 // pred_region
            // Predicated region
            $region45: #{dense_net_forward.1} parent=43 // pred_check
              _
            $region46: #{dense_net_forward.1} parent=43 // pred_check_branch
              %227 = sbr.rel (0) target = $region48
            $region47: #{dense_net_forward.1} parent=43 // pred_region
              loop: start=0, step=1, limit=1
              $region49: #{dense_net_forward.1} parent=47 // loop_pre_header
                _
              $region50: #{dense_net_forward.1} parent=47 // loop_header
                %s229 = sphi 0, %s233
                %p230 = scmp.ge.s32.totalorder %s229, 1
                %s234 = sphi %s223, %s223
                %s235 = sphi %s220, %s220
              $region51: #{dense_net_forward.1} parent=47 // loop_header_branch
                %232 = sbr.rel (%p230) target = $region55
              $region52: #{dense_net_forward.1} parent=47 // loop_body
                %v236 = vld [vmem:[%s234] sm:$0xff]
                %237 = vst [vmem:[%s235] sm:$0xff] %v236
                %v238 = vld [vmem:[%s234 + $0x8] sm:$0xff]
                %239 = vst [vmem:[%s235 + $0x8] sm:$0xff] %v238
                %v240 = vld [vmem:[%s234 + $0x10] sm:$0xff]
                %241 = vst [vmem:[%s235 + $0x10] sm:$0xff] %v240
                %v242 = vld [vmem:[%s234 + $0x18] sm:$0xff]
                %243 = vst [vmem:[%s235 + $0x18] sm:$0xff] %v242
                %v244 = vld [vmem:[%s234 + $0x40] sm:$0xff]
                %245 = vst [vmem:[%s235 + $0x20] sm:$0xff] %v244
                %v246 = vld [vmem:[%s234 + $0x48] sm:$0xff]
                %247 = vst [vmem:[%s235 + $0x28] sm:$0xff] %v246
                %v248 = vld [vmem:[%s234 + $0x50] sm:$0xff]
                %249 = vst [vmem:[%s235 + $0x30] sm:$0xff] %v248
                %v250 = vld [vmem:[%s234 + $0x58] sm:$0xff]
                %251 = vst [vmem:[%s235 + $0x38] sm:$0xff] %v250
                %v252 = vld [vmem:[%s234 + $0x80] sm:$0xff]
                %253 = vst [vmem:[%s235 + $0x40] sm:$0xff] %v252
                %v254 = vld [vmem:[%s234 + $0x88] sm:$0xff]
                %255 = vst [vmem:[%s235 + $0x48] sm:$0xff] %v254
                %v256 = vld [vmem:[%s234 + $0x90] sm:$0xff]
                %257 = vst [vmem:[%s235 + $0x50] sm:$0xff] %v256
                %v258 = vld [vmem:[%s234 + $0x98] sm:$0xff]
                %259 = vst [vmem:[%s235 + $0x58] sm:$0xff] %v258
                %v260 = vld [vmem:[%s234 + $0xc0] sm:$0xff]
                %261 = vst [vmem:[%s235 + $0x60] sm:$0xff] %v260
                %v262 = vld [vmem:[%s234 + $0xc8] sm:$0xff]
                %263 = vst [vmem:[%s235 + $0x68] sm:$0xff] %v262
                %v264 = vld [vmem:[%s234 + $0xd0] sm:$0xff]
                %265 = vst [vmem:[%s235 + $0x70] sm:$0xff] %v264
                %v266 = vld [vmem:[%s234 + $0xd8] sm:$0xff]
                %267 = vst [vmem:[%s235 + $0x78] sm:$0xff] %v266
                %v268 = vld [vmem:[%s234 + $0x100] sm:$0xff]
                %269 = vst [vmem:[%s235 + $0x80] sm:$0xff] %v268
                %v270 = vld [vmem:[%s234 + $0x108] sm:$0xff]
                %271 = vst [vmem:[%s235 + $0x88] sm:$0xff] %v270
                %v272 = vld [vmem:[%s234 + $0x110] sm:$0xff]
                %273 = vst [vmem:[%s235 + $0x90] sm:$0xff] %v272
                %v274 = vld [vmem:[%s234 + $0x118] sm:$0xff]
                %275 = vst [vmem:[%s235 + $0x98] sm:$0xff] %v274
                %v276 = vld [vmem:[%s234 + $0x140] sm:$0xff]
                %277 = vst [vmem:[%s235 + $0xa0] sm:$0xff] %v276
                %v278 = vld [vmem:[%s234 + $0x148] sm:$0xff]
                %279 = vst [vmem:[%s235 + $0xa8] sm:$0xff] %v278
                %v280 = vld [vmem:[%s234 + $0x150] sm:$0xff]
                %281 = vst [vmem:[%s235 + $0xb0] sm:$0xff] %v280
                %v282 = vld [vmem:[%s234 + $0x158] sm:$0xff]
                %283 = vst [vmem:[%s235 + $0xb8] sm:$0xff] %v282
                %v284 = vld [vmem:[%s234 + $0x180] sm:$0xff]
                %285 = vst [vmem:[%s235 + $0xc0] sm:$0xff] %v284
                %v286 = vld [vmem:[%s234 + $0x188] sm:$0xff]
                %287 = vst [vmem:[%s235 + $0xc8] sm:$0xff] %v286
                %v288 = vld [vmem:[%s234 + $0x190] sm:$0xff]
                %289 = vst [vmem:[%s235 + $0xd0] sm:$0xff] %v288
                %v290 = vld [vmem:[%s234 + $0x198] sm:$0xff]
                %291 = vst [vmem:[%s235 + $0xd8] sm:$0xff] %v290
                %v292 = vld [vmem:[%s234 + $0x1c0] sm:$0xff]
                %293 = vst [vmem:[%s235 + $0xe0] sm:$0xff] %v292
                %v294 = vld [vmem:[%s234 + $0x1c8] sm:$0xff]
                %295 = vst [vmem:[%s235 + $0xe8] sm:$0xff] %v294
                %v296 = vld [vmem:[%s234 + $0x1d0] sm:$0xff]
                %297 = vst [vmem:[%s235 + $0xf0] sm:$0xff] %v296
                %v298 = vld [vmem:[%s234 + $0x1d8] sm:$0xff]
                %299 = vst [vmem:[%s235 + $0xf8] sm:$0xff] %v298
                %v300 = vld [vmem:[%s234 + $0x200] sm:$0xff]
                %301 = vst [vmem:[%s235 + $0x100] sm:$0xff] %v300
                %v302 = vld [vmem:[%s234 + $0x208] sm:$0xff]
                %303 = vst [vmem:[%s235 + $0x108] sm:$0xff] %v302
                %v304 = vld [vmem:[%s234 + $0x210] sm:$0xff]
                %305 = vst [vmem:[%s235 + $0x110] sm:$0xff] %v304
                %v306 = vld [vmem:[%s234 + $0x218] sm:$0xff]
                %307 = vst [vmem:[%s235 + $0x118] sm:$0xff] %v306
                %v308 = vld [vmem:[%s234 + $0x240] sm:$0xff]
                %309 = vst [vmem:[%s235 + $0x120] sm:$0xff] %v308
                %v310 = vld [vmem:[%s234 + $0x248] sm:$0xff]
                %311 = vst [vmem:[%s235 + $0x128] sm:$0xff] %v310
                %v312 = vld [vmem:[%s234 + $0x250] sm:$0xff]
                %313 = vst [vmem:[%s235 + $0x130] sm:$0xff] %v312
                %v314 = vld [vmem:[%s234 + $0x258] sm:$0xff]
                %315 = vst [vmem:[%s235 + $0x138] sm:$0xff] %v314
              $region53: #{dense_net_forward.1} parent=47 // loop_footer
                %s233 = sadd.s32 1, %s229
              $region54: #{dense_net_forward.1} parent=47 // loop_footer_branch
                %228 = sbr.rel target = $region50
              $region55: #{dense_net_forward.1} parent=47 // loop_exit
                _
            $region48: #{dense_net_forward.1} parent=43 // pred_fallthru
              _
            // Predicated region
            $region56: #{dense_net_forward.1} parent=43 // pred_check
              _
            $region57: #{dense_net_forward.1} parent=43 // pred_check_branch
              %317 = sbr.rel target = $region59
            $region58: #{dense_net_forward.1} parent=43 // pred_region
              _
            $region59: #{dense_net_forward.1} parent=43 // pred_fallthru
              _
          $region44: #{dense_net_forward.1} parent=39 // pred_fallthru
            _
          %318 = vnop
        $region40: #{dense_net_forward.1} parent=31 // pred_fallthru
          _
      $region32: #{dense_net_forward.1} parent=5 // pred_fallthru
        _
      %p319 = scmp.le.s32.totalorder 1, %s12
      %p320 = scmp.lt.s32.totalorder %s12, 3
      %p321 = pnand %p319, %p320
      %p322 = pneg %p321
      // Predicated region
      $region60: #{dense_net_forward.1} parent=5 // pred_check
        _
      $region61: #{dense_net_forward.1} parent=5 // pred_check_branch
        %324 = sbr.rel (%p321) target = $region63
      $region62: #{dense_net_forward.1} parent=5 // pred_region
        %s325 = ssub.s32 %s12, 1
        %s326 = sand.u32 %s51, 1
        %s327 = sand.u32 %s51, 1
        %s328 = smul.addr %s327, 320
        %s329 = scalar_lea.vmem [#allocation2], %s328
        // Predicated region
        $region64: #{dense_net_forward.1} parent=62 // pred_check
          %p330 = pneg %p64
        $region65: #{dense_net_forward.1} parent=62 // pred_check_branch
          %332 = sbr.rel (%p330) target = $region67
        $region66: #{dense_net_forward.1} parent=62 // pred_region
          _
        $region67: #{dense_net_forward.1} parent=62 // pred_fallthru
          _
        %s333 = smul.u32 4, %s17
        %p334 = scmp.lt.s32.totalorder %s333, 7
        %s335 = scalar_select %p334, %s333, 7
        %s336 = smul.addr %s335, 2
        %s337 = scalar_lea.vmem %s0, %s336
        %p338 = pneg %p38
        %p339 = pneg %p35
        %s340 = sand.u32 %s51, 1
        %s341 = sand.u32 %s51, 1
        %s342 = smul.addr %s341, 320
        %s343 = scalar_lea.vmem [#allocation2], %s342
        %p344 = pneg %p64
        %p345 = pneg %p61
        %p346 = pneg %p85
        %p347 = pneg %p82
        %p348 = pneg %p106
        %p349 = pneg %p103
        %p350 = pneg %p127
        %p351 = pneg %p124
        %p352 = pneg %p148
        %p353 = pneg %p145
        %p354 = pneg %p174
        %p355 = pneg %p171
        %s356 = smul.u32 4, %s17
        %p357 = scmp.lt.s32.totalorder %s356, 7
        %s358 = scalar_select %p357, %s356, 7
        %s359 = smul.addr %s358, 4
        %s360 = scalar_lea.vmem %s6, %s359
        %s361 = smul.u32 4, %s17
        %p362 = scmp.lt.s32.totalorder %s361, 7
        %s363 = scalar_select %p362, %s361, 7
        %s364 = smul.addr %s363, 2
        %s365 = scalar_lea.vmem %s0, %s364
        %s366 = smul.u32 4, %s17
        %s367 = smul.u32 4, %s17
        %s368 = smul.u32 4, %s17
        %p369 = scmp.lt.s32.totalorder %s368, 7
        %s370 = scalar_select %p369, %s368, 7
        %s371 = smul.addr %s370, 4
        %s372 = scalar_lea.vmem %s6, %s371
        %s373 = smul.u32 4, %s17
        %v374 = vld [vmem:[%s365] ss:$2 sm:$0xf]
        %s375 = scalar_lea.vmem %s365, 1
        %v376 = vld [vmem:[%s375] ss:$2 sm:$0xf]
        %v377 = vmul.f32 %v374, 15.0
        %v378 = vmul.f32 %v376, 15.0
        %v379 = vmax.f32 %v377, 0.0
        %v380 = vmin.f32 %v379, 14.99999
        %v381 = vfloor.f32 %v380
        %v382 = vmax.f32 %v378, 0.0
        %v383 = vmin.f32 %v382, 14.99999
        %v384 = vfloor.f32 %v383
        %v385 = vadd.f32 %v381, 1.0
        %v386 = vmax.f32 %v385, 0.0
        %v387 = vmin.f32 %v386, 15.0
        %v388 = vadd.f32 %v384, 1.0
        %v389 = vmax.f32 %v388, 0.0
        %v390 = vmin.f32 %v389, 15.0
        %v391 = vsub.f32 %v387, %v377
        %v392 = vsub.f32 %v390, %v378
        %v393 = vmul.f32 %v391, %v392
        %v394 = vsub.f32 %v377, %v381
        %v395 = vmul.f32 %v394, %v392
        %v396 = vsub.f32 %v378, %v384
        %v397 = vmul.f32 %v391, %v396
        %v398 = vmul.f32 %v394, %v396
        %v399 = vld [vmem:[%s329] sm:$0xf]
        %v400 = vld [vmem:[%s329 + $0x8] sm:$0xf]
        %v401 = vld [vmem:[%s329 + $0x10] sm:$0xf]
        %v402 = vld [vmem:[%s329 + $0x18] sm:$0xf]
        %v403 = vld [vmem:[%s329] sm:$0xf0]
        %v404 = vld [vmem:[%s329 + $0x8] sm:$0xf0]
        %v405 = vld [vmem:[%s329 + $0x10] sm:$0xf0]
        %v406 = vld [vmem:[%s329 + $0x18] sm:$0xf0]
        %v407 = vld [vmem:[%s329 + $0x20] sm:$0xf]
        %v408 = vld [vmem:[%s329 + $0x28] sm:$0xf]
        %v409 = vld [vmem:[%s329 + $0x30] sm:$0xf]
        %v410 = vld [vmem:[%s329 + $0x38] sm:$0xf]
        %v411 = vld [vmem:[%s329 + $0x20] sm:$0xf0]
        %v412 = vld [vmem:[%s329 + $0x28] sm:$0xf0]
        %v413 = vld [vmem:[%s329 + $0x30] sm:$0xf0]
        %v414 = vld [vmem:[%s329 + $0x38] sm:$0xf0]
        %v416 = vlaneseq
        %v417 = vshrl.u32 %v416, 7
        %v418 = vsub.s32 0, %v417
        %v419 = vrot.slane %v393, %v418
        %v420 = vlaneseq
        %v421 = vshrl.u32 %v420, 7
        %v422 = vsub.s32 1, %v421
        %v423 = vrot.slane %v393, %v422
        %v424 = vlaneseq
        %v425 = vshrl.u32 %v424, 7
        %v426 = vsub.s32 2, %v425
        %v427 = vrot.slane %v393, %v426
        %v428 = vlaneseq
        %v429 = vshrl.u32 %v428, 7
        %v430 = vsub.s32 3, %v429
        %v431 = vrot.slane %v393, %v430
        %v436 = vmul.f32 %v419, %v399
        %v437 = vmul.f32 %v423, %v400
        %v438 = vmul.f32 %v427, %v401
        %v439 = vmul.f32 %v431, %v402
        %v441 = vlaneseq
        %v442 = vshrl.u32 %v441, 7
        %v443 = vsub.s32 0, %v442
        %v444 = vrot.slane %v395, %v443
        %v445 = vlaneseq
        %v446 = vshrl.u32 %v445, 7
        %v447 = vsub.s32 1, %v446
        %v448 = vrot.slane %v395, %v447
        %v449 = vlaneseq
        %v450 = vshrl.u32 %v449, 7
        %v451 = vsub.s32 2, %v450
        %v452 = vrot.slane %v395, %v451
        %v453 = vlaneseq
        %v454 = vshrl.u32 %v453, 7
        %v455 = vsub.s32 3, %v454
        %v456 = vrot.slane %v395, %v455
        %v461 = vmul.f32 %v444, %v403
        %v462 = vmul.f32 %v448, %v404
        %v463 = vmul.f32 %v452, %v405
        %v464 = vmul.f32 %v456, %v406
        %v469 = vrot.slane %v461, 4
        %v470 = vrot.slane %v462, 4
        %v471 = vrot.slane %v463, 4
        %v472 = vrot.slane %v464, 4
        %v477 = vadd.f32 %v436, %v469
        %v478 = vadd.f32 %v437, %v470
        %v479 = vadd.f32 %v438, %v471
        %v480 = vadd.f32 %v439, %v472
        %v482 = vlaneseq
        %v483 = vshrl.u32 %v482, 7
        %v484 = vsub.s32 0, %v483
        %v485 = vrot.slane %v397, %v484
        %v486 = vlaneseq
        %v487 = vshrl.u32 %v486, 7
        %v488 = vsub.s32 1, %v487
        %v489 = vrot.slane %v397, %v488
        %v490 = vlaneseq
        %v491 = vshrl.u32 %v490, 7
        %v492 = vsub.s32 2, %v491
        %v493 = vrot.slane %v397, %v492
        %v494 = vlaneseq
        %v495 = vshrl.u32 %v494, 7
        %v496 = vsub.s32 3, %v495
        %v497 = vrot.slane %v397, %v496
        %v502 = vmul.f32 %v485, %v407
        %v503 = vmul.f32 %v489, %v408
        %v504 = vmul.f32 %v493, %v409
        %v505 = vmul.f32 %v497, %v410
        %v506 = vadd.f32 %v477, %v502
        %v507 = vadd.f32 %v478, %v503
        %v508 = vadd.f32 %v479, %v504
        %v509 = vadd.f32 %v480, %v505
        %v511 = vlaneseq
        %v512 = vshrl.u32 %v511, 7
        %v513 = vsub.s32 0, %v512
        %v514 = vrot.slane %v398, %v513
        %v515 = vlaneseq
        %v516 = vshrl.u32 %v515, 7
        %v517 = vsub.s32 1, %v516
        %v518 = vrot.slane %v398, %v517
        %v519 = vlaneseq
        %v520 = vshrl.u32 %v519, 7
        %v521 = vsub.s32 2, %v520
        %v522 = vrot.slane %v398, %v521
        %v523 = vlaneseq
        %v524 = vshrl.u32 %v523, 7
        %v525 = vsub.s32 3, %v524
        %v526 = vrot.slane %v398, %v525
        %v531 = vmul.f32 %v514, %v411
        %v532 = vmul.f32 %v518, %v412
        %v533 = vmul.f32 %v522, %v413
        %v534 = vmul.f32 %v526, %v414
        %v539 = vrot.slane %v531, 4
        %v540 = vrot.slane %v532, 4
        %v541 = vrot.slane %v533, 4
        %v542 = vrot.slane %v534, 4
        %v547 = vadd.f32 %v506, %v539
        %v548 = vadd.f32 %v507, %v540
        %v549 = vadd.f32 %v508, %v541
        %v550 = vadd.f32 %v509, %v542
        %v551 = vld [vmem:[%s2] sm:$0xff]
        %v552 = vld [vmem:[%s2 + $0x8] sm:$0xff]
        %v553 = vld [vmem:[%s2 + $0x10] sm:$0xff]
        %v554 = vld [vmem:[%s2 + $0x18] sm:$0xff]
        %v555 = vld [vmem:[%s2 + $0x20] sm:$0xff]
        %v556 = vld [vmem:[%s2 + $0x28] sm:$0xff]
        %v557 = vld [vmem:[%s2 + $0x30] sm:$0xff]
        %v558 = vld [vmem:[%s2 + $0x38] sm:$0xff]
        %v559 = vmul.f32 %v374, 31.0
        %v560 = vmul.f32 %v376, 31.0
        %v561 = vmax.f32 %v559, 0.0
        %v562 = vmin.f32 %v561, 30.99999
        %v563 = vfloor.f32 %v562
        %v564 = vmax.f32 %v560, 0.0
        %v565 = vmin.f32 %v564, 30.99999
        %v566 = vfloor.f32 %v565
        %v567 = vadd.f32 %v563, 1.0
        %v568 = vmax.f32 %v567, 0.0
        %v569 = vmin.f32 %v568, 31.0
        %v570 = vadd.f32 %v566, 1.0
        %v571 = vmax.f32 %v570, 0.0
        %v572 = vmin.f32 %v571, 31.0
        %v573 = vsub.f32 %v569, %v559
        %v574 = vsub.f32 %v572, %v560
        %v575 = vmul.f32 %v573, %v574
        %v576 = vsub.f32 %v559, %v563
        %v577 = vmul.f32 %v576, %v574
        %v578 = vsub.f32 %v560, %v566
        %v579 = vmul.f32 %v573, %v578
        %v580 = vmul.f32 %v576, %v578
        %v581 = vld [vmem:[%s329 + $0x40] sm:$0xf]
        %v582 = vld [vmem:[%s329 + $0x48] sm:$0xf]
        %v583 = vld [vmem:[%s329 + $0x50] sm:$0xf]
        %v584 = vld [vmem:[%s329 + $0x58] sm:$0xf]
        %v585 = vld [vmem:[%s329 + $0x40] sm:$0xf0]
        %v586 = vld [vmem:[%s329 + $0x48] sm:$0xf0]
        %v587 = vld [vmem:[%s329 + $0x50] sm:$0xf0]
        %v588 = vld [vmem:[%s329 + $0x58] sm:$0xf0]
        %v589 = vld [vmem:[%s329 + $0x60] sm:$0xf]
        %v590 = vld [vmem:[%s329 + $0x68] sm:$0xf]
        %v591 = vld [vmem:[%s329 + $0x70] sm:$0xf]
        %v592 = vld [vmem:[%s329 + $0x78] sm:$0xf]
        %v593 = vld [vmem:[%s329 + $0x60] sm:$0xf0]
        %v594 = vld [vmem:[%s329 + $0x68] sm:$0xf0]
        %v595 = vld [vmem:[%s329 + $0x70] sm:$0xf0]
        %v596 = vld [vmem:[%s329 + $0x78] sm:$0xf0]
        %v598 = vlaneseq
        %v599 = vshrl.u32 %v598, 7
        %v600 = vsub.s32 0, %v599
        %v601 = vrot.slane %v575, %v600
        %v602 = vlaneseq
        %v603 = vshrl.u32 %v602, 7
        %v604 = vsub.s32 1, %v603
        %v605 = vrot.slane %v575, %v604
        %v606 = vlaneseq
        %v607 = vshrl.u32 %v606, 7
        %v608 = vsub.s32 2, %v607
        %v609 = vrot.slane %v575, %v608
        %v610 = vlaneseq
        %v611 = vshrl.u32 %v610, 7
        %v612 = vsub.s32 3, %v611
        %v613 = vrot.slane %v575, %v612
        %v618 = vmul.f32 %v601, %v581
        %v619 = vmul.f32 %v605, %v582
        %v620 = vmul.f32 %v609, %v583
        %v621 = vmul.f32 %v613, %v584
        %v623 = vlaneseq
        %v624 = vshrl.u32 %v623, 7
        %v625 = vsub.s32 0, %v624
        %v626 = vrot.slane %v577, %v625
        %v627 = vlaneseq
        %v628 = vshrl.u32 %v627, 7
        %v629 = vsub.s32 1, %v628
        %v630 = vrot.slane %v577, %v629
        %v631 = vlaneseq
        %v632 = vshrl.u32 %v631, 7
        %v633 = vsub.s32 2, %v632
        %v634 = vrot.slane %v577, %v633
        %v635 = vlaneseq
        %v636 = vshrl.u32 %v635, 7
        %v637 = vsub.s32 3, %v636
        %v638 = vrot.slane %v577, %v637
        %v643 = vmul.f32 %v626, %v585
        %v644 = vmul.f32 %v630, %v586
        %v645 = vmul.f32 %v634, %v587
        %v646 = vmul.f32 %v638, %v588
        %v651 = vrot.slane %v643, 4
        %v652 = vrot.slane %v644, 4
        %v653 = vrot.slane %v645, 4
        %v654 = vrot.slane %v646, 4
        %v659 = vadd.f32 %v618, %v651
        %v660 = vadd.f32 %v619, %v652
        %v661 = vadd.f32 %v620, %v653
        %v662 = vadd.f32 %v621, %v654
        %v664 = vlaneseq
        %v665 = vshrl.u32 %v664, 7
        %v666 = vsub.s32 0, %v665
        %v667 = vrot.slane %v579, %v666
        %v668 = vlaneseq
        %v669 = vshrl.u32 %v668, 7
        %v670 = vsub.s32 1, %v669
        %v671 = vrot.slane %v579, %v670
        %v672 = vlaneseq
        %v673 = vshrl.u32 %v672, 7
        %v674 = vsub.s32 2, %v673
        %v675 = vrot.slane %v579, %v674
        %v676 = vlaneseq
        %v677 = vshrl.u32 %v676, 7
        %v678 = vsub.s32 3, %v677
        %v679 = vrot.slane %v579, %v678
        %v684 = vmul.f32 %v667, %v589
        %v685 = vmul.f32 %v671, %v590
        %v686 = vmul.f32 %v675, %v591
        %v687 = vmul.f32 %v679, %v592
        %v688 = vadd.f32 %v659, %v684
        %v689 = vadd.f32 %v660, %v685
        %v690 = vadd.f32 %v661, %v686
        %v691 = vadd.f32 %v662, %v687
        %v693 = vlaneseq
        %v694 = vshrl.u32 %v693, 7
        %v695 = vsub.s32 0, %v694
        %v696 = vrot.slane %v580, %v695
        %v697 = vlaneseq
        %v698 = vshrl.u32 %v697, 7
        %v699 = vsub.s32 1, %v698
        %v700 = vrot.slane %v580, %v699
        %v701 = vlaneseq
        %v702 = vshrl.u32 %v701, 7
        %v703 = vsub.s32 2, %v702
        %v704 = vrot.slane %v580, %v703
        %v705 = vlaneseq
        %v706 = vshrl.u32 %v705, 7
        %v707 = vsub.s32 3, %v706
        %v708 = vrot.slane %v580, %v707
        %v713 = vmul.f32 %v696, %v593
        %v714 = vmul.f32 %v700, %v594
        %v715 = vmul.f32 %v704, %v595
        %v716 = vmul.f32 %v708, %v596
        %v721 = vrot.slane %v713, 4
        %v722 = vrot.slane %v714, 4
        %v723 = vrot.slane %v715, 4
        %v724 = vrot.slane %v716, 4
        %v729 = vadd.f32 %v688, %v721
        %v730 = vadd.f32 %v689, %v722
        %v731 = vadd.f32 %v690, %v723
        %v732 = vadd.f32 %v691, %v724
        %s733 = scalar_lea.vmem %s2, 64
        %v734 = vld [vmem:[%s733] sm:$0xff]
        %v735 = vld [vmem:[%s733 + $0x8] sm:$0xff]
        %v736 = vld [vmem:[%s733 + $0x10] sm:$0xff]
        %v737 = vld [vmem:[%s733 + $0x18] sm:$0xff]
        %v738 = vld [vmem:[%s733 + $0x20] sm:$0xff]
        %v739 = vld [vmem:[%s733 + $0x28] sm:$0xff]
        %v740 = vld [vmem:[%s733 + $0x30] sm:$0xff]
        %v741 = vld [vmem:[%s733 + $0x38] sm:$0xff]
        %vm742 = vcmask 31744
        %v744 = vsel %vm742, %v734, 0
        %v747 = vsel %vm742, %v735, 0
        %v750 = vsel %vm742, %v736, 0
        %v753 = vsel %vm742, %v737, 0
        %v756 = vsel %vm742, %v738, 0
        %v759 = vsel %vm742, %v739, 0
        %v762 = vsel %vm742, %v740, 0
        %v765 = vsel %vm742, %v741, 0
        %vm767 = vcmask 1043456
        %v769 = vsel %vm767, %v729, 0
        %v772 = vsel %vm767, %v730, 0
        %v775 = vsel %vm767, %v731, 0
        %v778 = vsel %vm767, %v732, 0
        %780 = vmatprep.subr.mxu0 %v772
        %781 = vmatpush1.msra.mxu0 %v769
        %782 = vmatprep.subr.mxu0 0.0
        %783 = vmatpush1.msra.mxu0 0.0
        %784 = vmatprep.subr.mxu0 0.0
        %785 = vmatpush1.msra.mxu0 0.0
        %786 = vmatprep.subr.mxu0 0.0
        %787 = vmatpush1.msra.mxu0 0.0
        %788 = vmatprep.subr.mxu0 0.0
        %789 = vmatpush1.msra.mxu0 0.0
        %790 = vmatprep.subr.mxu0 0.0
        %791 = vmatpush1.msra.mxu0 0.0
        %792 = vmatprep.subr.mxu0 0.0
        %793 = vmatpush1.msra.mxu0 0.0
        %794 = vmatprep.subr.mxu0 0.0
        %795 = vmatpush1.msra.mxu0 0.0
        %796 = vmatprep.subr.mxu0 0.0
        %797 = vmatpush1.msra.mxu0 0.0
        %798 = vmatprep.subr.mxu0 0.0
        %799 = vmatpush1.msra.mxu0 0.0
        %800 = vmatprep.subr.mxu0 0.0
        %801 = vmatpush1.msra.mxu0 0.0
        %802 = vmatprep.subr.mxu0 0.0
        %803 = vmatpush1.msra.mxu0 0.0
        %804 = vmatprep.subr.mxu0 0.0
        %805 = vmatpush1.msra.mxu0 0.0
        %806 = vmatprep.subr.mxu0 0.0
        %807 = vmatpush1.msra.mxu0 0.0
        %808 = vmatprep.subr.mxu0 0.0
        %809 = vmatpush1.msra.mxu0 0.0
        %810 = vmatprep.subr.mxu0 0.0
        %811 = vmatpush1.msra.mxu0 0.0
        %812 = vmatprep.subr.mxu0 0.0
        %813 = vmatpush1.msra.mxu0 0.0
        %814 = vmatprep.subr.mxu0 0.0
        %815 = vmatpush1.msra.mxu0 0.0
        %816 = vmatprep.subr.mxu0 0.0
        %817 = vmatpush1.msra.mxu0 0.0
        %818 = vmatprep.subr.mxu0 0.0
        %819 = vmatpush1.msra.mxu0 0.0
        %820 = vmatprep.subr.mxu0 0.0
        %821 = vmatpush1.msra.mxu0 0.0
        %822 = vmatprep.subr.mxu0 0.0
        %823 = vmatpush1.msra.mxu0 0.0
        %824 = vmatprep.subr.mxu0 0.0
        %825 = vmatpush1.msra.mxu0 0.0
        %826 = vmatprep.subr.mxu0 0.0
        %827 = vmatpush1.msra.mxu0 0.0
        %828 = vmatprep.subr.mxu0 0.0
        %829 = vmatpush1.msra.mxu0 0.0
        %830 = vmatprep.subr.mxu0 0.0
        %831 = vmatpush1.msra.mxu0 0.0
        %832 = vmatprep.subr.mxu0 0.0
        %833 = vmatpush1.msra.mxu0 0.0
        %834 = vmatprep.subr.mxu0 0.0
        %835 = vmatpush1.msra.mxu0 0.0
        %836 = vmatprep.subr.mxu0 0.0
        %837 = vmatpush1.msra.mxu0 0.0
        %838 = vmatprep.subr.mxu0 0.0
        %839 = vmatpush1.msra.mxu0 0.0
        %840 = vmatprep.subr.mxu0 0.0
        %841 = vmatpush1.msra.mxu0 0.0
        %842 = vmatprep.subr.mxu0 0.0
        %843 = vmatpush1.msra.mxu0 0.0
        %844 = vmatprep.mubr.f32.mxu0 0.0
        %845 = vmatmul.mubr.f32.gmra.mrb[0].mxu0 %v744
        %v846 = vpop.f32.mrb[0].mxu0
        %v847 = vadd.f32 0.0, %v846
        %v848 = vpop.f32.mrb[0].mxu0
        %v849 = vadd.f32 0.0, %v848
        %850 = vmatprep.mubr.f32.mxu0 0.0
        %851 = vmatmul.mubr.f32.gmra.mrb[0].mxu0 %v747
        %v852 = vpop.f32.mrb[0].mxu0
        %v853 = vadd.f32 0.0, %v852
        %v854 = vpop.f32.mrb[0].mxu0
        %v855 = vadd.f32 0.0, %v854
        %856 = vmatprep.mubr.f32.mxu0 0.0
        %857 = vmatmul.mubr.f32.gmra.mrb[0].mxu0 %v750
        %v858 = vpop.f32.mrb[0].mxu0
        %v859 = vadd.f32 0.0, %v858
        %v860 = vpop.f32.mrb[0].mxu0
        %v861 = vadd.f32 0.0, %v860
        %862 = vmatprep.mubr.f32.mxu0 0.0
        %863 = vmatmul.mubr.f32.gmra.mrb[0].mxu0 %v753
        %v864 = vpop.f32.mrb[0].mxu0
        %v865 = vadd.f32 0.0, %v864
        %v866 = vpop.f32.mrb[0].mxu0
        %v867 = vadd.f32 0.0, %v866
        %868 = vmatprep.mubr.f32.mxu0 0.0
        %869 = vmatmul.mubr.f32.gmra.mrb[0].mxu0 %v756
        %v870 = vpop.f32.mrb[0].mxu0
        %v871 = vadd.f32 0.0, %v870
        %v872 = vpop.f32.mrb[0].mxu0
        %v873 = vadd.f32 0.0, %v872
        %874 = vmatprep.mubr.f32.mxu0 0.0
        %875 = vmatmul.mubr.f32.gmra.mrb[0].mxu0 %v759
        %v876 = vpop.f32.mrb[0].mxu0
        %v877 = vadd.f32 0.0, %v876
        %v878 = vpop.f32.mrb[0].mxu0
        %v879 = vadd.f32 0.0, %v878
        %880 = vmatprep.mubr.f32.mxu0 0.0
        %881 = vmatmul.mubr.f32.gmra.mrb[0].mxu0 %v762
        %v882 = vpop.f32.mrb[0].mxu0
        %v883 = vadd.f32 0.0, %v882
        %v884 = vpop.f32.mrb[0].mxu0
        %v885 = vadd.f32 0.0, %v884
        %886 = vmatprep.mubr.f32.mxu0 0.0
        %887 = vmatmul.mubr.f32.gmra.mrb[0].mxu0 %v765
        %v888 = vpop.f32.mrb[0].mxu0
        %v889 = vadd.f32 0.0, %v888
        %v890 = vpop.f32.mrb[0].mxu0
        %v891 = vadd.f32 0.0, %v890
        %892 = vdwg.mxu0
        %893 = vmatprep.subr.mxu0 %v778
        %894 = vmatpush1.msra.mxu0 %v775
        %895 = vmatprep.subr.mxu0 0.0
        %896 = vmatpush1.msra.mxu0 0.0
        %897 = vmatprep.subr.mxu0 0.0
        %898 = vmatpush1.msra.mxu0 0.0
        %899 = vmatprep.subr.mxu0 0.0
        %900 = vmatpush1.msra.mxu0 0.0
        %901 = vmatprep.subr.mxu0 0.0
        %902 = vmatpush1.msra.mxu0 0.0
        %903 = vmatprep.subr.mxu0 0.0
        %904 = vmatpush1.msra.mxu0 0.0
        %905 = vmatprep.subr.mxu0 0.0
        %906 = vmatpush1.msra.mxu0 0.0
        %907 = vmatprep.subr.mxu0 0.0
        %908 = vmatpush1.msra.mxu0 0.0
        %909 = vmatprep.subr.mxu0 0.0
        %910 = vmatpush1.msra.mxu0 0.0
        %911 = vmatprep.subr.mxu0 0.0
        %912 = vmatpush1.msra.mxu0 0.0
        %913 = vmatprep.subr.mxu0 0.0
        %914 = vmatpush1.msra.mxu0 0.0
        %915 = vmatprep.subr.mxu0 0.0
        %916 = vmatpush1.msra.mxu0 0.0
        %917 = vmatprep.subr.mxu0 0.0
        %918 = vmatpush1.msra.mxu0 0.0
        %919 = vmatprep.subr.mxu0 0.0
        %920 = vmatpush1.msra.mxu0 0.0
        %921 = vmatprep.subr.mxu0 0.0
        %922 = vmatpush1.msra.mxu0 0.0
        %923 = vmatprep.subr.mxu0 0.0
        %924 = vmatpush1.msra.mxu0 0.0
        %925 = vmatprep.subr.mxu0 0.0
        %926 = vmatpush1.msra.mxu0 0.0
        %927 = vmatprep.subr.mxu0 0.0
        %928 = vmatpush1.msra.mxu0 0.0
        %929 = vmatprep.subr.mxu0 0.0
        %930 = vmatpush1.msra.mxu0 0.0
        %931 = vmatprep.subr.mxu0 0.0
        %932 = vmatpush1.msra.mxu0 0.0
        %933 = vmatprep.subr.mxu0 0.0
        %934 = vmatpush1.msra.mxu0 0.0
        %935 = vmatprep.subr.mxu0 0.0
        %936 = vmatpush1.msra.mxu0 0.0
        %937 = vmatprep.subr.mxu0 0.0
        %938 = vmatpush1.msra.mxu0 0.0
        %939 = vmatprep.subr.mxu0 0.0
        %940 = vmatpush1.msra.mxu0 0.0
        %941 = vmatprep.subr.mxu0 0.0
        %942 = vmatpush1.msra.mxu0 0.0
        %943 = vmatprep.subr.mxu0 0.0
        %944 = vmatpush1.msra.mxu0 0.0
        %945 = vmatprep.subr.mxu0 0.0
        %946 = vmatpush1.msra.mxu0 0.0
        %947 = vmatprep.subr.mxu0 0.0
        %948 = vmatpush1.msra.mxu0 0.0
        %949 = vmatprep.subr.mxu0 0.0
        %950 = vmatpush1.msra.mxu0 0.0
        %951 = vmatprep.subr.mxu0 0.0
        %952 = vmatpush1.msra.mxu0 0.0
        %953 = vmatprep.subr.mxu0 0.0
        %954 = vmatpush1.msra.mxu0 0.0
        %955 = vmatprep.subr.mxu0 0.0
        %956 = vmatpush1.msra.mxu0 0.0
        %957 = vmatprep.mubr.f32.mxu0 0.0
        %958 = vmatmul.mubr.f32.gmra.mrb[0].mxu0 %v744
        %v959 = vpop.f32.mrb[0].mxu0
        %v960 = vadd.f32 0.0, %v959
        %v961 = vpop.f32.mrb[0].mxu0
        %v962 = vadd.f32 0.0, %v961
        %963 = vmatprep.mubr.f32.mxu0 0.0
        %964 = vmatmul.mubr.f32.gmra.mrb[0].mxu0 %v747
        %v965 = vpop.f32.mrb[0].mxu0
        %v966 = vadd.f32 0.0, %v965
        %v967 = vpop.f32.mrb[0].mxu0
        %v968 = vadd.f32 0.0, %v967
        %969 = vmatprep.mubr.f32.mxu0 0.0
        %970 = vmatmul.mubr.f32.gmra.mrb[0].mxu0 %v750
        %v971 = vpop.f32.mrb[0].mxu0
        %v972 = vadd.f32 0.0, %v971
        %v973 = vpop.f32.mrb[0].mxu0
        %v974 = vadd.f32 0.0, %v973
        %975 = vmatprep.mubr.f32.mxu0 0.0
        %976 = vmatmul.mubr.f32.gmra.mrb[0].mxu0 %v753
        %v977 = vpop.f32.mrb[0].mxu0
        %v978 = vadd.f32 0.0, %v977
        %v979 = vpop.f32.mrb[0].mxu0
        %v980 = vadd.f32 0.0, %v979
        %981 = vmatprep.mubr.f32.mxu0 0.0
        %982 = vmatmul.mubr.f32.gmra.mrb[0].mxu0 %v756
        %v983 = vpop.f32.mrb[0].mxu0
        %v984 = vadd.f32 0.0, %v983
        %v985 = vpop.f32.mrb[0].mxu0
        %v986 = vadd.f32 0.0, %v985
        %987 = vmatprep.mubr.f32.mxu0 0.0
        %988 = vmatmul.mubr.f32.gmra.mrb[0].mxu0 %v759
        %v989 = vpop.f32.mrb[0].mxu0
        %v990 = vadd.f32 0.0, %v989
        %v991 = vpop.f32.mrb[0].mxu0
        %v992 = vadd.f32 0.0, %v991
        %993 = vmatprep.mubr.f32.mxu0 0.0
        %994 = vmatmul.mubr.f32.gmra.mrb[0].mxu0 %v762
        %v995 = vpop.f32.mrb[0].mxu0
        %v996 = vadd.f32 0.0, %v995
        %v997 = vpop.f32.mrb[0].mxu0
        %v998 = vadd.f32 0.0, %v997
        %999 = vmatprep.mubr.f32.mxu0 0.0
        %1000 = vmatmul.mubr.f32.gmra.mrb[0].mxu0 %v765
        %v1001 = vpop.f32.mrb[0].mxu0
        %v1002 = vadd.f32 0.0, %v1001
        %v1003 = vpop.f32.mrb[0].mxu0
        %v1004 = vadd.f32 0.0, %v1003
        %1005 = vdwg.mxu0
        %v1007 = vsel %vm742, %v551, 0
        %v1010 = vsel %vm742, %v552, 0
        %v1013 = vsel %vm742, %v553, 0
        %v1016 = vsel %vm742, %v554, 0
        %v1019 = vsel %vm742, %v555, 0
        %v1022 = vsel %vm742, %v556, 0
        %v1025 = vsel %vm742, %v557, 0
        %v1028 = vsel %vm742, %v558, 0
        %v1031 = vsel %vm767, %v547, 0
        %v1034 = vsel %vm767, %v548, 0
        %v1037 = vsel %vm767, %v549, 0
        %v1040 = vsel %vm767, %v550, 0
        %1042 = vmatprep.subr.mxu0 %v1034
        %1043 = vmatpush1.msra.mxu0 %v1031
        %1044 = vmatprep.subr.mxu0 0.0
        %1045 = vmatpush1.msra.mxu0 0.0
        %1046 = vmatprep.subr.mxu0 0.0
        %1047 = vmatpush1.msra.mxu0 0.0
        %1048 = vmatprep.subr.mxu0 0.0
        %1049 = vmatpush1.msra.mxu0 0.0
        %1050 = vmatprep.subr.mxu0 0.0
        %1051 = vmatpush1.msra.mxu0 0.0
        %1052 = vmatprep.subr.mxu0 0.0
        %1053 = vmatpush1.msra.mxu0 0.0
        %1054 = vmatprep.subr.mxu0 0.0
        %1055 = vmatpush1.msra.mxu0 0.0
        %1056 = vmatprep.subr.mxu0 0.0
        %1057 = vmatpush1.msra.mxu0 0.0
        %1058 = vmatprep.subr.mxu0 0.0
        %1059 = vmatpush1.msra.mxu0 0.0
        %1060 = vmatprep.subr.mxu0 0.0
        %1061 = vmatpush1.msra.mxu0 0.0
        %1062 = vmatprep.subr.mxu0 0.0
        %1063 = vmatpush1.msra.mxu0 0.0
        %1064 = vmatprep.subr.mxu0 0.0
        %1065 = vmatpush1.msra.mxu0 0.0
        %1066 = vmatprep.subr.mxu0 0.0
        %1067 = vmatpush1.msra.mxu0 0.0
        %1068 = vmatprep.subr.mxu0 0.0
        %1069 = vmatpush1.msra.mxu0 0.0
        %1070 = vmatprep.subr.mxu0 0.0
        %1071 = vmatpush1.msra.mxu0 0.0
        %1072 = vmatprep.subr.mxu0 0.0
        %1073 = vmatpush1.msra.mxu0 0.0
        %1074 = vmatprep.subr.mxu0 0.0
        %1075 = vmatpush1.msra.mxu0 0.0
        %1076 = vmatprep.subr.mxu0 0.0
        %1077 = vmatpush1.msra.mxu0 0.0
        %1078 = vmatprep.subr.mxu0 0.0
        %1079 = vmatpush1.msra.mxu0 0.0
        %1080 = vmatprep.subr.mxu0 0.0
        %1081 = vmatpush1.msra.mxu0 0.0
        %1082 = vmatprep.subr.mxu0 0.0
        %1083 = vmatpush1.msra.mxu0 0.0
        %1084 = vmatprep.subr.mxu0 0.0
        %1085 = vmatpush1.msra.mxu0 0.0
        %1086 = vmatprep.subr.mxu0 0.0
        %1087 = vmatpush1.msra.mxu0 0.0
        %1088 = vmatprep.subr.mxu0 0.0
        %1089 = vmatpush1.msra.mxu0 0.0
        %1090 = vmatprep.subr.mxu0 0.0
        %1091 = vmatpush1.msra.mxu0 0.0
        %1092 = vmatprep.subr.mxu0 0.0
        %1093 = vmatpush1.msra.mxu0 0.0
        %1094 = vmatprep.subr.mxu0 0.0
        %1095 = vmatpush1.msra.mxu0 0.0
        %1096 = vmatprep.subr.mxu0 0.0
        %1097 = vmatpush1.msra.mxu0 0.0
        %1098 = vmatprep.subr.mxu0 0.0
        %1099 = vmatpush1.msra.mxu0 0.0
        %1100 = vmatprep.subr.mxu0 0.0
        %1101 = vmatpush1.msra.mxu0 0.0
        %1102 = vmatprep.subr.mxu0 0.0
        %1103 = vmatpush1.msra.mxu0 0.0
        %1104 = vmatprep.subr.mxu0 0.0
        %1105 = vmatpush1.msra.mxu0 0.0
        %1106 = vmatprep.mubr.f32.mxu0 0.0
        %1107 = vmatmul.mubr.f32.gmra.mrb[0].mxu0 %v1007
        %v1108 = vpop.f32.mrb[0].mxu0
        %v1109 = vadd.f32 %v847, %v1108
        %v1110 = vpop.f32.mrb[0].mxu0
        %v1111 = vadd.f32 %v849, %v1110
        %1112 = vmatprep.mubr.f32.mxu0 0.0
        %1113 = vmatmul.mubr.f32.gmra.mrb[0].mxu0 %v1010
        %v1114 = vpop.f32.mrb[0].mxu0
        %v1115 = vadd.f32 %v853, %v1114
        %v1116 = vpop.f32.mrb[0].mxu0
        %v1117 = vadd.f32 %v855, %v1116
        %1118 = vmatprep.mubr.f32.mxu0 0.0
        %1119 = vmatmul.mubr.f32.gmra.mrb[0].mxu0 %v1013
        %v1120 = vpop.f32.mrb[0].mxu0
        %v1121 = vadd.f32 %v859, %v1120
        %v1122 = vpop.f32.mrb[0].mxu0
        %v1123 = vadd.f32 %v861, %v1122
        %1124 = vmatprep.mubr.f32.mxu0 0.0
        %1125 = vmatmul.mubr.f32.gmra.mrb[0].mxu0 %v1016
        %v1126 = vpop.f32.mrb[0].mxu0
        %v1127 = vadd.f32 %v865, %v1126
        %v1128 = vpop.f32.mrb[0].mxu0
        %v1129 = vadd.f32 %v867, %v1128
        %1130 = vmatprep.mubr.f32.mxu0 0.0
        %1131 = vmatmul.mubr.f32.gmra.mrb[0].mxu0 %v1019
        %v1132 = vpop.f32.mrb[0].mxu0
        %v1133 = vadd.f32 %v871, %v1132
        %v1134 = vpop.f32.mrb[0].mxu0
        %v1135 = vadd.f32 %v873, %v1134
        %1136 = vmatprep.mubr.f32.mxu0 0.0
        %1137 = vmatmul.mubr.f32.gmra.mrb[0].mxu0 %v1022
        %v1138 = vpop.f32.mrb[0].mxu0
        %v1139 = vadd.f32 %v877, %v1138
        %v1140 = vpop.f32.mrb[0].mxu0
        %v1141 = vadd.f32 %v879, %v1140
        %1142 = vmatprep.mubr.f32.mxu0 0.0
        %1143 = vmatmul.mubr.f32.gmra.mrb[0].mxu0 %v1025
        %v1144 = vpop.f32.mrb[0].mxu0
        %v1145 = vadd.f32 %v883, %v1144
        %v1146 = vpop.f32.mrb[0].mxu0
        %v1147 = vadd.f32 %v885, %v1146
        %1148 = vmatprep.mubr.f32.mxu0 0.0
        %1149 = vmatmul.mubr.f32.gmra.mrb[0].mxu0 %v1028
        %v1150 = vpop.f32.mrb[0].mxu0
        %v1151 = vadd.f32 %v889, %v1150
        %v1152 = vpop.f32.mrb[0].mxu0
        %v1153 = vadd.f32 %v891, %v1152
        %1154 = vdwg.mxu0
        %1155 = vmatprep.subr.mxu0 %v1040
        %1156 = vmatpush1.msra.mxu0 %v1037
        %1157 = vmatprep.subr.mxu0 0.0
        %1158 = vmatpush1.msra.mxu0 0.0
        %1159 = vmatprep.subr.mxu0 0.0
        %1160 = vmatpush1.msra.mxu0 0.0
        %1161 = vmatprep.subr.mxu0 0.0
        %1162 = vmatpush1.msra.mxu0 0.0
        %1163 = vmatprep.subr.mxu0 0.0
        %1164 = vmatpush1.msra.mxu0 0.0
        %1165 = vmatprep.subr.mxu0 0.0
        %1166 = vmatpush1.msra.mxu0 0.0
        %1167 = vmatprep.subr.mxu0 0.0
        %1168 = vmatpush1.msra.mxu0 0.0
        %1169 = vmatprep.subr.mxu0 0.0
        %1170 = vmatpush1.msra.mxu0 0.0
        %1171 = vmatprep.subr.mxu0 0.0
        %1172 = vmatpush1.msra.mxu0 0.0
        %1173 = vmatprep.subr.mxu0 0.0
        %1174 = vmatpush1.msra.mxu0 0.0
        %1175 = vmatprep.subr.mxu0 0.0
        %1176 = vmatpush1.msra.mxu0 0.0
        %1177 = vmatprep.subr.mxu0 0.0
        %1178 = vmatpush1.msra.mxu0 0.0
        %1179 = vmatprep.subr.mxu0 0.0
        %1180 = vmatpush1.msra.mxu0 0.0
        %1181 = vmatprep.subr.mxu0 0.0
        %1182 = vmatpush1.msra.mxu0 0.0
        %1183 = vmatprep.subr.mxu0 0.0
        %1184 = vmatpush1.msra.mxu0 0.0
        %1185 = vmatprep.subr.mxu0 0.0
        %1186 = vmatpush1.msra.mxu0 0.0
        %1187 = vmatprep.subr.mxu0 0.0
        %1188 = vmatpush1.msra.mxu0 0.0
        %1189 = vmatprep.subr.mxu0 0.0
        %1190 = vmatpush1.msra.mxu0 0.0
        %1191 = vmatprep.subr.mxu0 0.0
        %1192 = vmatpush1.msra.mxu0 0.0
        %1193 = vmatprep.subr.mxu0 0.0
        %1194 = vmatpush1.msra.mxu0 0.0
        %1195 = vmatprep.subr.mxu0 0.0
        %1196 = vmatpush1.msra.mxu0 0.0
        %1197 = vmatprep.subr.mxu0 0.0
        %1198 = vmatpush1.msra.mxu0 0.0
        %1199 = vmatprep.subr.mxu0 0.0
        %1200 = vmatpush1.msra.mxu0 0.0
        %1201 = vmatprep.subr.mxu0 0.0
        %1202 = vmatpush1.msra.mxu0 0.0
        %1203 = vmatprep.subr.mxu0 0.0
        %1204 = vmatpush1.msra.mxu0 0.0
        %1205 = vmatprep.subr.mxu0 0.0
        %1206 = vmatpush1.msra.mxu0 0.0
        %1207 = vmatprep.subr.mxu0 0.0
        %1208 = vmatpush1.msra.mxu0 0.0
        %1209 = vmatprep.subr.mxu0 0.0
        %1210 = vmatpush1.msra.mxu0 0.0
        %1211 = vmatprep.subr.mxu0 0.0
        %1212 = vmatpush1.msra.mxu0 0.0
        %1213 = vmatprep.subr.mxu0 0.0
        %1214 = vmatpush1.msra.mxu0 0.0
        %1215 = vmatprep.subr.mxu0 0.0
        %1216 = vmatpush1.msra.mxu0 0.0
        %1217 = vmatprep.subr.mxu0 0.0
        %1218 = vmatpush1.msra.mxu0 0.0
        %1219 = vmatprep.mubr.f32.mxu0 0.0
        %1220 = vmatmul.mubr.f32.gmra.mrb[0].mxu0 %v1007
        %v1221 = vpop.f32.mrb[0].mxu0
        %v1222 = vadd.f32 %v960, %v1221
        %v1223 = vpop.f32.mrb[0].mxu0
        %v1224 = vadd.f32 %v962, %v1223
        %1225 = vmatprep.mubr.f32.mxu0 0.0
        %1226 = vmatmul.mubr.f32.gmra.mrb[0].mxu0 %v1010
        %v1227 = vpop.f32.mrb[0].mxu0
        %v1228 = vadd.f32 %v966, %v1227
        %v1229 = vpop.f32.mrb[0].mxu0
        %v1230 = vadd.f32 %v968, %v1229
        %1231 = vmatprep.mubr.f32.mxu0 0.0
        %1232 = vmatmul.mubr.f32.gmra.mrb[0].mxu0 %v1013
        %v1233 = vpop.f32.mrb[0].mxu0
        %v1234 = vadd.f32 %v972, %v1233
        %v1235 = vpop.f32.mrb[0].mxu0
        %v1236 = vadd.f32 %v974, %v1235
        %1237 = vmatprep.mubr.f32.mxu0 0.0
        %1238 = vmatmul.mubr.f32.gmra.mrb[0].mxu0 %v1016
        %v1239 = vpop.f32.mrb[0].mxu0
        %v1240 = vadd.f32 %v978, %v1239
        %v1241 = vpop.f32.mrb[0].mxu0
        %v1242 = vadd.f32 %v980, %v1241
        %1243 = vmatprep.mubr.f32.mxu0 0.0
        %1244 = vmatmul.mubr.f32.gmra.mrb[0].mxu0 %v1019
        %v1245 = vpop.f32.mrb[0].mxu0
        %v1246 = vadd.f32 %v984, %v1245
        %v1247 = vpop.f32.mrb[0].mxu0
        %v1248 = vadd.f32 %v986, %v1247
        %1249 = vmatprep.mubr.f32.mxu0 0.0
        %1250 = vmatmul.mubr.f32.gmra.mrb[0].mxu0 %v1022
        %v1251 = vpop.f32.mrb[0].mxu0
        %v1252 = vadd.f32 %v990, %v1251
        %v1253 = vpop.f32.mrb[0].mxu0
        %v1254 = vadd.f32 %v992, %v1253
        %1255 = vmatprep.mubr.f32.mxu0 0.0
        %1256 = vmatmul.mubr.f32.gmra.mrb[0].mxu0 %v1025
        %v1257 = vpop.f32.mrb[0].mxu0
        %v1258 = vadd.f32 %v996, %v1257
        %v1259 = vpop.f32.mrb[0].mxu0
        %v1260 = vadd.f32 %v998, %v1259
        %1261 = vmatprep.mubr.f32.mxu0 0.0
        %1262 = vmatmul.mubr.f32.gmra.mrb[0].mxu0 %v1028
        %v1263 = vpop.f32.mrb[0].mxu0
        %v1264 = vadd.f32 %v1002, %v1263
        %v1265 = vpop.f32.mrb[0].mxu0
        %v1266 = vadd.f32 %v1004, %v1265
        %1267 = vdwg.mxu0
        %v1268 = vmul.f32 %v374, 63.0
        %v1269 = vmul.f32 %v376, 63.0
        %v1270 = vmax.f32 %v1268, 0.0
        %v1271 = vmin.f32 %v1270, 62.99999
        %v1272 = vfloor.f32 %v1271
        %v1273 = vmax.f32 %v1269, 0.0
        %v1274 = vmin.f32 %v1273, 62.99999
        %v1275 = vfloor.f32 %v1274
        %v1276 = vadd.f32 %v1272, 1.0
        %v1277 = vmax.f32 %v1276, 0.0
        %v1278 = vmin.f32 %v1277, 63.0
        %v1279 = vadd.f32 %v1275, 1.0
        %v1280 = vmax.f32 %v1279, 0.0
        %v1281 = vmin.f32 %v1280, 63.0
        %v1282 = vsub.f32 %v1278, %v1268
        %v1283 = vsub.f32 %v1281, %v1269
        %v1284 = vmul.f32 %v1282, %v1283
        %v1285 = vsub.f32 %v1268, %v1272
        %v1286 = vmul.f32 %v1285, %v1283
        %v1287 = vsub.f32 %v1269, %v1275
        %v1288 = vmul.f32 %v1282, %v1287
        %v1289 = vmul.f32 %v1285, %v1287
        %v1290 = vld [vmem:[%s329 + $0x80] sm:$0xf]
        %v1291 = vld [vmem:[%s329 + $0x88] sm:$0xf]
        %v1292 = vld [vmem:[%s329 + $0x90] sm:$0xf]
        %v1293 = vld [vmem:[%s329 + $0x98] sm:$0xf]
        %v1294 = vld [vmem:[%s329 + $0x80] sm:$0xf0]
        %v1295 = vld [vmem:[%s329 + $0x88] sm:$0xf0]
        %v1296 = vld [vmem:[%s329 + $0x90] sm:$0xf0]
        %v1297 = vld [vmem:[%s329 + $0x98] sm:$0xf0]
        %v1298 = vld [vmem:[%s329 + $0xa0] sm:$0xf]
        %v1299 = vld [vmem:[%s329 + $0xa8] sm:$0xf]
        %v1300 = vld [vmem:[%s329 + $0xb0] sm:$0xf]
        %v1301 = vld [vmem:[%s329 + $0xb8] sm:$0xf]
        %v1302 = vld [vmem:[%s329 + $0xa0] sm:$0xf0]
        %v1303 = vld [vmem:[%s329 + $0xa8] sm:$0xf0]
        %v1304 = vld [vmem:[%s329 + $0xb0] sm:$0xf0]
        %v1305 = vld [vmem:[%s329 + $0xb8] sm:$0xf0]
        %v1307 = vlaneseq
        %v1308 = vshrl.u32 %v1307, 7
        %v1309 = vsub.s32 0, %v1308
        %v1310 = vrot.slane %v1284, %v1309
        %v1311 = vlaneseq
        %v1312 = vshrl.u32 %v1311, 7
        %v1313 = vsub.s32 1, %v1312
        %v1314 = vrot.slane %v1284, %v1313
        %v1315 = vlaneseq
        %v1316 = vshrl.u32 %v1315, 7
        %v1317 = vsub.s32 2, %v1316
        %v1318 = vrot.slane %v1284, %v1317
        %v1319 = vlaneseq
        %v1320 = vshrl.u32 %v1319, 7
        %v1321 = vsub.s32 3, %v1320
        %v1322 = vrot.slane %v1284, %v1321
        %v1327 = vmul.f32 %v1310, %v1290
        %v1328 = vmul.f32 %v1314, %v1291
        %v1329 = vmul.f32 %v1318, %v1292
        %v1330 = vmul.f32 %v1322, %v1293
        %v1332 = vlaneseq
        %v1333 = vshrl.u32 %v1332, 7
        %v1334 = vsub.s32 0, %v1333
        %v1335 = vrot.slane %v1286, %v1334
        %v1336 = vlaneseq
        %v1337 = vshrl.u32 %v1336, 7
        %v1338 = vsub.s32 1, %v1337
        %v1339 = vrot.slane %v1286, %v1338
        %v1340 = vlaneseq
        %v1341 = vshrl.u32 %v1340, 7
        %v1342 = vsub.s32 2, %v1341
        %v1343 = vrot.slane %v1286, %v1342
        %v1344 = vlaneseq
        %v1345 = vshrl.u32 %v1344, 7
        %v1346 = vsub.s32 3, %v1345
        %v1347 = vrot.slane %v1286, %v1346
        %v1352 = vmul.f32 %v1335, %v1294
        %v1353 = vmul.f32 %v1339, %v1295
        %v1354 = vmul.f32 %v1343, %v1296
        %v1355 = vmul.f32 %v1347, %v1297
        %v1360 = vrot.slane %v1352, 4
        %v1361 = vrot.slane %v1353, 4
        %v1362 = vrot.slane %v1354, 4
        %v1363 = vrot.slane %v1355, 4
        %v1368 = vadd.f32 %v1327, %v1360
        %v1369 = vadd.f32 %v1328, %v1361
        %v1370 = vadd.f32 %v1329, %v1362
        %v1371 = vadd.f32 %v1330, %v1363
        %v1373 = vlaneseq
        %v1374 = vshrl.u32 %v1373, 7
        %v1375 = vsub.s32 0, %v1374
        %v1376 = vrot.slane %v1288, %v1375
        %v1377 = vlaneseq
        %v1378 = vshrl.u32 %v1377, 7
        %v1379 = vsub.s32 1, %v1378
        %v1380 = vrot.slane %v1288, %v1379
        %v1381 = vlaneseq
        %v1382 = vshrl.u32 %v1381, 7
        %v1383 = vsub.s32 2, %v1382
        %v1384 = vrot.slane %v1288, %v1383
        %v1385 = vlaneseq
        %v1386 = vshrl.u32 %v1385, 7
        %v1387 = vsub.s32 3, %v1386
        %v1388 = vrot.slane %v1288, %v1387
        %v1393 = vmul.f32 %v1376, %v1298
        %v1394 = vmul.f32 %v1380, %v1299
        %v1395 = vmul.f32 %v1384, %v1300
        %v1396 = vmul.f32 %v1388, %v1301
        %v1397 = vadd.f32 %v1368, %v1393
        %v1398 = vadd.f32 %v1369, %v1394
        %v1399 = vadd.f32 %v1370, %v1395
        %v1400 = vadd.f32 %v1371, %v1396
        %v1402 = vlaneseq
        %v1403 = vshrl.u32 %v1402, 7
        %v1404 = vsub.s32 0, %v1403
        %v1405 = vrot.slane %v1289, %v1404
        %v1406 = vlaneseq
        %v1407 = vshrl.u32 %v1406, 7
        %v1408 = vsub.s32 1, %v1407
        %v1409 = vrot.slane %v1289, %v1408
        %v1410 = vlaneseq
        %v1411 = vshrl.u32 %v1410, 7
        %v1412 = vsub.s32 2, %v1411
        %v1413 = vrot.slane %v1289, %v1412
        %v1414 = vlaneseq
        %v1415 = vshrl.u32 %v1414, 7
        %v1416 = vsub.s32 3, %v1415
        %v1417 = vrot.slane %v1289, %v1416
        %v1422 = vmul.f32 %v1405, %v1302
        %v1423 = vmul.f32 %v1409, %v1303
        %v1424 = vmul.f32 %v1413, %v1304
        %v1425 = vmul.f32 %v1417, %v1305
        %v1430 = vrot.slane %v1422, 4
        %v1431 = vrot.slane %v1423, 4
        %v1432 = vrot.slane %v1424, 4
        %v1433 = vrot.slane %v1425, 4
        %v1438 = vadd.f32 %v1397, %v1430
        %v1439 = vadd.f32 %v1398, %v1431
        %v1440 = vadd.f32 %v1399, %v1432
        %v1441 = vadd.f32 %v1400, %v1433
        %s1442 = scalar_lea.vmem %s2, 128
        %v1443 = vld [vmem:[%s1442] sm:$0xff]
        %v1444 = vld [vmem:[%s1442 + $0x8] sm:$0xff]
        %v1445 = vld [vmem:[%s1442 + $0x10] sm:$0xff]
        %v1446 = vld [vmem:[%s1442 + $0x18] sm:$0xff]
        %v1447 = vld [vmem:[%s1442 + $0x20] sm:$0xff]
        %v1448 = vld [vmem:[%s1442 + $0x28] sm:$0xff]
        %v1449 = vld [vmem:[%s1442 + $0x30] sm:$0xff]
        %v1450 = vld [vmem:[%s1442 + $0x38] sm:$0xff]
        %v1452 = vsel %vm742, %v1443, 0
        %v1455 = vsel %vm742, %v1444, 0
        %v1458 = vsel %vm742, %v1445, 0
        %v1461 = vsel %vm742, %v1446, 0
        %v1464 = vsel %vm742, %v1447, 0
        %v1467 = vsel %vm742, %v1448, 0
        %v1470 = vsel %vm742, %v1449, 0
        %v1473 = vsel %vm742, %v1450, 0
        %v1476 = vsel %vm767, %v1438, 0
        %v1479 = vsel %vm767, %v1439, 0
        %v1482 = vsel %vm767, %v1440, 0
        %v1485 = vsel %vm767, %v1441, 0
        %1487 = vmatprep.subr.mxu0 %v1479
        %1488 = vmatpush1.msra.mxu0 %v1476
        %1489 = vmatprep.subr.mxu0 0.0
        %1490 = vmatpush1.msra.mxu0 0.0
        %1491 = vmatprep.subr.mxu0 0.0
        %1492 = vmatpush1.msra.mxu0 0.0
        %1493 = vmatprep.subr.mxu0 0.0
        %1494 = vmatpush1.msra.mxu0 0.0
        %1495 = vmatprep.subr.mxu0 0.0
        %1496 = vmatpush1.msra.mxu0 0.0
        %1497 = vmatprep.subr.mxu0 0.0
        %1498 = vmatpush1.msra.mxu0 0.0
        %1499 = vmatprep.subr.mxu0 0.0
        %1500 = vmatpush1.msra.mxu0 0.0
        %1501 = vmatprep.subr.mxu0 0.0
        %1502 = vmatpush1.msra.mxu0 0.0
        %1503 = vmatprep.subr.mxu0 0.0
        %1504 = vmatpush1.msra.mxu0 0.0
        %1505 = vmatprep.subr.mxu0 0.0
        %1506 = vmatpush1.msra.mxu0 0.0
        %1507 = vmatprep.subr.mxu0 0.0
        %1508 = vmatpush1.msra.mxu0 0.0
        %1509 = vmatprep.subr.mxu0 0.0
        %1510 = vmatpush1.msra.mxu0 0.0
        %1511 = vmatprep.subr.mxu0 0.0
        %1512 = vmatpush1.msra.mxu0 0.0
        %1513 = vmatprep.subr.mxu0 0.0
        %1514 = vmatpush1.msra.mxu0 0.0
        %1515 = vmatprep.subr.mxu0 0.0
        %1516 = vmatpush1.msra.mxu0 0.0
        %1517 = vmatprep.subr.mxu0 0.0
        %1518 = vmatpush1.msra.mxu0 0.0
        %1519 = vmatprep.subr.mxu0 0.0
        %1520 = vmatpush1.msra.mxu0 0.0
        %1521 = vmatprep.subr.mxu0 0.0
        %1522 = vmatpush1.msra.mxu0 0.0
        %1523 = vmatprep.subr.mxu0 0.0
        %1524 = vmatpush1.msra.mxu0 0.0
        %1525 = vmatprep.subr.mxu0 0.0
        %1526 = vmatpush1.msra.mxu0 0.0
        %1527 = vmatprep.subr.mxu0 0.0
        %1528 = vmatpush1.msra.mxu0 0.0
        %1529 = vmatprep.subr.mxu0 0.0
        %1530 = vmatpush1.msra.mxu0 0.0
        %1531 = vmatprep.subr.mxu0 0.0
        %1532 = vmatpush1.msra.mxu0 0.0
        %1533 = vmatprep.subr.mxu0 0.0
        %1534 = vmatpush1.msra.mxu0 0.0
        %1535 = vmatprep.subr.mxu0 0.0
        %1536 = vmatpush1.msra.mxu0 0.0
        %1537 = vmatprep.subr.mxu0 0.0
        %1538 = vmatpush1.msra.mxu0 0.0
        %1539 = vmatprep.subr.mxu0 0.0
        %1540 = vmatpush1.msra.mxu0 0.0
        %1541 = vmatprep.subr.mxu0 0.0
        %1542 = vmatpush1.msra.mxu0 0.0
        %1543 = vmatprep.subr.mxu0 0.0
        %1544 = vmatpush1.msra.mxu0 0.0
        %1545 = vmatprep.subr.mxu0 0.0
        %1546 = vmatpush1.msra.mxu0 0.0
        %1547 = vmatprep.subr.mxu0 0.0
        %1548 = vmatpush1.msra.mxu0 0.0
        %1549 = vmatprep.subr.mxu0 0.0
        %1550 = vmatpush1.msra.mxu0 0.0
        %1551 = vmatprep.mubr.f32.mxu0 0.0
        %1552 = vmatmul.mubr.f32.gmra.mrb[0].mxu0 %v1452
        %v1553 = vpop.f32.mrb[0].mxu0
        %v1554 = vadd.f32 0.0, %v1553
        %v1555 = vpop.f32.mrb[0].mxu0
        %v1556 = vadd.f32 0.0, %v1555
        %1557 = vmatprep.mubr.f32.mxu0 0.0
        %1558 = vmatmul.mubr.f32.gmra.mrb[0].mxu0 %v1455
        %v1559 = vpop.f32.mrb[0].mxu0
        %v1560 = vadd.f32 0.0, %v1559
        %v1561 = vpop.f32.mrb[0].mxu0
        %v1562 = vadd.f32 0.0, %v1561
        %1563 = vmatprep.mubr.f32.mxu0 0.0
        %1564 = vmatmul.mubr.f32.gmra.mrb[0].mxu0 %v1458
        %v1565 = vpop.f32.mrb[0].mxu0
        %v1566 = vadd.f32 0.0, %v1565
        %v1567 = vpop.f32.mrb[0].mxu0
        %v1568 = vadd.f32 0.0, %v1567
        %1569 = vmatprep.mubr.f32.mxu0 0.0
        %1570 = vmatmul.mubr.f32.gmra.mrb[0].mxu0 %v1461
        %v1571 = vpop.f32.mrb[0].mxu0
        %v1572 = vadd.f32 0.0, %v1571
        %v1573 = vpop.f32.mrb[0].mxu0
        %v1574 = vadd.f32 0.0, %v1573
        %1575 = vmatprep.mubr.f32.mxu0 0.0
        %1576 = vmatmul.mubr.f32.gmra.mrb[0].mxu0 %v1464
        %v1577 = vpop.f32.mrb[0].mxu0
        %v1578 = vadd.f32 0.0, %v1577
        %v1579 = vpop.f32.mrb[0].mxu0
        %v1580 = vadd.f32 0.0, %v1579
        %1581 = vmatprep.mubr.f32.mxu0 0.0
        %1582 = vmatmul.mubr.f32.gmra.mrb[0].mxu0 %v1467
        %v1583 = vpop.f32.mrb[0].mxu0
        %v1584 = vadd.f32 0.0, %v1583
        %v1585 = vpop.f32.mrb[0].mxu0
        %v1586 = vadd.f32 0.0, %v1585
        %1587 = vmatprep.mubr.f32.mxu0 0.0
        %1588 = vmatmul.mubr.f32.gmra.mrb[0].mxu0 %v1470
        %v1589 = vpop.f32.mrb[0].mxu0
        %v1590 = vadd.f32 0.0, %v1589
        %v1591 = vpop.f32.mrb[0].mxu0
        %v1592 = vadd.f32 0.0, %v1591
        %1593 = vmatprep.mubr.f32.mxu0 0.0
        %1594 = vmatmul.mubr.f32.gmra.mrb[0].mxu0 %v1473
        %v1595 = vpop.f32.mrb[0].mxu0
        %v1596 = vadd.f32 0.0, %v1595
        %v1597 = vpop.f32.mrb[0].mxu0
        %v1598 = vadd.f32 0.0, %v1597
        %1599 = vdwg.mxu0
        %1600 = vmatprep.subr.mxu0 %v1485
        %1601 = vmatpush1.msra.mxu0 %v1482
        %1602 = vmatprep.subr.mxu0 0.0
        %1603 = vmatpush1.msra.mxu0 0.0
        %1604 = vmatprep.subr.mxu0 0.0
        %1605 = vmatpush1.msra.mxu0 0.0
        %1606 = vmatprep.subr.mxu0 0.0
        %1607 = vmatpush1.msra.mxu0 0.0
        %1608 = vmatprep.subr.mxu0 0.0
        %1609 = vmatpush1.msra.mxu0 0.0
        %1610 = vmatprep.subr.mxu0 0.0
        %1611 = vmatpush1.msra.mxu0 0.0
        %1612 = vmatprep.subr.mxu0 0.0
        %1613 = vmatpush1.msra.mxu0 0.0
        %1614 = vmatprep.subr.mxu0 0.0
        %1615 = vmatpush1.msra.mxu0 0.0
        %1616 = vmatprep.subr.mxu0 0.0
        %1617 = vmatpush1.msra.mxu0 0.0
        %1618 = vmatprep.subr.mxu0 0.0
        %1619 = vmatpush1.msra.mxu0 0.0
        %1620 = vmatprep.subr.mxu0 0.0
        %1621 = vmatpush1.msra.mxu0 0.0
        %1622 = vmatprep.subr.mxu0 0.0
        %1623 = vmatpush1.msra.mxu0 0.0
        %1624 = vmatprep.subr.mxu0 0.0
        %1625 = vmatpush1.msra.mxu0 0.0
        %1626 = vmatprep.subr.mxu0 0.0
        %1627 = vmatpush1.msra.mxu0 0.0
        %1628 = vmatprep.subr.mxu0 0.0
        %1629 = vmatpush1.msra.mxu0 0.0
        %1630 = vmatprep.subr.mxu0 0.0
        %1631 = vmatpush1.msra.mxu0 0.0
        %1632 = vmatprep.subr.mxu0 0.0
        %1633 = vmatpush1.msra.mxu0 0.0
        %1634 = vmatprep.subr.mxu0 0.0
        %1635 = vmatpush1.msra.mxu0 0.0
        %1636 = vmatprep.subr.mxu0 0.0
        %1637 = vmatpush1.msra.mxu0 0.0
        %1638 = vmatprep.subr.mxu0 0.0
        %1639 = vmatpush1.msra.mxu0 0.0
        %1640 = vmatprep.subr.mxu0 0.0
        %1641 = vmatpush1.msra.mxu0 0.0
        %1642 = vmatprep.subr.mxu0 0.0
        %1643 = vmatpush1.msra.mxu0 0.0
        %1644 = vmatprep.subr.mxu0 0.0
        %1645 = vmatpush1.msra.mxu0 0.0
        %1646 = vmatprep.subr.mxu0 0.0
        %1647 = vmatpush1.msra.mxu0 0.0
        %1648 = vmatprep.subr.mxu0 0.0
        %1649 = vmatpush1.msra.mxu0 0.0
        %1650 = vmatprep.subr.mxu0 0.0
        %1651 = vmatpush1.msra.mxu0 0.0
        %1652 = vmatprep.subr.mxu0 0.0
        %1653 = vmatpush1.msra.mxu0 0.0
        %1654 = vmatprep.subr.mxu0 0.0
        %1655 = vmatpush1.msra.mxu0 0.0
        %1656 = vmatprep.subr.mxu0 0.0
        %1657 = vmatpush1.msra.mxu0 0.0
        %1658 = vmatprep.subr.mxu0 0.0
        %1659 = vmatpush1.msra.mxu0 0.0
        %1660 = vmatprep.subr.mxu0 0.0
        %1661 = vmatpush1.msra.mxu0 0.0
        %1662 = vmatprep.subr.mxu0 0.0
        %1663 = vmatpush1.msra.mxu0 0.0
        %1664 = vmatprep.mubr.f32.mxu0 0.0
        %1665 = vmatmul.mubr.f32.gmra.mrb[0].mxu0 %v1452
        %v1666 = vpop.f32.mrb[0].mxu0
        %v1667 = vadd.f32 0.0, %v1666
        %v1668 = vpop.f32.mrb[0].mxu0
        %v1669 = vadd.f32 0.0, %v1668
        %1670 = vmatprep.mubr.f32.mxu0 0.0
        %1671 = vmatmul.mubr.f32.gmra.mrb[0].mxu0 %v1455
        %v1672 = vpop.f32.mrb[0].mxu0
        %v1673 = vadd.f32 0.0, %v1672
        %v1674 = vpop.f32.mrb[0].mxu0
        %v1675 = vadd.f32 0.0, %v1674
        %1676 = vmatprep.mubr.f32.mxu0 0.0
        %1677 = vmatmul.mubr.f32.gmra.mrb[0].mxu0 %v1458
        %v1678 = vpop.f32.mrb[0].mxu0
        %v1679 = vadd.f32 0.0, %v1678
        %v1680 = vpop.f32.mrb[0].mxu0
        %v1681 = vadd.f32 0.0, %v1680
        %1682 = vmatprep.mubr.f32.mxu0 0.0
        %1683 = vmatmul.mubr.f32.gmra.mrb[0].mxu0 %v1461
        %v1684 = vpop.f32.mrb[0].mxu0
        %v1685 = vadd.f32 0.0, %v1684
        %v1686 = vpop.f32.mrb[0].mxu0
        %v1687 = vadd.f32 0.0, %v1686
        %1688 = vmatprep.mubr.f32.mxu0 0.0
        %1689 = vmatmul.mubr.f32.gmra.mrb[0].mxu0 %v1464
        %v1690 = vpop.f32.mrb[0].mxu0
        %v1691 = vadd.f32 0.0, %v1690
        %v1692 = vpop.f32.mrb[0].mxu0
        %v1693 = vadd.f32 0.0, %v1692
        %1694 = vmatprep.mubr.f32.mxu0 0.0
        %1695 = vmatmul.mubr.f32.gmra.mrb[0].mxu0 %v1467
        %v1696 = vpop.f32.mrb[0].mxu0
        %v1697 = vadd.f32 0.0, %v1696
        %v1698 = vpop.f32.mrb[0].mxu0
        %v1699 = vadd.f32 0.0, %v1698
        %1700 = vmatprep.mubr.f32.mxu0 0.0
        %1701 = vmatmul.mubr.f32.gmra.mrb[0].mxu0 %v1470
        %v1702 = vpop.f32.mrb[0].mxu0
        %v1703 = vadd.f32 0.0, %v1702
        %v1704 = vpop.f32.mrb[0].mxu0
        %v1705 = vadd.f32 0.0, %v1704
        %1706 = vmatprep.mubr.f32.mxu0 0.0
        %1707 = vmatmul.mubr.f32.gmra.mrb[0].mxu0 %v1473
        %v1708 = vpop.f32.mrb[0].mxu0
        %v1709 = vadd.f32 0.0, %v1708
        %v1710 = vpop.f32.mrb[0].mxu0
        %v1711 = vadd.f32 0.0, %v1710
        %1712 = vdwg.mxu0
        %v1713 = vadd.f32 %v1109, %v1554
        %v1714 = vadd.f32 %v1111, %v1556
        %v1715 = vadd.f32 %v1222, %v1667
        %v1716 = vadd.f32 %v1224, %v1669
        %v1717 = vadd.f32 %v1115, %v1560
        %v1718 = vadd.f32 %v1117, %v1562
        %v1719 = vadd.f32 %v1228, %v1673
        %v1720 = vadd.f32 %v1230, %v1675
        %v1721 = vadd.f32 %v1121, %v1566
        %v1722 = vadd.f32 %v1123, %v1568
        %v1723 = vadd.f32 %v1234, %v1679
        %v1724 = vadd.f32 %v1236, %v1681
        %v1725 = vadd.f32 %v1127, %v1572
        %v1726 = vadd.f32 %v1129, %v1574
        %v1727 = vadd.f32 %v1240, %v1685
        %v1728 = vadd.f32 %v1242, %v1687
        %v1729 = vadd.f32 %v1133, %v1578
        %v1730 = vadd.f32 %v1135, %v1580
        %v1731 = vadd.f32 %v1246, %v1691
        %v1732 = vadd.f32 %v1248, %v1693
        %v1733 = vadd.f32 %v1139, %v1584
        %v1734 = vadd.f32 %v1141, %v1586
        %v1735 = vadd.f32 %v1252, %v1697
        %v1736 = vadd.f32 %v1254, %v1699
        %v1737 = vadd.f32 %v1145, %v1590
        %v1738 = vadd.f32 %v1147, %v1592
        %v1739 = vadd.f32 %v1258, %v1703
        %v1740 = vadd.f32 %v1260, %v1705
        %v1741 = vadd.f32 %v1151, %v1596
        %v1742 = vadd.f32 %v1153, %v1598
        %v1743 = vadd.f32 %v1264, %v1709
        %v1744 = vadd.f32 %v1266, %v1711
        %v1745 = vmul.f32 %v374, 127.0
        %v1746 = vmul.f32 %v376, 127.0
        %v1747 = vmax.f32 %v1745, 0.0
        %v1748 = vmin.f32 %v1747, 126.99999
        %v1749 = vfloor.f32 %v1748
        %v1750 = vmax.f32 %v1746, 0.0
        %v1751 = vmin.f32 %v1750, 126.99999
        %v1752 = vfloor.f32 %v1751
        %v1753 = vadd.f32 %v1749, 1.0
        %v1754 = vmax.f32 %v1753, 0.0
        %v1755 = vmin.f32 %v1754, 127.0
        %v1756 = vadd.f32 %v1752, 1.0
        %v1757 = vmax.f32 %v1756, 0.0
        %v1758 = vmin.f32 %v1757, 127.0
        %v1759 = vsub.f32 %v1755, %v1745
        %v1760 = vsub.f32 %v1758, %v1746
        %v1761 = vmul.f32 %v1759, %v1760
        %v1762 = vsub.f32 %v1745, %v1749
        %v1763 = vmul.f32 %v1762, %v1760
        %v1764 = vsub.f32 %v1746, %v1752
        %v1765 = vmul.f32 %v1759, %v1764
        %v1766 = vmul.f32 %v1762, %v1764
        %v1767 = vld [vmem:[%s329 + $0xc0] sm:$0xf]
        %v1768 = vld [vmem:[%s329 + $0xc8] sm:$0xf]
        %v1769 = vld [vmem:[%s329 + $0xd0] sm:$0xf]
        %v1770 = vld [vmem:[%s329 + $0xd8] sm:$0xf]
        %v1771 = vld [vmem:[%s329 + $0xc0] sm:$0xf0]
        %v1772 = vld [vmem:[%s329 + $0xc8] sm:$0xf0]
        %v1773 = vld [vmem:[%s329 + $0xd0] sm:$0xf0]
        %v1774 = vld [vmem:[%s329 + $0xd8] sm:$0xf0]
        %v1775 = vld [vmem:[%s329 + $0xe0] sm:$0xf]
        %v1776 = vld [vmem:[%s329 + $0xe8] sm:$0xf]
        %v1777 = vld [vmem:[%s329 + $0xf0] sm:$0xf]
        %v1778 = vld [vmem:[%s329 + $0xf8] sm:$0xf]
        %v1779 = vld [vmem:[%s329 + $0xe0] sm:$0xf0]
        %v1780 = vld [vmem:[%s329 + $0xe8] sm:$0xf0]
        %v1781 = vld [vmem:[%s329 + $0xf0] sm:$0xf0]
        %v1782 = vld [vmem:[%s329 + $0xf8] sm:$0xf0]
        %v1784 = vlaneseq
        %v1785 = vshrl.u32 %v1784, 7
        %v1786 = vsub.s32 0, %v1785
        %v1787 = vrot.slane %v1761, %v1786
        %v1788 = vlaneseq
        %v1789 = vshrl.u32 %v1788, 7
        %v1790 = vsub.s32 1, %v1789
        %v1791 = vrot.slane %v1761, %v1790
        %v1792 = vlaneseq
        %v1793 = vshrl.u32 %v1792, 7
        %v1794 = vsub.s32 2, %v1793
        %v1795 = vrot.slane %v1761, %v1794
        %v1796 = vlaneseq
        %v1797 = vshrl.u32 %v1796, 7
        %v1798 = vsub.s32 3, %v1797
        %v1799 = vrot.slane %v1761, %v1798
        %v1804 = vmul.f32 %v1787, %v1767
        %v1805 = vmul.f32 %v1791, %v1768
        %v1806 = vmul.f32 %v1795, %v1769
        %v1807 = vmul.f32 %v1799, %v1770
        %v1809 = vlaneseq
        %v1810 = vshrl.u32 %v1809, 7
        %v1811 = vsub.s32 0, %v1810
        %v1812 = vrot.slane %v1763, %v1811
        %v1813 = vlaneseq
        %v1814 = vshrl.u32 %v1813, 7
        %v1815 = vsub.s32 1, %v1814
        %v1816 = vrot.slane %v1763, %v1815
        %v1817 = vlaneseq
        %v1818 = vshrl.u32 %v1817, 7
        %v1819 = vsub.s32 2, %v1818
        %v1820 = vrot.slane %v1763, %v1819
        %v1821 = vlaneseq
        %v1822 = vshrl.u32 %v1821, 7
        %v1823 = vsub.s32 3, %v1822
        %v1824 = vrot.slane %v1763, %v1823
        %v1829 = vmul.f32 %v1812, %v1771
        %v1830 = vmul.f32 %v1816, %v1772
        %v1831 = vmul.f32 %v1820, %v1773
        %v1832 = vmul.f32 %v1824, %v1774
        %v1837 = vrot.slane %v1829, 4
        %v1838 = vrot.slane %v1830, 4
        %v1839 = vrot.slane %v1831, 4
        %v1840 = vrot.slane %v1832, 4
        %v1845 = vadd.f32 %v1804, %v1837
        %v1846 = vadd.f32 %v1805, %v1838
        %v1847 = vadd.f32 %v1806, %v1839
        %v1848 = vadd.f32 %v1807, %v1840
        %v1850 = vlaneseq
        %v1851 = vshrl.u32 %v1850, 7
        %v1852 = vsub.s32 0, %v1851
        %v1853 = vrot.slane %v1765, %v1852
        %v1854 = vlaneseq
        %v1855 = vshrl.u32 %v1854, 7
        %v1856 = vsub.s32 1, %v1855
        %v1857 = vrot.slane %v1765, %v1856
        %v1858 = vlaneseq
        %v1859 = vshrl.u32 %v1858, 7
        %v1860 = vsub.s32 2, %v1859
        %v1861 = vrot.slane %v1765, %v1860
        %v1862 = vlaneseq
        %v1863 = vshrl.u32 %v1862, 7
        %v1864 = vsub.s32 3, %v1863
        %v1865 = vrot.slane %v1765, %v1864
        %v1870 = vmul.f32 %v1853, %v1775
        %v1871 = vmul.f32 %v1857, %v1776
        %v1872 = vmul.f32 %v1861, %v1777
        %v1873 = vmul.f32 %v1865, %v1778
        %v1874 = vadd.f32 %v1845, %v1870
        %v1875 = vadd.f32 %v1846, %v1871
        %v1876 = vadd.f32 %v1847, %v1872
        %v1877 = vadd.f32 %v1848, %v1873
        %v1879 = vlaneseq
        %v1880 = vshrl.u32 %v1879, 7
        %v1881 = vsub.s32 0, %v1880
        %v1882 = vrot.slane %v1766, %v1881
        %v1883 = vlaneseq
        %v1884 = vshrl.u32 %v1883, 7
        %v1885 = vsub.s32 1, %v1884
        %v1886 = vrot.slane %v1766, %v1885
        %v1887 = vlaneseq
        %v1888 = vshrl.u32 %v1887, 7
        %v1889 = vsub.s32 2, %v1888
        %v1890 = vrot.slane %v1766, %v1889
        %v1891 = vlaneseq
        %v1892 = vshrl.u32 %v1891, 7
        %v1893 = vsub.s32 3, %v1892
        %v1894 = vrot.slane %v1766, %v1893
        %v1899 = vmul.f32 %v1882, %v1779
        %v1900 = vmul.f32 %v1886, %v1780
        %v1901 = vmul.f32 %v1890, %v1781
        %v1902 = vmul.f32 %v1894, %v1782
        %v1907 = vrot.slane %v1899, 4
        %v1908 = vrot.slane %v1900, 4
        %v1909 = vrot.slane %v1901, 4
        %v1910 = vrot.slane %v1902, 4
        %v1915 = vadd.f32 %v1874, %v1907
        %v1916 = vadd.f32 %v1875, %v1908
        %v1917 = vadd.f32 %v1876, %v1909
        %v1918 = vadd.f32 %v1877, %v1910
        %s1919 = scalar_lea.vmem %s2, 192
        %v1920 = vld [vmem:[%s1919] sm:$0xff]
        %v1921 = vld [vmem:[%s1919 + $0x8] sm:$0xff]
        %v1922 = vld [vmem:[%s1919 + $0x10] sm:$0xff]
        %v1923 = vld [vmem:[%s1919 + $0x18] sm:$0xff]
        %v1924 = vld [vmem:[%s1919 + $0x20] sm:$0xff]
        %v1925 = vld [vmem:[%s1919 + $0x28] sm:$0xff]
        %v1926 = vld [vmem:[%s1919 + $0x30] sm:$0xff]
        %v1927 = vld [vmem:[%s1919 + $0x38] sm:$0xff]
        %v1929 = vsel %vm742, %v1920, 0
        %v1932 = vsel %vm742, %v1921, 0
        %v1935 = vsel %vm742, %v1922, 0
        %v1938 = vsel %vm742, %v1923, 0
        %v1941 = vsel %vm742, %v1924, 0
        %v1944 = vsel %vm742, %v1925, 0
        %v1947 = vsel %vm742, %v1926, 0
        %v1950 = vsel %vm742, %v1927, 0
        %v1953 = vsel %vm767, %v1915, 0
        %v1956 = vsel %vm767, %v1916, 0
        %v1959 = vsel %vm767, %v1917, 0
        %v1962 = vsel %vm767, %v1918, 0
        %1964 = vmatprep.subr.mxu0 %v1956
        %1965 = vmatpush1.msra.mxu0 %v1953
        %1966 = vmatprep.subr.mxu0 0.0
        %1967 = vmatpush1.msra.mxu0 0.0
        %1968 = vmatprep.subr.mxu0 0.0
        %1969 = vmatpush1.msra.mxu0 0.0
        %1970 = vmatprep.subr.mxu0 0.0
        %1971 = vmatpush1.msra.mxu0 0.0
        %1972 = vmatprep.subr.mxu0 0.0
        %1973 = vmatpush1.msra.mxu0 0.0
        %1974 = vmatprep.subr.mxu0 0.0
        %1975 = vmatpush1.msra.mxu0 0.0
        %1976 = vmatprep.subr.mxu0 0.0
        %1977 = vmatpush1.msra.mxu0 0.0
        %1978 = vmatprep.subr.mxu0 0.0
        %1979 = vmatpush1.msra.mxu0 0.0
        %1980 = vmatprep.subr.mxu0 0.0
        %1981 = vmatpush1.msra.mxu0 0.0
        %1982 = vmatprep.subr.mxu0 0.0
        %1983 = vmatpush1.msra.mxu0 0.0
        %1984 = vmatprep.subr.mxu0 0.0
        %1985 = vmatpush1.msra.mxu0 0.0
        %1986 = vmatprep.subr.mxu0 0.0
        %1987 = vmatpush1.msra.mxu0 0.0
        %1988 = vmatprep.subr.mxu0 0.0
        %1989 = vmatpush1.msra.mxu0 0.0
        %1990 = vmatprep.subr.mxu0 0.0
        %1991 = vmatpush1.msra.mxu0 0.0
        %1992 = vmatprep.subr.mxu0 0.0
        %1993 = vmatpush1.msra.mxu0 0.0
        %1994 = vmatprep.subr.mxu0 0.0
        %1995 = vmatpush1.msra.mxu0 0.0
        %1996 = vmatprep.subr.mxu0 0.0
        %1997 = vmatpush1.msra.mxu0 0.0
        %1998 = vmatprep.subr.mxu0 0.0
        %1999 = vmatpush1.msra.mxu0 0.0
        %2000 = vmatprep.subr.mxu0 0.0
        %2001 = vmatpush1.msra.mxu0 0.0
        %2002 = vmatprep.subr.mxu0 0.0
        %2003 = vmatpush1.msra.mxu0 0.0
        %2004 = vmatprep.subr.mxu0 0.0
        %2005 = vmatpush1.msra.mxu0 0.0
        %2006 = vmatprep.subr.mxu0 0.0
        %2007 = vmatpush1.msra.mxu0 0.0
        %2008 = vmatprep.subr.mxu0 0.0
        %2009 = vmatpush1.msra.mxu0 0.0
        %2010 = vmatprep.subr.mxu0 0.0
        %2011 = vmatpush1.msra.mxu0 0.0
        %2012 = vmatprep.subr.mxu0 0.0
        %2013 = vmatpush1.msra.mxu0 0.0
        %2014 = vmatprep.subr.mxu0 0.0
        %2015 = vmatpush1.msra.mxu0 0.0
        %2016 = vmatprep.subr.mxu0 0.0
        %2017 = vmatpush1.msra.mxu0 0.0
        %2018 = vmatprep.subr.mxu0 0.0
        %2019 = vmatpush1.msra.mxu0 0.0
        %2020 = vmatprep.subr.mxu0 0.0
        %2021 = vmatpush1.msra.mxu0 0.0
        %2022 = vmatprep.subr.mxu0 0.0
        %2023 = vmatpush1.msra.mxu0 0.0
        %2024 = vmatprep.subr.mxu0 0.0
        %2025 = vmatpush1.msra.mxu0 0.0
        %2026 = vmatprep.subr.mxu0 0.0
        %2027 = vmatpush1.msra.mxu0 0.0
        %2028 = vmatprep.mubr.f32.mxu0 0.0
        %2029 = vmatmul.mubr.f32.gmra.mrb[0].mxu0 %v1929
        %v2030 = vpop.f32.mrb[0].mxu0
        %v2031 = vadd.f32 0.0, %v2030
        %v2032 = vpop.f32.mrb[0].mxu0
        %v2033 = vadd.f32 0.0, %v2032
        %2034 = vmatprep.mubr.f32.mxu0 0.0
        %2035 = vmatmul.mubr.f32.gmra.mrb[0].mxu0 %v1932
        %v2036 = vpop.f32.mrb[0].mxu0
        %v2037 = vadd.f32 0.0, %v2036
        %v2038 = vpop.f32.mrb[0].mxu0
        %v2039 = vadd.f32 0.0, %v2038
        %2040 = vmatprep.mubr.f32.mxu0 0.0
        %2041 = vmatmul.mubr.f32.gmra.mrb[0].mxu0 %v1935
        %v2042 = vpop.f32.mrb[0].mxu0
        %v2043 = vadd.f32 0.0, %v2042
        %v2044 = vpop.f32.mrb[0].mxu0
        %v2045 = vadd.f32 0.0, %v2044
        %2046 = vmatprep.mubr.f32.mxu0 0.0
        %2047 = vmatmul.mubr.f32.gmra.mrb[0].mxu0 %v1938
        %v2048 = vpop.f32.mrb[0].mxu0
        %v2049 = vadd.f32 0.0, %v2048
        %v2050 = vpop.f32.mrb[0].mxu0
        %v2051 = vadd.f32 0.0, %v2050
        %2052 = vmatprep.mubr.f32.mxu0 0.0
        %2053 = vmatmul.mubr.f32.gmra.mrb[0].mxu0 %v1941
        %v2054 = vpop.f32.mrb[0].mxu0
        %v2055 = vadd.f32 0.0, %v2054
        %v2056 = vpop.f32.mrb[0].mxu0
        %v2057 = vadd.f32 0.0, %v2056
        %2058 = vmatprep.mubr.f32.mxu0 0.0
        %2059 = vmatmul.mubr.f32.gmra.mrb[0].mxu0 %v1944
        %v2060 = vpop.f32.mrb[0].mxu0
        %v2061 = vadd.f32 0.0, %v2060
        %v2062 = vpop.f32.mrb[0].mxu0
        %v2063 = vadd.f32 0.0, %v2062
        %2064 = vmatprep.mubr.f32.mxu0 0.0
        %2065 = vmatmul.mubr.f32.gmra.mrb[0].mxu0 %v1947
        %v2066 = vpop.f32.mrb[0].mxu0
        %v2067 = vadd.f32 0.0, %v2066
        %v2068 = vpop.f32.mrb[0].mxu0
        %v2069 = vadd.f32 0.0, %v2068
        %2070 = vmatprep.mubr.f32.mxu0 0.0
        %2071 = vmatmul.mubr.f32.gmra.mrb[0].mxu0 %v1950
        %v2072 = vpop.f32.mrb[0].mxu0
        %v2073 = vadd.f32 0.0, %v2072
        %v2074 = vpop.f32.mrb[0].mxu0
        %v2075 = vadd.f32 0.0, %v2074
        %2076 = vdwg.mxu0
        %2077 = vmatprep.subr.mxu0 %v1962
        %2078 = vmatpush1.msra.mxu0 %v1959
        %2079 = vmatprep.subr.mxu0 0.0
        %2080 = vmatpush1.msra.mxu0 0.0
        %2081 = vmatprep.subr.mxu0 0.0
        %2082 = vmatpush1.msra.mxu0 0.0
        %2083 = vmatprep.subr.mxu0 0.0
        %2084 = vmatpush1.msra.mxu0 0.0
        %2085 = vmatprep.subr.mxu0 0.0
        %2086 = vmatpush1.msra.mxu0 0.0
        %2087 = vmatprep.subr.mxu0 0.0
        %2088 = vmatpush1.msra.mxu0 0.0
        %2089 = vmatprep.subr.mxu0 0.0
        %2090 = vmatpush1.msra.mxu0 0.0
        %2091 = vmatprep.subr.mxu0 0.0
        %2092 = vmatpush1.msra.mxu0 0.0
        %2093 = vmatprep.subr.mxu0 0.0
        %2094 = vmatpush1.msra.mxu0 0.0
        %2095 = vmatprep.subr.mxu0 0.0
        %2096 = vmatpush1.msra.mxu0 0.0
        %2097 = vmatprep.subr.mxu0 0.0
        %2098 = vmatpush1.msra.mxu0 0.0
        %2099 = vmatprep.subr.mxu0 0.0
        %2100 = vmatpush1.msra.mxu0 0.0
        %2101 = vmatprep.subr.mxu0 0.0
        %2102 = vmatpush1.msra.mxu0 0.0
        %2103 = vmatprep.subr.mxu0 0.0
        %2104 = vmatpush1.msra.mxu0 0.0
        %2105 = vmatprep.subr.mxu0 0.0
        %2106 = vmatpush1.msra.mxu0 0.0
        %2107 = vmatprep.subr.mxu0 0.0
        %2108 = vmatpush1.msra.mxu0 0.0
        %2109 = vmatprep.subr.mxu0 0.0
        %2110 = vmatpush1.msra.mxu0 0.0
        %2111 = vmatprep.subr.mxu0 0.0
        %2112 = vmatpush1.msra.mxu0 0.0
        %2113 = vmatprep.subr.mxu0 0.0
        %2114 = vmatpush1.msra.mxu0 0.0
        %2115 = vmatprep.subr.mxu0 0.0
        %2116 = vmatpush1.msra.mxu0 0.0
        %2117 = vmatprep.subr.mxu0 0.0
        %2118 = vmatpush1.msra.mxu0 0.0
        %2119 = vmatprep.subr.mxu0 0.0
        %2120 = vmatpush1.msra.mxu0 0.0
        %2121 = vmatprep.subr.mxu0 0.0
        %2122 = vmatpush1.msra.mxu0 0.0
        %2123 = vmatprep.subr.mxu0 0.0
        %2124 = vmatpush1.msra.mxu0 0.0
        %2125 = vmatprep.subr.mxu0 0.0
        %2126 = vmatpush1.msra.mxu0 0.0
        %2127 = vmatprep.subr.mxu0 0.0
        %2128 = vmatpush1.msra.mxu0 0.0
        %2129 = vmatprep.subr.mxu0 0.0
        %2130 = vmatpush1.msra.mxu0 0.0
        %2131 = vmatprep.subr.mxu0 0.0
        %2132 = vmatpush1.msra.mxu0 0.0
        %2133 = vmatprep.subr.mxu0 0.0
        %2134 = vmatpush1.msra.mxu0 0.0
        %2135 = vmatprep.subr.mxu0 0.0
        %2136 = vmatpush1.msra.mxu0 0.0
        %2137 = vmatprep.subr.mxu0 0.0
        %2138 = vmatpush1.msra.mxu0 0.0
        %2139 = vmatprep.subr.mxu0 0.0
        %2140 = vmatpush1.msra.mxu0 0.0
        %2141 = vmatprep.mubr.f32.mxu0 0.0
        %2142 = vmatmul.mubr.f32.gmra.mrb[0].mxu0 %v1929
        %v2143 = vpop.f32.mrb[0].mxu0
        %v2144 = vadd.f32 0.0, %v2143
        %v2145 = vpop.f32.mrb[0].mxu0
        %v2146 = vadd.f32 0.0, %v2145
        %2147 = vmatprep.mubr.f32.mxu0 0.0
        %2148 = vmatmul.mubr.f32.gmra.mrb[0].mxu0 %v1932
        %v2149 = vpop.f32.mrb[0].mxu0
        %v2150 = vadd.f32 0.0, %v2149
        %v2151 = vpop.f32.mrb[0].mxu0
        %v2152 = vadd.f32 0.0, %v2151
        %2153 = vmatprep.mubr.f32.mxu0 0.0
        %2154 = vmatmul.mubr.f32.gmra.mrb[0].mxu0 %v1935
        %v2155 = vpop.f32.mrb[0].mxu0
        %v2156 = vadd.f32 0.0, %v2155
        %v2157 = vpop.f32.mrb[0].mxu0
        %v2158 = vadd.f32 0.0, %v2157
        %2159 = vmatprep.mubr.f32.mxu0 0.0
        %2160 = vmatmul.mubr.f32.gmra.mrb[0].mxu0 %v1938
        %v2161 = vpop.f32.mrb[0].mxu0
        %v2162 = vadd.f32 0.0, %v2161
        %v2163 = vpop.f32.mrb[0].mxu0
        %v2164 = vadd.f32 0.0, %v2163
        %2165 = vmatprep.mubr.f32.mxu0 0.0
        %2166 = vmatmul.mubr.f32.gmra.mrb[0].mxu0 %v1941
        %v2167 = vpop.f32.mrb[0].mxu0
        %v2168 = vadd.f32 0.0, %v2167
        %v2169 = vpop.f32.mrb[0].mxu0
        %v2170 = vadd.f32 0.0, %v2169
        %2171 = vmatprep.mubr.f32.mxu0 0.0
        %2172 = vmatmul.mubr.f32.gmra.mrb[0].mxu0 %v1944
        %v2173 = vpop.f32.mrb[0].mxu0
        %v2174 = vadd.f32 0.0, %v2173
        %v2175 = vpop.f32.mrb[0].mxu0
        %v2176 = vadd.f32 0.0, %v2175
        %2177 = vmatprep.mubr.f32.mxu0 0.0
        %2178 = vmatmul.mubr.f32.gmra.mrb[0].mxu0 %v1947
        %v2179 = vpop.f32.mrb[0].mxu0
        %v2180 = vadd.f32 0.0, %v2179
        %v2181 = vpop.f32.mrb[0].mxu0
        %v2182 = vadd.f32 0.0, %v2181
        %2183 = vmatprep.mubr.f32.mxu0 0.0
        %2184 = vmatmul.mubr.f32.gmra.mrb[0].mxu0 %v1950
        %v2185 = vpop.f32.mrb[0].mxu0
        %v2186 = vadd.f32 0.0, %v2185
        %v2187 = vpop.f32.mrb[0].mxu0
        %v2188 = vadd.f32 0.0, %v2187
        %2189 = vdwg.mxu0
        %v2190 = vadd.f32 %v1713, %v2031
        %v2191 = vadd.f32 %v1714, %v2033
        %v2192 = vadd.f32 %v1715, %v2144
        %v2193 = vadd.f32 %v1716, %v2146
        %v2194 = vadd.f32 %v1717, %v2037
        %v2195 = vadd.f32 %v1718, %v2039
        %v2196 = vadd.f32 %v1719, %v2150
        %v2197 = vadd.f32 %v1720, %v2152
        %v2198 = vadd.f32 %v1721, %v2043
        %v2199 = vadd.f32 %v1722, %v2045
        %v2200 = vadd.f32 %v1723, %v2156
        %v2201 = vadd.f32 %v1724, %v2158
        %v2202 = vadd.f32 %v1725, %v2049
        %v2203 = vadd.f32 %v1726, %v2051
        %v2204 = vadd.f32 %v1727, %v2162
        %v2205 = vadd.f32 %v1728, %v2164
        %v2206 = vadd.f32 %v1729, %v2055
        %v2207 = vadd.f32 %v1730, %v2057
        %v2208 = vadd.f32 %v1731, %v2168
        %v2209 = vadd.f32 %v1732, %v2170
        %v2210 = vadd.f32 %v1733, %v2061
        %v2211 = vadd.f32 %v1734, %v2063
        %v2212 = vadd.f32 %v1735, %v2174
        %v2213 = vadd.f32 %v1736, %v2176
        %v2214 = vadd.f32 %v1737, %v2067
        %v2215 = vadd.f32 %v1738, %v2069
        %v2216 = vadd.f32 %v1739, %v2180
        %v2217 = vadd.f32 %v1740, %v2182
        %v2218 = vadd.f32 %v1741, %v2073
        %v2219 = vadd.f32 %v1742, %v2075
        %v2220 = vadd.f32 %v1743, %v2186
        %v2221 = vadd.f32 %v1744, %v2188
        %v2222 = vmul.f32 %v374, 255.0
        %v2223 = vmul.f32 %v376, 255.0
        %v2224 = vmax.f32 %v2222, 0.0
        %v2225 = vmin.f32 %v2224, 254.99998
        %v2226 = vfloor.f32 %v2225
        %v2227 = vmax.f32 %v2223, 0.0
        %v2228 = vmin.f32 %v2227, 254.99998
        %v2229 = vfloor.f32 %v2228
        %v2230 = vadd.f32 %v2226, 1.0
        %v2231 = vmax.f32 %v2230, 0.0
        %v2232 = vmin.f32 %v2231, 255.0
        %v2233 = vadd.f32 %v2229, 1.0
        %v2234 = vmax.f32 %v2233, 0.0
        %v2235 = vmin.f32 %v2234, 255.0
        %v2236 = vsub.f32 %v2232, %v2222
        %v2237 = vsub.f32 %v2235, %v2223
        %v2238 = vmul.f32 %v2236, %v2237
        %v2239 = vsub.f32 %v2222, %v2226
        %v2240 = vmul.f32 %v2239, %v2237
        %v2241 = vsub.f32 %v2223, %v2229
        %v2242 = vmul.f32 %v2236, %v2241
        %v2243 = vmul.f32 %v2239, %v2241
        %v2244 = vld [vmem:[%s329 + $0x100] sm:$0xf]
        %v2245 = vld [vmem:[%s329 + $0x108] sm:$0xf]
        %v2246 = vld [vmem:[%s329 + $0x110] sm:$0xf]
        %v2247 = vld [vmem:[%s329 + $0x118] sm:$0xf]
        %v2248 = vld [vmem:[%s329 + $0x100] sm:$0xf0]
        %v2249 = vld [vmem:[%s329 + $0x108] sm:$0xf0]
        %v2250 = vld [vmem:[%s329 + $0x110] sm:$0xf0]
        %v2251 = vld [vmem:[%s329 + $0x118] sm:$0xf0]
        %v2252 = vld [vmem:[%s329 + $0x120] sm:$0xf]
        %v2253 = vld [vmem:[%s329 + $0x128] sm:$0xf]
        %v2254 = vld [vmem:[%s329 + $0x130] sm:$0xf]
        %v2255 = vld [vmem:[%s329 + $0x138] sm:$0xf]
        %v2256 = vld [vmem:[%s329 + $0x120] sm:$0xf0]
        %v2257 = vld [vmem:[%s329 + $0x128] sm:$0xf0]
        %v2258 = vld [vmem:[%s329 + $0x130] sm:$0xf0]
        %v2259 = vld [vmem:[%s329 + $0x138] sm:$0xf0]
        %v2261 = vlaneseq
        %v2262 = vshrl.u32 %v2261, 7
        %v2263 = vsub.s32 0, %v2262
        %v2264 = vrot.slane %v2238, %v2263
        %v2265 = vlaneseq
        %v2266 = vshrl.u32 %v2265, 7
        %v2267 = vsub.s32 1, %v2266
        %v2268 = vrot.slane %v2238, %v2267
        %v2269 = vlaneseq
        %v2270 = vshrl.u32 %v2269, 7
        %v2271 = vsub.s32 2, %v2270
        %v2272 = vrot.slane %v2238, %v2271
        %v2273 = vlaneseq
        %v2274 = vshrl.u32 %v2273, 7
        %v2275 = vsub.s32 3, %v2274
        %v2276 = vrot.slane %v2238, %v2275
        %v2281 = vmul.f32 %v2264, %v2244
        %v2282 = vmul.f32 %v2268, %v2245
        %v2283 = vmul.f32 %v2272, %v2246
        %v2284 = vmul.f32 %v2276, %v2247
        %v2286 = vlaneseq
        %v2287 = vshrl.u32 %v2286, 7
        %v2288 = vsub.s32 0, %v2287
        %v2289 = vrot.slane %v2240, %v2288
        %v2290 = vlaneseq
        %v2291 = vshrl.u32 %v2290, 7
        %v2292 = vsub.s32 1, %v2291
        %v2293 = vrot.slane %v2240, %v2292
        %v2294 = vlaneseq
        %v2295 = vshrl.u32 %v2294, 7
        %v2296 = vsub.s32 2, %v2295
        %v2297 = vrot.slane %v2240, %v2296
        %v2298 = vlaneseq
        %v2299 = vshrl.u32 %v2298, 7
        %v2300 = vsub.s32 3, %v2299
        %v2301 = vrot.slane %v2240, %v2300
        %v2306 = vmul.f32 %v2289, %v2248
        %v2307 = vmul.f32 %v2293, %v2249
        %v2308 = vmul.f32 %v2297, %v2250
        %v2309 = vmul.f32 %v2301, %v2251
        %v2314 = vrot.slane %v2306, 4
        %v2315 = vrot.slane %v2307, 4
        %v2316 = vrot.slane %v2308, 4
        %v2317 = vrot.slane %v2309, 4
        %v2322 = vadd.f32 %v2281, %v2314
        %v2323 = vadd.f32 %v2282, %v2315
        %v2324 = vadd.f32 %v2283, %v2316
        %v2325 = vadd.f32 %v2284, %v2317
        %v2327 = vlaneseq
        %v2328 = vshrl.u32 %v2327, 7
        %v2329 = vsub.s32 0, %v2328
        %v2330 = vrot.slane %v2242, %v2329
        %v2331 = vlaneseq
        %v2332 = vshrl.u32 %v2331, 7
        %v2333 = vsub.s32 1, %v2332
        %v2334 = vrot.slane %v2242, %v2333
        %v2335 = vlaneseq
        %v2336 = vshrl.u32 %v2335, 7
        %v2337 = vsub.s32 2, %v2336
        %v2338 = vrot.slane %v2242, %v2337
        %v2339 = vlaneseq
        %v2340 = vshrl.u32 %v2339, 7
        %v2341 = vsub.s32 3, %v2340
        %v2342 = vrot.slane %v2242, %v2341
        %v2347 = vmul.f32 %v2330, %v2252
        %v2348 = vmul.f32 %v2334, %v2253
        %v2349 = vmul.f32 %v2338, %v2254
        %v2350 = vmul.f32 %v2342, %v2255
        %v2351 = vadd.f32 %v2322, %v2347
        %v2352 = vadd.f32 %v2323, %v2348
        %v2353 = vadd.f32 %v2324, %v2349
        %v2354 = vadd.f32 %v2325, %v2350
        %v2356 = vlaneseq
        %v2357 = vshrl.u32 %v2356, 7
        %v2358 = vsub.s32 0, %v2357
        %v2359 = vrot.slane %v2243, %v2358
        %v2360 = vlaneseq
        %v2361 = vshrl.u32 %v2360, 7
        %v2362 = vsub.s32 1, %v2361
        %v2363 = vrot.slane %v2243, %v2362
        %v2364 = vlaneseq
        %v2365 = vshrl.u32 %v2364, 7
        %v2366 = vsub.s32 2, %v2365
        %v2367 = vrot.slane %v2243, %v2366
        %v2368 = vlaneseq
        %v2369 = vshrl.u32 %v2368, 7
        %v2370 = vsub.s32 3, %v2369
        %v2371 = vrot.slane %v2243, %v2370
        %v2376 = vmul.f32 %v2359, %v2256
        %v2377 = vmul.f32 %v2363, %v2257
        %v2378 = vmul.f32 %v2367, %v2258
        %v2379 = vmul.f32 %v2371, %v2259
        %v2384 = vrot.slane %v2376, 4
        %v2385 = vrot.slane %v2377, 4
        %v2386 = vrot.slane %v2378, 4
        %v2387 = vrot.slane %v2379, 4
        %v2392 = vadd.f32 %v2351, %v2384
        %v2393 = vadd.f32 %v2352, %v2385
        %v2394 = vadd.f32 %v2353, %v2386
        %v2395 = vadd.f32 %v2354, %v2387
        %s2396 = scalar_lea.vmem %s2, 256
        %v2397 = vld [vmem:[%s2396] sm:$0xff]
        %v2398 = vld [vmem:[%s2396 + $0x8] sm:$0xff]
        %v2399 = vld [vmem:[%s2396 + $0x10] sm:$0xff]
        %v2400 = vld [vmem:[%s2396 + $0x18] sm:$0xff]
        %v2401 = vld [vmem:[%s2396 + $0x20] sm:$0xff]
        %v2402 = vld [vmem:[%s2396 + $0x28] sm:$0xff]
        %v2403 = vld [vmem:[%s2396 + $0x30] sm:$0xff]
        %v2404 = vld [vmem:[%s2396 + $0x38] sm:$0xff]
        %v2406 = vsel %vm742, %v2397, 0
        %v2409 = vsel %vm742, %v2398, 0
        %v2412 = vsel %vm742, %v2399, 0
        %v2415 = vsel %vm742, %v2400, 0
        %v2418 = vsel %vm742, %v2401, 0
        %v2421 = vsel %vm742, %v2402, 0
        %v2424 = vsel %vm742, %v2403, 0
        %v2427 = vsel %vm742, %v2404, 0
        %v2430 = vsel %vm767, %v2392, 0
        %v2433 = vsel %vm767, %v2393, 0
        %v2436 = vsel %vm767, %v2394, 0
        %v2439 = vsel %vm767, %v2395, 0
        %2441 = vmatprep.subr.mxu0 %v2433
        %2442 = vmatpush1.msra.mxu0 %v2430
        %2443 = vmatprep.subr.mxu0 0.0
        %2444 = vmatpush1.msra.mxu0 0.0
        %2445 = vmatprep.subr.mxu0 0.0
        %2446 = vmatpush1.msra.mxu0 0.0
        %2447 = vmatprep.subr.mxu0 0.0
        %2448 = vmatpush1.msra.mxu0 0.0
        %2449 = vmatprep.subr.mxu0 0.0
        %2450 = vmatpush1.msra.mxu0 0.0
        %2451 = vmatprep.subr.mxu0 0.0
        %2452 = vmatpush1.msra.mxu0 0.0
        %2453 = vmatprep.subr.mxu0 0.0
        %2454 = vmatpush1.msra.mxu0 0.0
        %2455 = vmatprep.subr.mxu0 0.0
        %2456 = vmatpush1.msra.mxu0 0.0
        %2457 = vmatprep.subr.mxu0 0.0
        %2458 = vmatpush1.msra.mxu0 0.0
        %2459 = vmatprep.subr.mxu0 0.0
        %2460 = vmatpush1.msra.mxu0 0.0
        %2461 = vmatprep.subr.mxu0 0.0
        %2462 = vmatpush1.msra.mxu0 0.0
        %2463 = vmatprep.subr.mxu0 0.0
        %2464 = vmatpush1.msra.mxu0 0.0
        %2465 = vmatprep.subr.mxu0 0.0
        %2466 = vmatpush1.msra.mxu0 0.0
        %2467 = vmatprep.subr.mxu0 0.0
        %2468 = vmatpush1.msra.mxu0 0.0
        %2469 = vmatprep.subr.mxu0 0.0
        %2470 = vmatpush1.msra.mxu0 0.0
        %2471 = vmatprep.subr.mxu0 0.0
        %2472 = vmatpush1.msra.mxu0 0.0
        %2473 = vmatprep.subr.mxu0 0.0
        %2474 = vmatpush1.msra.mxu0 0.0
        %2475 = vmatprep.subr.mxu0 0.0
        %2476 = vmatpush1.msra.mxu0 0.0
        %2477 = vmatprep.subr.mxu0 0.0
        %2478 = vmatpush1.msra.mxu0 0.0
        %2479 = vmatprep.subr.mxu0 0.0
        %2480 = vmatpush1.msra.mxu0 0.0
        %2481 = vmatprep.subr.mxu0 0.0
        %2482 = vmatpush1.msra.mxu0 0.0
        %2483 = vmatprep.subr.mxu0 0.0
        %2484 = vmatpush1.msra.mxu0 0.0
        %2485 = vmatprep.subr.mxu0 0.0
        %2486 = vmatpush1.msra.mxu0 0.0
        %2487 = vmatprep.subr.mxu0 0.0
        %2488 = vmatpush1.msra.mxu0 0.0
        %2489 = vmatprep.subr.mxu0 0.0
        %2490 = vmatpush1.msra.mxu0 0.0
        %2491 = vmatprep.subr.mxu0 0.0
        %2492 = vmatpush1.msra.mxu0 0.0
        %2493 = vmatprep.subr.mxu0 0.0
        %2494 = vmatpush1.msra.mxu0 0.0
        %2495 = vmatprep.subr.mxu0 0.0
        %2496 = vmatpush1.msra.mxu0 0.0
        %2497 = vmatprep.subr.mxu0 0.0
        %2498 = vmatpush1.msra.mxu0 0.0
        %2499 = vmatprep.subr.mxu0 0.0
        %2500 = vmatpush1.msra.mxu0 0.0
        %2501 = vmatprep.subr.mxu0 0.0
        %2502 = vmatpush1.msra.mxu0 0.0
        %2503 = vmatprep.subr.mxu0 0.0
        %2504 = vmatpush1.msra.mxu0 0.0
        %2505 = vmatprep.mubr.f32.mxu0 0.0
        %2506 = vmatmul.mubr.f32.gmra.mrb[0].mxu0 %v2406
        %v2507 = vpop.f32.mrb[0].mxu0
        %v2508 = vadd.f32 0.0, %v2507
        %v2509 = vpop.f32.mrb[0].mxu0
        %v2510 = vadd.f32 0.0, %v2509
        %2511 = vmatprep.mubr.f32.mxu0 0.0
        %2512 = vmatmul.mubr.f32.gmra.mrb[0].mxu0 %v2409
        %v2513 = vpop.f32.mrb[0].mxu0
        %v2514 = vadd.f32 0.0, %v2513
        %v2515 = vpop.f32.mrb[0].mxu0
        %v2516 = vadd.f32 0.0, %v2515
        %2517 = vmatprep.mubr.f32.mxu0 0.0
        %2518 = vmatmul.mubr.f32.gmra.mrb[0].mxu0 %v2412
        %v2519 = vpop.f32.mrb[0].mxu0
        %v2520 = vadd.f32 0.0, %v2519
        %v2521 = vpop.f32.mrb[0].mxu0
        %v2522 = vadd.f32 0.0, %v2521
        %2523 = vmatprep.mubr.f32.mxu0 0.0
        %2524 = vmatmul.mubr.f32.gmra.mrb[0].mxu0 %v2415
        %v2525 = vpop.f32.mrb[0].mxu0
        %v2526 = vadd.f32 0.0, %v2525
        %v2527 = vpop.f32.mrb[0].mxu0
        %v2528 = vadd.f32 0.0, %v2527
        %2529 = vmatprep.mubr.f32.mxu0 0.0
        %2530 = vmatmul.mubr.f32.gmra.mrb[0].mxu0 %v2418
        %v2531 = vpop.f32.mrb[0].mxu0
        %v2532 = vadd.f32 0.0, %v2531
        %v2533 = vpop.f32.mrb[0].mxu0
        %v2534 = vadd.f32 0.0, %v2533
        %2535 = vmatprep.mubr.f32.mxu0 0.0
        %2536 = vmatmul.mubr.f32.gmra.mrb[0].mxu0 %v2421
        %v2537 = vpop.f32.mrb[0].mxu0
        %v2538 = vadd.f32 0.0, %v2537
        %v2539 = vpop.f32.mrb[0].mxu0
        %v2540 = vadd.f32 0.0, %v2539
        %2541 = vmatprep.mubr.f32.mxu0 0.0
        %2542 = vmatmul.mubr.f32.gmra.mrb[0].mxu0 %v2424
        %v2543 = vpop.f32.mrb[0].mxu0
        %v2544 = vadd.f32 0.0, %v2543
        %v2545 = vpop.f32.mrb[0].mxu0
        %v2546 = vadd.f32 0.0, %v2545
        %2547 = vmatprep.mubr.f32.mxu0 0.0
        %2548 = vmatmul.mubr.f32.gmra.mrb[0].mxu0 %v2427
        %v2549 = vpop.f32.mrb[0].mxu0
        %v2550 = vadd.f32 0.0, %v2549
        %v2551 = vpop.f32.mrb[0].mxu0
        %v2552 = vadd.f32 0.0, %v2551
        %2553 = vdwg.mxu0
        %2554 = vmatprep.subr.mxu0 %v2439
        %2555 = vmatpush1.msra.mxu0 %v2436
        %2556 = vmatprep.subr.mxu0 0.0
        %2557 = vmatpush1.msra.mxu0 0.0
        %2558 = vmatprep.subr.mxu0 0.0
        %2559 = vmatpush1.msra.mxu0 0.0
        %2560 = vmatprep.subr.mxu0 0.0
        %2561 = vmatpush1.msra.mxu0 0.0
        %2562 = vmatprep.subr.mxu0 0.0
        %2563 = vmatpush1.msra.mxu0 0.0
        %2564 = vmatprep.subr.mxu0 0.0
        %2565 = vmatpush1.msra.mxu0 0.0
        %2566 = vmatprep.subr.mxu0 0.0
        %2567 = vmatpush1.msra.mxu0 0.0
        %2568 = vmatprep.subr.mxu0 0.0
        %2569 = vmatpush1.msra.mxu0 0.0
        %2570 = vmatprep.subr.mxu0 0.0
        %2571 = vmatpush1.msra.mxu0 0.0
        %2572 = vmatprep.subr.mxu0 0.0
        %2573 = vmatpush1.msra.mxu0 0.0
        %2574 = vmatprep.subr.mxu0 0.0
        %2575 = vmatpush1.msra.mxu0 0.0
        %2576 = vmatprep.subr.mxu0 0.0
        %2577 = vmatpush1.msra.mxu0 0.0
        %2578 = vmatprep.subr.mxu0 0.0
        %2579 = vmatpush1.msra.mxu0 0.0
        %2580 = vmatprep.subr.mxu0 0.0
        %2581 = vmatpush1.msra.mxu0 0.0
        %2582 = vmatprep.subr.mxu0 0.0
        %2583 = vmatpush1.msra.mxu0 0.0
        %2584 = vmatprep.subr.mxu0 0.0
        %2585 = vmatpush1.msra.mxu0 0.0
        %2586 = vmatprep.subr.mxu0 0.0
        %2587 = vmatpush1.msra.mxu0 0.0
        %2588 = vmatprep.subr.mxu0 0.0
        %2589 = vmatpush1.msra.mxu0 0.0
        %2590 = vmatprep.subr.mxu0 0.0
        %2591 = vmatpush1.msra.mxu0 0.0
        %2592 = vmatprep.subr.mxu0 0.0
        %2593 = vmatpush1.msra.mxu0 0.0
        %2594 = vmatprep.subr.mxu0 0.0
        %2595 = vmatpush1.msra.mxu0 0.0
        %2596 = vmatprep.subr.mxu0 0.0
        %2597 = vmatpush1.msra.mxu0 0.0
        %2598 = vmatprep.subr.mxu0 0.0
        %2599 = vmatpush1.msra.mxu0 0.0
        %2600 = vmatprep.subr.mxu0 0.0
        %2601 = vmatpush1.msra.mxu0 0.0
        %2602 = vmatprep.subr.mxu0 0.0
        %2603 = vmatpush1.msra.mxu0 0.0
        %2604 = vmatprep.subr.mxu0 0.0
        %2605 = vmatpush1.msra.mxu0 0.0
        %2606 = vmatprep.subr.mxu0 0.0
        %2607 = vmatpush1.msra.mxu0 0.0
        %2608 = vmatprep.subr.mxu0 0.0
        %2609 = vmatpush1.msra.mxu0 0.0
        %2610 = vmatprep.subr.mxu0 0.0
        %2611 = vmatpush1.msra.mxu0 0.0
        %2612 = vmatprep.subr.mxu0 0.0
        %2613 = vmatpush1.msra.mxu0 0.0
        %2614 = vmatprep.subr.mxu0 0.0
        %2615 = vmatpush1.msra.mxu0 0.0
        %2616 = vmatprep.subr.mxu0 0.0
        %2617 = vmatpush1.msra.mxu0 0.0
        %2618 = vmatprep.mubr.f32.mxu0 0.0
        %2619 = vmatmul.mubr.f32.gmra.mrb[0].mxu0 %v2406
        %v2620 = vpop.f32.mrb[0].mxu0
        %v2621 = vadd.f32 0.0, %v2620
        %v2622 = vpop.f32.mrb[0].mxu0
        %v2623 = vadd.f32 0.0, %v2622
        %2624 = vmatprep.mubr.f32.mxu0 0.0
        %2625 = vmatmul.mubr.f32.gmra.mrb[0].mxu0 %v2409
        %v2626 = vpop.f32.mrb[0].mxu0
        %v2627 = vadd.f32 0.0, %v2626
        %v2628 = vpop.f32.mrb[0].mxu0
        %v2629 = vadd.f32 0.0, %v2628
        %2630 = vmatprep.mubr.f32.mxu0 0.0
        %2631 = vmatmul.mubr.f32.gmra.mrb[0].mxu0 %v2412
        %v2632 = vpop.f32.mrb[0].mxu0
        %v2633 = vadd.f32 0.0, %v2632
        %v2634 = vpop.f32.mrb[0].mxu0
        %v2635 = vadd.f32 0.0, %v2634
        %2636 = vmatprep.mubr.f32.mxu0 0.0
        %2637 = vmatmul.mubr.f32.gmra.mrb[0].mxu0 %v2415
        %v2638 = vpop.f32.mrb[0].mxu0
        %v2639 = vadd.f32 0.0, %v2638
        %v2640 = vpop.f32.mrb[0].mxu0
        %v2641 = vadd.f32 0.0, %v2640
        %2642 = vmatprep.mubr.f32.mxu0 0.0
        %2643 = vmatmul.mubr.f32.gmra.mrb[0].mxu0 %v2418
        %v2644 = vpop.f32.mrb[0].mxu0
        %v2645 = vadd.f32 0.0, %v2644
        %v2646 = vpop.f32.mrb[0].mxu0
        %v2647 = vadd.f32 0.0, %v2646
        %2648 = vmatprep.mubr.f32.mxu0 0.0
        %2649 = vmatmul.mubr.f32.gmra.mrb[0].mxu0 %v2421
        %v2650 = vpop.f32.mrb[0].mxu0
        %v2651 = vadd.f32 0.0, %v2650
        %v2652 = vpop.f32.mrb[0].mxu0
        %v2653 = vadd.f32 0.0, %v2652
        %2654 = vmatprep.mubr.f32.mxu0 0.0
        %2655 = vmatmul.mubr.f32.gmra.mrb[0].mxu0 %v2424
        %v2656 = vpop.f32.mrb[0].mxu0
        %v2657 = vadd.f32 0.0, %v2656
        %v2658 = vpop.f32.mrb[0].mxu0
        %v2659 = vadd.f32 0.0, %v2658
        %2660 = vmatprep.mubr.f32.mxu0 0.0
        %2661 = vmatmul.mubr.f32.gmra.mrb[0].mxu0 %v2427
        %v2662 = vpop.f32.mrb[0].mxu0
        %v2663 = vadd.f32 0.0, %v2662
        %v2664 = vpop.f32.mrb[0].mxu0
        %v2665 = vadd.f32 0.0, %v2664
        %2666 = vdwg.mxu0
        %v2667 = vadd.f32 %v2190, %v2508
        %v2668 = vadd.f32 %v2191, %v2510
        %v2669 = vadd.f32 %v2192, %v2621
        %v2670 = vadd.f32 %v2193, %v2623
        %v2671 = vadd.f32 %v2194, %v2514
        %v2672 = vadd.f32 %v2195, %v2516
        %v2673 = vadd.f32 %v2196, %v2627
        %v2674 = vadd.f32 %v2197, %v2629
        %v2675 = vadd.f32 %v2198, %v2520
        %v2676 = vadd.f32 %v2199, %v2522
        %v2677 = vadd.f32 %v2200, %v2633
        %v2678 = vadd.f32 %v2201, %v2635
        %v2679 = vadd.f32 %v2202, %v2526
        %v2680 = vadd.f32 %v2203, %v2528
        %v2681 = vadd.f32 %v2204, %v2639
        %v2682 = vadd.f32 %v2205, %v2641
        %v2683 = vadd.f32 %v2206, %v2532
        %v2684 = vadd.f32 %v2207, %v2534
        %v2685 = vadd.f32 %v2208, %v2645
        %v2686 = vadd.f32 %v2209, %v2647
        %v2687 = vadd.f32 %v2210, %v2538
        %v2688 = vadd.f32 %v2211, %v2540
        %v2689 = vadd.f32 %v2212, %v2651
        %v2690 = vadd.f32 %v2213, %v2653
        %v2691 = vadd.f32 %v2214, %v2544
        %v2692 = vadd.f32 %v2215, %v2546
        %v2693 = vadd.f32 %v2216, %v2657
        %v2694 = vadd.f32 %v2217, %v2659
        %v2695 = vadd.f32 %v2218, %v2550
        %v2696 = vadd.f32 %v2219, %v2552
        %v2697 = vadd.f32 %v2220, %v2663
        %v2698 = vadd.f32 %v2221, %v2665
        %v2699 = vld [vmem:[%s3] sm:$0xff]
        %v2700 = vld [vmem:[%s3 + $0x8] sm:$0xff]
        %v2701 = vld [vmem:[%s3 + $0x10] sm:$0xff]
        %v2702 = vld [vmem:[%s3 + $0x18] sm:$0xff]
        %v2703 = vld [vmem:[%s3 + $0x20] sm:$0xff]
        %v2704 = vld [vmem:[%s3 + $0x28] sm:$0xff]
        %v2705 = vld [vmem:[%s3 + $0x30] sm:$0xff]
        %v2706 = vld [vmem:[%s3 + $0x38] sm:$0xff]
        %2708 = vset.pattern.permute.xlu0 0
        %2709 = vperm.xlu0 %2708, %v2699
        %v2710 = vpop.permute.xlu0 %2709
        %2713 = vset.pattern.permute.xlu0 0
        %2714 = vperm.xlu0 %2713, %v2700
        %v2715 = vpop.permute.xlu0 %2714
        %2718 = vset.pattern.permute.xlu0 0
        %2719 = vperm.xlu0 %2718, %v2701
        %v2720 = vpop.permute.xlu0 %2719
        %2723 = vset.pattern.permute.xlu0 0
        %2724 = vperm.xlu0 %2723, %v2702
        %v2725 = vpop.permute.xlu0 %2724
        %2728 = vset.pattern.permute.xlu0 0
        %2729 = vperm.xlu0 %2728, %v2703
        %v2730 = vpop.permute.xlu0 %2729
        %2733 = vset.pattern.permute.xlu0 0
        %2734 = vperm.xlu0 %2733, %v2704
        %v2735 = vpop.permute.xlu0 %2734
        %2738 = vset.pattern.permute.xlu0 0
        %2739 = vperm.xlu0 %2738, %v2705
        %v2740 = vpop.permute.xlu0 %2739
        %2743 = vset.pattern.permute.xlu0 0
        %2744 = vperm.xlu0 %2743, %v2706
        %v2745 = vpop.permute.xlu0 %2744
        %v2747 = vadd.f32 %v2667, %v2710
        %v2748 = vadd.f32 %v2668, %v2710
        %v2749 = vadd.f32 %v2669, %v2710
        %v2750 = vadd.f32 %v2670, %v2710
        %v2751 = vadd.f32 %v2671, %v2715
        %v2752 = vadd.f32 %v2672, %v2715
        %v2753 = vadd.f32 %v2673, %v2715
        %v2754 = vadd.f32 %v2674, %v2715
        %v2755 = vadd.f32 %v2675, %v2720
        %v2756 = vadd.f32 %v2676, %v2720
        %v2757 = vadd.f32 %v2677, %v2720
        %v2758 = vadd.f32 %v2678, %v2720
        %v2759 = vadd.f32 %v2679, %v2725
        %v2760 = vadd.f32 %v2680, %v2725
        %v2761 = vadd.f32 %v2681, %v2725
        %v2762 = vadd.f32 %v2682, %v2725
        %v2763 = vadd.f32 %v2683, %v2730
        %v2764 = vadd.f32 %v2684, %v2730
        %v2765 = vadd.f32 %v2685, %v2730
        %v2766 = vadd.f32 %v2686, %v2730
        %v2767 = vadd.f32 %v2687, %v2735
        %v2768 = vadd.f32 %v2688, %v2735
        %v2769 = vadd.f32 %v2689, %v2735
        %v2770 = vadd.f32 %v2690, %v2735
        %v2771 = vadd.f32 %v2691, %v2740
        %v2772 = vadd.f32 %v2692, %v2740
        %v2773 = vadd.f32 %v2693, %v2740
        %v2774 = vadd.f32 %v2694, %v2740
        %v2775 = vadd.f32 %v2695, %v2745
        %v2776 = vadd.f32 %v2696, %v2745
        %v2777 = vadd.f32 %v2697, %v2745
        %v2778 = vadd.f32 %v2698, %v2745
        %v2779 = vmax.f32 %v2747, 0.0
        %v2780 = vmax.f32 %v2748, 0.0
        %v2781 = vmax.f32 %v2749, 0.0
        %v2782 = vmax.f32 %v2750, 0.0
        %v2783 = vmax.f32 %v2751, 0.0
        %v2784 = vmax.f32 %v2752, 0.0
        %v2785 = vmax.f32 %v2753, 0.0
        %v2786 = vmax.f32 %v2754, 0.0
        %v2787 = vmax.f32 %v2755, 0.0
        %v2788 = vmax.f32 %v2756, 0.0
        %v2789 = vmax.f32 %v2757, 0.0
        %v2790 = vmax.f32 %v2758, 0.0
        %v2791 = vmax.f32 %v2759, 0.0
        %v2792 = vmax.f32 %v2760, 0.0
        %v2793 = vmax.f32 %v2761, 0.0
        %v2794 = vmax.f32 %v2762, 0.0
        %v2795 = vmax.f32 %v2763, 0.0
        %v2796 = vmax.f32 %v2764, 0.0
        %v2797 = vmax.f32 %v2765, 0.0
        %v2798 = vmax.f32 %v2766, 0.0
        %v2799 = vmax.f32 %v2767, 0.0
        %v2800 = vmax.f32 %v2768, 0.0
        %v2801 = vmax.f32 %v2769, 0.0
        %v2802 = vmax.f32 %v2770, 0.0
        %v2803 = vmax.f32 %v2771, 0.0
        %v2804 = vmax.f32 %v2772, 0.0
        %v2805 = vmax.f32 %v2773, 0.0
        %v2806 = vmax.f32 %v2774, 0.0
        %v2807 = vmax.f32 %v2775, 0.0
        %v2808 = vmax.f32 %v2776, 0.0
        %v2809 = vmax.f32 %v2777, 0.0
        %v2810 = vmax.f32 %v2778, 0.0
        %v2811 = vld [vmem:[%s4] sm:$0x7]
        %v2812 = vld [vmem:[%s5] sm:$0x7]
        %2814 = vset.pattern.permute.xlu0 0
        %2815 = vperm.xlu0 %2814, %v2812
        %v2816 = vpop.permute.xlu0 %2815
        %vm2818 = vcmask 523264
        %v2820 = vsel %vm2818, %v2811, 0
        %2822 = vmatprep.subr.mxu0 %v2780
        %2823 = vmatpush1.msra.mxu0 %v2779
        %2824 = vmatprep.subr.mxu0 %v2784
        %2825 = vmatpush1.msra.mxu0 %v2783
        %2826 = vmatprep.subr.mxu0 %v2788
        %2827 = vmatpush1.msra.mxu0 %v2787
        %2828 = vmatprep.subr.mxu0 %v2792
        %2829 = vmatpush1.msra.mxu0 %v2791
        %2830 = vmatprep.subr.mxu0 %v2796
        %2831 = vmatpush1.msra.mxu0 %v2795
        %2832 = vmatprep.subr.mxu0 %v2800
        %2833 = vmatpush1.msra.mxu0 %v2799
        %2834 = vmatprep.subr.mxu0 %v2804
        %2835 = vmatpush1.msra.mxu0 %v2803
        %2836 = vmatprep.subr.mxu0 %v2808
        %2837 = vmatpush1.msra.mxu0 %v2807
        %2838 = vmatprep.subr.mxu0 0.0
        %2839 = vmatpush1.msra.mxu0 0.0
        %2840 = vmatprep.subr.mxu0 0.0
        %2841 = vmatpush1.msra.mxu0 0.0
        %2842 = vmatprep.subr.mxu0 0.0
        %2843 = vmatpush1.msra.mxu0 0.0
        %2844 = vmatprep.subr.mxu0 0.0
        %2845 = vmatpush1.msra.mxu0 0.0
        %2846 = vmatprep.subr.mxu0 0.0
        %2847 = vmatpush1.msra.mxu0 0.0
        %2848 = vmatprep.subr.mxu0 0.0
        %2849 = vmatpush1.msra.mxu0 0.0
        %2850 = vmatprep.subr.mxu0 0.0
        %2851 = vmatpush1.msra.mxu0 0.0
        %2852 = vmatprep.subr.mxu0 0.0
        %2853 = vmatpush1.msra.mxu0 0.0
        %2854 = vmatprep.subr.mxu0 0.0
        %2855 = vmatpush1.msra.mxu0 0.0
        %2856 = vmatprep.subr.mxu0 0.0
        %2857 = vmatpush1.msra.mxu0 0.0
        %2858 = vmatprep.subr.mxu0 0.0
        %2859 = vmatpush1.msra.mxu0 0.0
        %2860 = vmatprep.subr.mxu0 0.0
        %2861 = vmatpush1.msra.mxu0 0.0
        %2862 = vmatprep.subr.mxu0 0.0
        %2863 = vmatpush1.msra.mxu0 0.0
        %2864 = vmatprep.subr.mxu0 0.0
        %2865 = vmatpush1.msra.mxu0 0.0
        %2866 = vmatprep.subr.mxu0 0.0
        %2867 = vmatpush1.msra.mxu0 0.0
        %2868 = vmatprep.subr.mxu0 0.0
        %2869 = vmatpush1.msra.mxu0 0.0
        %2870 = vmatprep.subr.mxu0 0.0
        %2871 = vmatpush1.msra.mxu0 0.0
        %2872 = vmatprep.subr.mxu0 0.0
        %2873 = vmatpush1.msra.mxu0 0.0
        %2874 = vmatprep.subr.mxu0 0.0
        %2875 = vmatpush1.msra.mxu0 0.0
        %2876 = vmatprep.subr.mxu0 0.0
        %2877 = vmatpush1.msra.mxu0 0.0
        %2878 = vmatprep.subr.mxu0 0.0
        %2879 = vmatpush1.msra.mxu0 0.0
        %2880 = vmatprep.subr.mxu0 0.0
        %2881 = vmatpush1.msra.mxu0 0.0
        %2882 = vmatprep.subr.mxu0 0.0
        %2883 = vmatpush1.msra.mxu0 0.0
        %2884 = vmatprep.subr.mxu0 0.0
        %2885 = vmatpush1.msra.mxu0 0.0
        %2886 = vmatprep.mubr.f32.mxu0 0.0
        %2887 = vmatmul.mubr.f32.gmra.mrb[0].mxu0 %v2820
        %v2888 = vpop.f32.mrb[0].mxu0
        %v2889 = vadd.f32 %v2816, %v2888
        %v2890 = vpop.f32.mrb[0].mxu0
        %v2891 = vadd.f32 %v2816, %v2890
        %2892 = vdwg.mxu0
        %2893 = vmatprep.subr.mxu0 %v2782
        %2894 = vmatpush1.msra.mxu0 %v2781
        %2895 = vmatprep.subr.mxu0 %v2786
        %2896 = vmatpush1.msra.mxu0 %v2785
        %2897 = vmatprep.subr.mxu0 %v2790
        %2898 = vmatpush1.msra.mxu0 %v2789
        %2899 = vmatprep.subr.mxu0 %v2794
        %2900 = vmatpush1.msra.mxu0 %v2793
        %2901 = vmatprep.subr.mxu0 %v2798
        %2902 = vmatpush1.msra.mxu0 %v2797
        %2903 = vmatprep.subr.mxu0 %v2802
        %2904 = vmatpush1.msra.mxu0 %v2801
        %2905 = vmatprep.subr.mxu0 %v2806
        %2906 = vmatpush1.msra.mxu0 %v2805
        %2907 = vmatprep.subr.mxu0 %v2810
        %2908 = vmatpush1.msra.mxu0 %v2809
        %2909 = vmatprep.subr.mxu0 0.0
        %2910 = vmatpush1.msra.mxu0 0.0
        %2911 = vmatprep.subr.mxu0 0.0
        %2912 = vmatpush1.msra.mxu0 0.0
        %2913 = vmatprep.subr.mxu0 0.0
        %2914 = vmatpush1.msra.mxu0 0.0
        %2915 = vmatprep.subr.mxu0 0.0
        %2916 = vmatpush1.msra.mxu0 0.0
        %2917 = vmatprep.subr.mxu0 0.0
        %2918 = vmatpush1.msra.mxu0 0.0
        %2919 = vmatprep.subr.mxu0 0.0
        %2920 = vmatpush1.msra.mxu0 0.0
        %2921 = vmatprep.subr.mxu0 0.0
        %2922 = vmatpush1.msra.mxu0 0.0
        %2923 = vmatprep.subr.mxu0 0.0
        %2924 = vmatpush1.msra.mxu0 0.0
        %2925 = vmatprep.subr.mxu0 0.0
        %2926 = vmatpush1.msra.mxu0 0.0
        %2927 = vmatprep.subr.mxu0 0.0
        %2928 = vmatpush1.msra.mxu0 0.0
        %2929 = vmatprep.subr.mxu0 0.0
        %2930 = vmatpush1.msra.mxu0 0.0
        %2931 = vmatprep.subr.mxu0 0.0
        %2932 = vmatpush1.msra.mxu0 0.0
        %2933 = vmatprep.subr.mxu0 0.0
        %2934 = vmatpush1.msra.mxu0 0.0
        %2935 = vmatprep.subr.mxu0 0.0
        %2936 = vmatpush1.msra.mxu0 0.0
        %2937 = vmatprep.subr.mxu0 0.0
        %2938 = vmatpush1.msra.mxu0 0.0
        %2939 = vmatprep.subr.mxu0 0.0
        %2940 = vmatpush1.msra.mxu0 0.0
        %2941 = vmatprep.subr.mxu0 0.0
        %2942 = vmatpush1.msra.mxu0 0.0
        %2943 = vmatprep.subr.mxu0 0.0
        %2944 = vmatpush1.msra.mxu0 0.0
        %2945 = vmatprep.subr.mxu0 0.0
        %2946 = vmatpush1.msra.mxu0 0.0
        %2947 = vmatprep.subr.mxu0 0.0
        %2948 = vmatpush1.msra.mxu0 0.0
        %2949 = vmatprep.subr.mxu0 0.0
        %2950 = vmatpush1.msra.mxu0 0.0
        %2951 = vmatprep.subr.mxu0 0.0
        %2952 = vmatpush1.msra.mxu0 0.0
        %2953 = vmatprep.subr.mxu0 0.0
        %2954 = vmatpush1.msra.mxu0 0.0
        %2955 = vmatprep.subr.mxu0 0.0
        %2956 = vmatpush1.msra.mxu0 0.0
        %2957 = vmatprep.mubr.f32.mxu0 0.0
        %2958 = vmatmul.mubr.f32.gmra.mrb[0].mxu0 %v2820
        %v2959 = vpop.f32.mrb[0].mxu0
        %v2960 = vadd.f32 %v2816, %v2959
        %v2961 = vpop.f32.mrb[0].mxu0
        %v2962 = vadd.f32 %v2816, %v2961
        %2963 = vdwg.mxu0
        %v2968 = vcombine.low %v2889, %v2891
        %v2969 = vcombine.low %v2960, %v2962
        %2972 = vst [vmem:[%s372] sm:$0x77] %v2968
        %2973 = vst [vmem:[%s372 + $0x8] sm:$0x77] %v2969
        %s2974 = smul.u32 4, %s17
        %p2975 = scmp.lt.s32.totalorder %s2974, 7
        %s2976 = scalar_select %p2975, %s2974, 7
        %s2977 = smul.addr %s2976, 4
        %s2978 = scalar_lea.vmem %s6, %s2977
        // Predicated region
        $region68: #{dense_net_forward.1} parent=62 // pred_check
          %p2979 = pneg %p171
        $region69: #{dense_net_forward.1} parent=62 // pred_check_branch
          %2981 = sbr.rel (%p2979) target = $region71
        $region70: #{dense_net_forward.1} parent=62 // pred_region
          %s2982 = smul.u32 4, %s17
        $region71: #{dense_net_forward.1} parent=62 // pred_fallthru
          _
      $region63: #{dense_net_forward.1} parent=5 // pred_fallthru
        _
      %p2983 = scmp.le.s32.totalorder 2, %s12
      // Predicated region
      $region72: #{dense_net_forward.1} parent=5 // pred_check
        %p2984 = pneg %p2983
      $region73: #{dense_net_forward.1} parent=5 // pred_check_branch
        %2986 = sbr.rel (%p2984) target = $region75
      $region74: #{dense_net_forward.1} parent=5 // pred_region
        %s2987 = ssub.s32 %s12, 2
        // Predicated region
        $region76: #{dense_net_forward.1} parent=74 // pred_check
          %p2988 = pneg %p177
        $region77: #{dense_net_forward.1} parent=74 // pred_check_branch
          %2990 = sbr.rel (%p2988) target = $region79
        $region78: #{dense_net_forward.1} parent=74 // pred_region
          %s2991 = smul.u32 4, %s18
          %p2992 = scmp.lt.s32.totalorder %s2991, 7
          %s2993 = scalar_select %p2992, %s2991, 7
          %s2994 = smul.addr %s2993, 4
          %s2995 = scalar_lea.vmem %s6, %s2994
        $region79: #{dense_net_forward.1} parent=74 // pred_fallthru
          _
      $region75: #{dense_net_forward.1} parent=5 // pred_fallthru
        _
    $region6: #{dense_net_forward.1} parent=1 // loop_footer
      %s16 = sadd.s32 1, %s12
    $region7: #{dense_net_forward.1} parent=1 // loop_footer_branch
      %11 = sbr.rel target = $region3
    $region8: #{dense_net_forward.1} parent=1 // loop_exit
      _

</llo_original>
